<compile_context>
chip_gen: v6e
topology: v6e:2x2x1
jax: 0.10.0
libtpu: 0.0.40
codegen_flags: <defaults>
</compile_context>

<pallas_src>
import math

import jax
import jax.numpy as jnp
from jax import lax
from jax.experimental import pallas as pl
from jax.experimental.pallas import tpu as pltpu

# ---------------- small synthetic BERT config ----------------
B = 2            # batch
S = 8            # sequence length
H = 32           # hidden size
NH = 4           # attention heads
DH = H // NH     # head dim
FF = 64          # intermediate (FFN) size
L = 2            # transformer layers
V = 128          # vocab size (lane-dense logits)
MAXPOS = 32
EPS = 1e-12

VMEM_SPEC = pl.BlockSpec(memory_space=pltpu.MemorySpace.VMEM)
SMEM_SPEC = pl.BlockSpec(memory_space=pltpu.MemorySpace.SMEM)

_N_COMMON_INPUTS = 18   # emb, mask, 2 emb-LN, 12 stacked layer tensors, head w/b


# ---------------- in-kernel helpers (pure value functions) ----------------
def _gelu(x):
    # TODO(synk): exact erf-based GELU (BERT default); tanh approximation used here.
    c = math.sqrt(2.0 / math.pi)
    return 0.5 * x * (1.0 + jnp.tanh(c * (x + 0.044715 * x * x * x)))


def _layernorm(x, g, b):
    mean = jnp.mean(x, axis=-1, keepdims=True)
    cen = x - mean
    var = jnp.mean(cen * cen, axis=-1, keepdims=True)
    return cen * lax.rsqrt(var + EPS) * g + b


def _softmax_rows(x, approx=True):
    m = jnp.max(x, axis=-1, keepdims=True)
    e = jnp.exp(x - m)
    s = jnp.sum(e, axis=-1, keepdims=True)
    if approx:
        # divide on the EUP (approx reciprocal) instead of the VALU
        return e * pl.reciprocal(s, approx=True)
    return e / s


def _encoder_logits(emb_ref, mask_ref, eg_ref, eb_ref,
                    wqkv_ref, bqkv_ref, wo_ref, bo_ref,
                    ln1g_ref, ln1b_ref, w1_ref, b1_ref,
                    w2_ref, b2_ref, ln2g_ref, ln2b_ref,
                    hw_ref, hb_ref):
    """Shared fused encoder: embeddings-LN -> L layers -> LM-head logits."""
    scale = 1.0 / math.sqrt(DH)

    # embedding layernorm (no zero residual / extra kernel)
    h = _layernorm(emb_ref[...], eg_ref[...], eb_ref[...])           # (B*S, H)
    addm = (1.0 - mask_ref[...]) * -10000.0                          # (B, S) additive mask

    # static (unrolled) layer loop: all weight-ref slices below are static.
    for l in range(L):
        # fused QKV projection: one (B*S, H) x (H, 3H) matmul
        qkv = jnp.dot(h, wqkv_ref[l], preferred_element_type=jnp.float32) + bqkv_ref[l]
        q = qkv[:, 0:H] * scale                                       # scale folded once
        k = qkv[:, H:2 * H]
        v = qkv[:, 2 * H:3 * H]

        # attention entirely in-register: per (batch, head) 2-D tiles,
        # no HBM round-trip, no wrapper-level transposes
        rows = []
        for b in range(B):
            r0 = b * S
            mb = addm[b:b + 1, :]                                     # (1, S)
            heads = []
            for hh in range(NH):
                c0 = hh * DH
                qh = q[r0:r0 + S, c0:c0 + DH]                         # (S, DH)
                kh = k[r0:r0 + S, c0:c0 + DH]
                vh = v[r0:r0 + S, c0:c0 + DH]
                sc = jnp.einsum("qd,kd->qk", qh, kh,
                                preferred_element_type=jnp.float32) + mb
                p = _softmax_rows(sc, approx=True)                    # (S, S)
                heads.append(jnp.dot(p, vh, preferred_element_type=jnp.float32))
            rows.append(jnp.concatenate(heads, axis=-1))              # (S, H)
        ctx = jnp.concatenate(rows, axis=0)                           # (B*S, H)

        attn = jnp.dot(ctx, wo_ref[l], preferred_element_type=jnp.float32) + bo_ref[l]
        h = _layernorm(attn + h, ln1g_ref[l], ln1b_ref[l])

        ff = _gelu(jnp.dot(h, w1_ref[l], preferred_element_type=jnp.float32) + b1_ref[l])
        ff = jnp.dot(ff, w2_ref[l], preferred_element_type=jnp.float32) + b2_ref[l]
        h = _layernorm(ff + h, ln2g_ref[l], ln2b_ref[l])

    # LM head: lane-dense (B*S, V=128) logits
    return jnp.dot(h, hw_ref[...], preferred_element_type=jnp.float32) + hb_ref[...]


# ---------------- fused kernels ----------------
def _fused_train_kernel(emb_ref, mask_ref, eg_ref, eb_ref,
                        wqkv_ref, bqkv_ref, wo_ref, bo_ref,
                        ln1g_ref, ln1b_ref, w1_ref, b1_ref,
                        w2_ref, b2_ref, ln2g_ref, ln2b_ref,
                        hw_ref, hb_ref, labels_ref, loss_ref):
    logits = _encoder_logits(emb_ref, mask_ref, eg_ref, eb_ref,
                             wqkv_ref, bqkv_ref, wo_ref, bo_ref,
                             ln1g_ref, ln1b_ref, w1_ref, b1_ref,
                             w2_ref, b2_ref, ln2g_ref, ln2b_ref,
                             hw_ref, hb_ref)                          # (B*S, V)
    labels = labels_ref[...]                                          # (B*S, 1) i32, -1 => ignore
    m = jnp.max(logits, axis=-1, keepdims=True)
    z = logits - m
    lse = jnp.log(jnp.sum(jnp.exp(z), axis=-1, keepdims=True))        # (B*S, 1)
    col = lax.broadcasted_iota(jnp.int32, logits.shape, 1)            # (B*S, V)
    picked = jnp.sum(jnp.where(col == labels, z, 0.0), axis=-1, keepdims=True)
    valid = (labels != -1).astype(jnp.float32)
    nll = (lse - picked) * valid
    denom = jnp.maximum(jnp.sum(valid), 1.0)                          # guard all-ignored case
    loss_ref[0, 0] = jnp.sum(nll) / denom


def _fused_infer_kernel(emb_ref, mask_ref, eg_ref, eb_ref,
                        wqkv_ref, bqkv_ref, wo_ref, bo_ref,
                        ln1g_ref, ln1b_ref, w1_ref, b1_ref,
                        w2_ref, b2_ref, ln2g_ref, ln2b_ref,
                        hw_ref, hb_ref, probs_ref):
    logits = _encoder_logits(emb_ref, mask_ref, eg_ref, eb_ref,
                             wqkv_ref, bqkv_ref, wo_ref, bo_ref,
                             ln1g_ref, ln1b_ref, w1_ref, b1_ref,
                             w2_ref, b2_ref, ln2g_ref, ln2b_ref,
                             hw_ref, hb_ref)
    # exact softmax for the returned probabilities (output fidelity)
    probs_ref[...] = _softmax_rows(logits, approx=False)


# ---------------- parameters (deterministic, synthetic, stacked) ----------
def init_params(key):
    def nrm(k, shape, scale=0.02):
        return scale * jax.random.normal(k, shape, dtype=jnp.float32)

    keys = jax.random.split(key, 8)
    return {
        "word_emb": nrm(keys[0], (V, H)),
        "pos_emb": nrm(keys[1], (MAXPOS, H)),
        "type_emb": nrm(keys[2], (2, H)),
        "emb_ln_g": jnp.ones((1, H), jnp.float32),
        "emb_ln_b": jnp.zeros((1, H), jnp.float32),
        "head_w": nrm(keys[3], (H, V)),
        "head_b": jnp.zeros((1, V), jnp.float32),
        # per-layer weights stacked along leading L axis, QKV fused to (H, 3H)
        "wqkv": nrm(keys[4], (L, H, 3 * H)),
        "bqkv": jnp.zeros((L, 1, 3 * H), jnp.float32),
        "wo": nrm(keys[5], (L, H, H)),
        "bo": jnp.zeros((L, 1, H), jnp.float32),
        "ln1_g": jnp.ones((L, 1, H), jnp.float32),
        "ln1_b": jnp.zeros((L, 1, H), jnp.float32),
        "w1": nrm(keys[6], (L, H, FF)),
        "b1": jnp.zeros((L, 1, FF), jnp.float32),
        "w2": nrm(keys[7], (L, FF, H)),
        "b2": jnp.zeros((L, 1, H), jnp.float32),
        "ln2_g": jnp.ones((L, 1, H), jnp.float32),
        "ln2_b": jnp.zeros((L, 1, H), jnp.float32),
    }


# ---------------- forward (mirrors LanguageBertToSftModel.forward) ----------
@jax.jit
def bert_sft_forward(params, x, x_mask=None, y=None):
    Bb, Ss = x.shape
    train = (x_mask is not None) and (y is not None)

    # embeddings (gather kept as plain-JAX glue — single XLA op)
    we = jnp.take(params["word_emb"], x, axis=0)                      # (B,S,H)
    pe = params["pos_emb"][:Ss][None, :, :]                           # (1,S,H)
    te = params["type_emb"][0][None, None, :]                         # (1,1,H)
    emb = (we + pe + te).reshape(Bb * Ss, H).astype(jnp.float32)

    # attention mask (inference path ignores the mask, matching torch code)
    mask = x_mask.astype(jnp.float32) if train else jnp.ones((Bb, Ss), jnp.float32)

    common = (emb, mask,
              params["emb_ln_g"], params["emb_ln_b"],
              params["wqkv"], params["bqkv"], params["wo"], params["bo"],
              params["ln1_g"], params["ln1_b"],
              params["w1"], params["b1"], params["w2"], params["b2"],
              params["ln2_g"], params["ln2_b"],
              params["head_w"], params["head_b"])

    if train:
        labels = y.reshape(-1, 1).astype(jnp.int32)
        loss = pl.pallas_call(
            _fused_train_kernel,
            out_shape=jax.ShapeDtypeStruct((1, 1), jnp.float32),
            in_specs=[VMEM_SPEC] * (_N_COMMON_INPUTS + 1),
            out_specs=SMEM_SPEC,
        )(*common, labels)
        return loss[0, 0]
    else:
        probs = pl.pallas_call(
            _fused_infer_kernel,
            out_shape=jax.ShapeDtypeStruct((Bb * Ss, V), jnp.float32),
            in_specs=[VMEM_SPEC] * _N_COMMON_INPUTS,
            out_specs=VMEM_SPEC,
        )(*common)
        return probs.reshape(Bb, Ss, V)


# ---------------- main ----------------
if __name__ == "__main__":
    key = jax.random.PRNGKey(0)
    pkey, xkey, ykey = jax.random.split(key, 3)
    params = init_params(pkey)

    x = jax.random.randint(xkey, (B, S), 0, V, dtype=jnp.int32)
    # padding mask: last two positions padded
    x_mask = jnp.concatenate(
        [jnp.ones((B, S - 2), jnp.int32), jnp.zeros((B, 2), jnp.int32)], axis=1
    )
    y = jax.random.randint(ykey, (B, S), 0, V, dtype=jnp.int32)
    y = jnp.where(x_mask == 1, y, -1)   # ignore_index = -1 on padded positions

    loss = bert_sft_forward(params, x, x_mask, y)   # training path -> scalar loss
    probs = bert_sft_forward(params, x)             # inference path -> (B,S,V) softmax

    jax.block_until_ready((loss, probs))
    print("KERNEL_OK")
</pallas_src>

<mosaic_0001>
module attributes {stable_mosaic.version = 11 : i64} {
  func.func @_fused_train_kernel(%arg0: memref<16x32xf32, #tpu.memory_space<vmem>>, %arg1: memref<2x8xf32, #tpu.memory_space<vmem>>, %arg2: memref<1x32xf32, #tpu.memory_space<vmem>>, %arg3: memref<1x32xf32, #tpu.memory_space<vmem>>, %arg4: memref<2x32x96xf32, #tpu.memory_space<vmem>>, %arg5: memref<2x1x96xf32, #tpu.memory_space<vmem>>, %arg6: memref<2x32x32xf32, #tpu.memory_space<vmem>>, %arg7: memref<2x1x32xf32, #tpu.memory_space<vmem>>, %arg8: memref<2x1x32xf32, #tpu.memory_space<vmem>>, %arg9: memref<2x1x32xf32, #tpu.memory_space<vmem>>, %arg10: memref<2x32x64xf32, #tpu.memory_space<vmem>>, %arg11: memref<2x1x64xf32, #tpu.memory_space<vmem>>, %arg12: memref<2x64x32xf32, #tpu.memory_space<vmem>>, %arg13: memref<2x1x32xf32, #tpu.memory_space<vmem>>, %arg14: memref<2x1x32xf32, #tpu.memory_space<vmem>>, %arg15: memref<2x1x32xf32, #tpu.memory_space<vmem>>, %arg16: memref<32x128xf32, #tpu.memory_space<vmem>>, %arg17: memref<1x128xf32, #tpu.memory_space<vmem>>, %arg18: memref<16x1xi32, #tpu.memory_space<vmem>>, %arg19: memref<1x1xf32, #tpu.memory_space<smem>>) attributes {dimension_semantics = [], scalar_prefetch = 0 : i64, scratch_operands = 0 : i64, tpu.core_type = #tpu.core_type<tc>} {
    %c0 = arith.constant 0 : index
    %c0_0 = arith.constant 0 : index
    %0 = vector.load %arg0[%c0, %c0_0] : memref<16x32xf32, #tpu.memory_space<vmem>>, vector<16x32xf32>
    %c0_1 = arith.constant 0 : index
    %c0_2 = arith.constant 0 : index
    %1 = vector.load %arg2[%c0_1, %c0_2] : memref<1x32xf32, #tpu.memory_space<vmem>>, vector<1x32xf32>
    %c0_3 = arith.constant 0 : index
    %c0_4 = arith.constant 0 : index
    %2 = vector.load %arg3[%c0_3, %c0_4] : memref<1x32xf32, #tpu.memory_space<vmem>>, vector<1x32xf32>
    %cst = arith.constant dense<0.000000e+00> : vector<16xf32>
    %3 = vector.multi_reduction <add>, %0, %cst [1] : vector<16x32xf32> to vector<16xf32>
    %4 = vector.shape_cast %3 : vector<16xf32> to vector<16x1xf32>
    %cst_5 = arith.constant 3.200000e+01 : f32
    %5 = vector.broadcast %cst_5 : f32 to vector<16x1xf32>
    %6 = arith.divf %4, %5 : vector<16x1xf32>
    %7 = vector.broadcast %6 : vector<16x1xf32> to vector<16x32xf32>
    %8 = arith.subf %0, %7 : vector<16x32xf32>
    %9 = arith.mulf %8, %8 : vector<16x32xf32>
    %cst_6 = arith.constant dense<0.000000e+00> : vector<16xf32>
    %10 = vector.multi_reduction <add>, %9, %cst_6 [1] : vector<16x32xf32> to vector<16xf32>
    %11 = vector.shape_cast %10 : vector<16xf32> to vector<16x1xf32>
    %cst_7 = arith.constant 3.200000e+01 : f32
    %12 = vector.broadcast %cst_7 : f32 to vector<16x1xf32>
    %13 = arith.divf %11, %12 : vector<16x1xf32>
    %cst_8 = arith.constant 9.99999996E-13 : f32
    %14 = vector.broadcast %cst_8 : f32 to vector<16x1xf32>
    %15 = arith.addf %13, %14 : vector<16x1xf32>
    %16 = math.rsqrt %15 : vector<16x1xf32>
    %17 = vector.broadcast %16 : vector<16x1xf32> to vector<16x32xf32>
    %18 = arith.mulf %8, %17 : vector<16x32xf32>
    %19 = vector.broadcast %1 : vector<1x32xf32> to vector<16x32xf32>
    %20 = arith.mulf %18, %19 : vector<16x32xf32>
    %21 = vector.broadcast %2 : vector<1x32xf32> to vector<16x32xf32>
    %22 = arith.addf %20, %21 : vector<16x32xf32>
    %c0_9 = arith.constant 0 : index
    %c0_10 = arith.constant 0 : index
    %23 = vector.load %arg1[%c0_9, %c0_10] : memref<2x8xf32, #tpu.memory_space<vmem>>, vector<2x8xf32>
    %cst_11 = arith.constant 1.000000e+00 : f32
    %24 = vector.broadcast %cst_11 : f32 to vector<2x8xf32>
    %25 = arith.subf %24, %23 : vector<2x8xf32>
    %cst_12 = arith.constant -1.000000e+04 : f32
    %26 = vector.broadcast %cst_12 : f32 to vector<2x8xf32>
    %27 = arith.mulf %25, %26 : vector<2x8xf32>
    %c0_13 = arith.constant 0 : index
    %c0_14 = arith.constant 0 : index
    %c0_15 = arith.constant 0 : index
    %28 = vector.load %arg4[%c0_13, %c0_14, %c0_15] : memref<2x32x96xf32, #tpu.memory_space<vmem>>, vector<1x32x96xf32>
    %29 = vector.shape_cast %28 : vector<1x32x96xf32> to vector<32x96xf32>
    %cst_16 = arith.constant dense<0.000000e+00> : vector<16x96xf32>
    %30 = tpu.matmul %22, %29, %cst_16 {dimension_numbers = #tpu.dot_dimension_numbers<[1], [0], [0], [1], [0, 0, 1, 1], [], []>} : vector<16x32xf32>, vector<32x96xf32>, vector<16x96xf32> -> vector<16x96xf32>
    %c0_17 = arith.constant 0 : index
    %c0_18 = arith.constant 0 : index
    %c0_19 = arith.constant 0 : index
    %31 = vector.load %arg5[%c0_17, %c0_18, %c0_19] : memref<2x1x96xf32, #tpu.memory_space<vmem>>, vector<1x1x96xf32>
    %32 = vector.shape_cast %31 : vector<1x1x96xf32> to vector<1x96xf32>
    %33 = vector.broadcast %32 : vector<1x96xf32> to vector<16x96xf32>
    %34 = arith.addf %30, %33 : vector<16x96xf32>
    %35 = vector.extract_strided_slice %34 {offsets = [0, 0], sizes = [16, 32], strides = [1, 1]} : vector<16x96xf32> to vector<16x32xf32>
    %cst_20 = arith.constant 0.353553385 : f32
    %36 = vector.broadcast %cst_20 : f32 to vector<16x32xf32>
    %37 = arith.mulf %35, %36 : vector<16x32xf32>
    %38 = vector.extract_strided_slice %34 {offsets = [0, 32], sizes = [16, 32], strides = [1, 1]} : vector<16x96xf32> to vector<16x32xf32>
    %39 = vector.extract_strided_slice %34 {offsets = [0, 64], sizes = [16, 32], strides = [1, 1]} : vector<16x96xf32> to vector<16x32xf32>
    %40 = vector.extract_strided_slice %27 {offsets = [0, 0], sizes = [1, 8], strides = [1, 1]} : vector<2x8xf32> to vector<1x8xf32>
    %41 = vector.extract_strided_slice %37 {offsets = [0, 0], sizes = [8, 8], strides = [1, 1]} : vector<16x32xf32> to vector<8x8xf32>
    %42 = vector.extract_strided_slice %38 {offsets = [0, 0], sizes = [8, 8], strides = [1, 1]} : vector<16x32xf32> to vector<8x8xf32>
    %43 = vector.extract_strided_slice %39 {offsets = [0, 0], sizes = [8, 8], strides = [1, 1]} : vector<16x32xf32> to vector<8x8xf32>
    "tpu.trace_start"() <{level = 10 : i32, message = "qd,kd->qk"}> : () -> ()
    %cst_21 = arith.constant dense<0.000000e+00> : vector<8x8xf32>
    %44 = tpu.matmul %41, %42, %cst_21 {dimension_numbers = #tpu.dot_dimension_numbers<[1], [1], [0], [0], [0, 0, 1, 0], [], []>} : vector<8x8xf32>, vector<8x8xf32>, vector<8x8xf32> -> vector<8x8xf32>
    "tpu.trace_stop"() : () -> ()
    %45 = vector.broadcast %40 : vector<1x8xf32> to vector<8x8xf32>
    %46 = arith.addf %44, %45 : vector<8x8xf32>
    %cst_22 = arith.constant dense<0xFF800000> : vector<8xf32>
    %47 = vector.multi_reduction <maximumf>, %46, %cst_22 [1] : vector<8x8xf32> to vector<8xf32>
    %48 = vector.shape_cast %47 : vector<8xf32> to vector<8x1xf32>
    %49 = vector.broadcast %48 : vector<8x1xf32> to vector<8x8xf32>
    %50 = arith.subf %46, %49 : vector<8x8xf32>
    %51 = math.exp %50 : vector<8x8xf32>
    %cst_23 = arith.constant dense<0.000000e+00> : vector<8xf32>
    %52 = vector.multi_reduction <add>, %51, %cst_23 [1] : vector<8x8xf32> to vector<8xf32>
    %53 = vector.shape_cast %52 : vector<8xf32> to vector<8x1xf32>
    %54 = tpu.reciprocal %53 {approx = true} : vector<8x1xf32> -> vector<8x1xf32>
    %55 = vector.broadcast %54 : vector<8x1xf32> to vector<8x8xf32>
    %56 = arith.mulf %51, %55 : vector<8x8xf32>
    %cst_24 = arith.constant dense<0.000000e+00> : vector<8x8xf32>
    %57 = tpu.matmul %56, %43, %cst_24 {dimension_numbers = #tpu.dot_dimension_numbers<[1], [0], [0], [1], [0, 0, 1, 1], [], []>} : vector<8x8xf32>, vector<8x8xf32>, vector<8x8xf32> -> vector<8x8xf32>
    %58 = vector.extract_strided_slice %37 {offsets = [0, 8], sizes = [8, 8], strides = [1, 1]} : vector<16x32xf32> to vector<8x8xf32>
    %59 = vector.extract_strided_slice %38 {offsets = [0, 8], sizes = [8, 8], strides = [1, 1]} : vector<16x32xf32> to vector<8x8xf32>
    %60 = vector.extract_strided_slice %39 {offsets = [0, 8], sizes = [8, 8], strides = [1, 1]} : vector<16x32xf32> to vector<8x8xf32>
    "tpu.trace_start"() <{level = 10 : i32, message = "qd,kd->qk"}> : () -> ()
    %cst_25 = arith.constant dense<0.000000e+00> : vector<8x8xf32>
    %61 = tpu.matmul %58, %59, %cst_25 {dimension_numbers = #tpu.dot_dimension_numbers<[1], [1], [0], [0], [0, 0, 1, 0], [], []>} : vector<8x8xf32>, vector<8x8xf32>, vector<8x8xf32> -> vector<8x8xf32>
    "tpu.trace_stop"() : () -> ()
    %62 = vector.broadcast %40 : vector<1x8xf32> to vector<8x8xf32>
    %63 = arith.addf %61, %62 : vector<8x8xf32>
    %cst_26 = arith.constant dense<0xFF800000> : vector<8xf32>
    %64 = vector.multi_reduction <maximumf>, %63, %cst_26 [1] : vector<8x8xf32> to vector<8xf32>
    %65 = vector.shape_cast %64 : vector<8xf32> to vector<8x1xf32>
    %66 = vector.broadcast %65 : vector<8x1xf32> to vector<8x8xf32>
    %67 = arith.subf %63, %66 : vector<8x8xf32>
    %68 = math.exp %67 : vector<8x8xf32>
    %cst_27 = arith.constant dense<0.000000e+00> : vector<8xf32>
    %69 = vector.multi_reduction <add>, %68, %cst_27 [1] : vector<8x8xf32> to vector<8xf32>
    %70 = vector.shape_cast %69 : vector<8xf32> to vector<8x1xf32>
    %71 = tpu.reciprocal %70 {approx = true} : vector<8x1xf32> -> vector<8x1xf32>
    %72 = vector.broadcast %71 : vector<8x1xf32> to vector<8x8xf32>
    %73 = arith.mulf %68, %72 : vector<8x8xf32>
    %cst_28 = arith.constant dense<0.000000e+00> : vector<8x8xf32>
    %74 = tpu.matmul %73, %60, %cst_28 {dimension_numbers = #tpu.dot_dimension_numbers<[1], [0], [0], [1], [0, 0, 1, 1], [], []>} : vector<8x8xf32>, vector<8x8xf32>, vector<8x8xf32> -> vector<8x8xf32>
    %75 = vector.extract_strided_slice %37 {offsets = [0, 16], sizes = [8, 8], strides = [1, 1]} : vector<16x32xf32> to vector<8x8xf32>
    %76 = vector.extract_strided_slice %38 {offsets = [0, 16], sizes = [8, 8], strides = [1, 1]} : vector<16x32xf32> to vector<8x8xf32>
    %77 = vector.extract_strided_slice %39 {offsets = [0, 16], sizes = [8, 8], strides = [1, 1]} : vector<16x32xf32> to vector<8x8xf32>
    "tpu.trace_start"() <{level = 10 : i32, message = "qd,kd->qk"}> : () -> ()
    %cst_29 = arith.constant dense<0.000000e+00> : vector<8x8xf32>
    %78 = tpu.matmul %75, %76, %cst_29 {dimension_numbers = #tpu.dot_dimension_numbers<[1], [1], [0], [0], [0, 0, 1, 0], [], []>} : vector<8x8xf32>, vector<8x8xf32>, vector<8x8xf32> -> vector<8x8xf32>
    "tpu.trace_stop"() : () -> ()
    %79 = vector.broadcast %40 : vector<1x8xf32> to vector<8x8xf32>
    %80 = arith.addf %78, %79 : vector<8x8xf32>
    %cst_30 = arith.constant dense<0xFF800000> : vector<8xf32>
    %81 = vector.multi_reduction <maximumf>, %80, %cst_30 [1] : vector<8x8xf32> to vector<8xf32>
    %82 = vector.shape_cast %81 : vector<8xf32> to vector<8x1xf32>
    %83 = vector.broadcast %82 : vector<8x1xf32> to vector<8x8xf32>
    %84 = arith.subf %80, %83 : vector<8x8xf32>
    %85 = math.exp %84 : vector<8x8xf32>
    %cst_31 = arith.constant dense<0.000000e+00> : vector<8xf32>
    %86 = vector.multi_reduction <add>, %85, %cst_31 [1] : vector<8x8xf32> to vector<8xf32>
    %87 = vector.shape_cast %86 : vector<8xf32> to vector<8x1xf32>
    %88 = tpu.reciprocal %87 {approx = true} : vector<8x1xf32> -> vector<8x1xf32>
    %89 = vector.broadcast %88 : vector<8x1xf32> to vector<8x8xf32>
    %90 = arith.mulf %85, %89 : vector<8x8xf32>
    %cst_32 = arith.constant dense<0.000000e+00> : vector<8x8xf32>
    %91 = tpu.matmul %90, %77, %cst_32 {dimension_numbers = #tpu.dot_dimension_numbers<[1], [0], [0], [1], [0, 0, 1, 1], [], []>} : vector<8x8xf32>, vector<8x8xf32>, vector<8x8xf32> -> vector<8x8xf32>
    %92 = vector.extract_strided_slice %37 {offsets = [0, 24], sizes = [8, 8], strides = [1, 1]} : vector<16x32xf32> to vector<8x8xf32>
    %93 = vector.extract_strided_slice %38 {offsets = [0, 24], sizes = [8, 8], strides = [1, 1]} : vector<16x32xf32> to vector<8x8xf32>
    %94 = vector.extract_strided_slice %39 {offsets = [0, 24], sizes = [8, 8], strides = [1, 1]} : vector<16x32xf32> to vector<8x8xf32>
    "tpu.trace_start"() <{level = 10 : i32, message = "qd,kd->qk"}> : () -> ()
    %cst_33 = arith.constant dense<0.000000e+00> : vector<8x8xf32>
    %95 = tpu.matmul %92, %93, %cst_33 {dimension_numbers = #tpu.dot_dimension_numbers<[1], [1], [0], [0], [0, 0, 1, 0], [], []>} : vector<8x8xf32>, vector<8x8xf32>, vector<8x8xf32> -> vector<8x8xf32>
    "tpu.trace_stop"() : () -> ()
    %96 = vector.broadcast %40 : vector<1x8xf32> to vector<8x8xf32>
    %97 = arith.addf %95, %96 : vector<8x8xf32>
    %cst_34 = arith.constant dense<0xFF800000> : vector<8xf32>
    %98 = vector.multi_reduction <maximumf>, %97, %cst_34 [1] : vector<8x8xf32> to vector<8xf32>
    %99 = vector.shape_cast %98 : vector<8xf32> to vector<8x1xf32>
    %100 = vector.broadcast %99 : vector<8x1xf32> to vector<8x8xf32>
    %101 = arith.subf %97, %100 : vector<8x8xf32>
    %102 = math.exp %101 : vector<8x8xf32>
    %cst_35 = arith.constant dense<0.000000e+00> : vector<8xf32>
    %103 = vector.multi_reduction <add>, %102, %cst_35 [1] : vector<8x8xf32> to vector<8xf32>
    %104 = vector.shape_cast %103 : vector<8xf32> to vector<8x1xf32>
    %105 = tpu.reciprocal %104 {approx = true} : vector<8x1xf32> -> vector<8x1xf32>
    %106 = vector.broadcast %105 : vector<8x1xf32> to vector<8x8xf32>
    %107 = arith.mulf %102, %106 : vector<8x8xf32>
    %cst_36 = arith.constant dense<0.000000e+00> : vector<8x8xf32>
    %108 = tpu.matmul %107, %94, %cst_36 {dimension_numbers = #tpu.dot_dimension_numbers<[1], [0], [0], [1], [0, 0, 1, 1], [], []>} : vector<8x8xf32>, vector<8x8xf32>, vector<8x8xf32> -> vector<8x8xf32>
    %109 = tpu.concatenate %57, %74, %91, %108 in 1 : vector<8x8xf32>, vector<8x8xf32>, vector<8x8xf32>, vector<8x8xf32> -> vector<8x32xf32>
    %110 = vector.extract_strided_slice %27 {offsets = [1, 0], sizes = [1, 8], strides = [1, 1]} : vector<2x8xf32> to vector<1x8xf32>
    %111 = vector.extract_strided_slice %37 {offsets = [8, 0], sizes = [8, 8], strides = [1, 1]} : vector<16x32xf32> to vector<8x8xf32>
    %112 = vector.extract_strided_slice %38 {offsets = [8, 0], sizes = [8, 8], strides = [1, 1]} : vector<16x32xf32> to vector<8x8xf32>
    %113 = vector.extract_strided_slice %39 {offsets = [8, 0], sizes = [8, 8], strides = [1, 1]} : vector<16x32xf32> to vector<8x8xf32>
    "tpu.trace_start"() <{level = 10 : i32, message = "qd,kd->qk"}> : () -> ()
    %cst_37 = arith.constant dense<0.000000e+00> : vector<8x8xf32>
    %114 = tpu.matmul %111, %112, %cst_37 {dimension_numbers = #tpu.dot_dimension_numbers<[1], [1], [0], [0], [0, 0, 1, 0], [], []>} : vector<8x8xf32>, vector<8x8xf32>, vector<8x8xf32> -> vector<8x8xf32>
    "tpu.trace_stop"() : () -> ()
    %115 = vector.broadcast %110 : vector<1x8xf32> to vector<8x8xf32>
    %116 = arith.addf %114, %115 : vector<8x8xf32>
    %cst_38 = arith.constant dense<0xFF800000> : vector<8xf32>
    %117 = vector.multi_reduction <maximumf>, %116, %cst_38 [1] : vector<8x8xf32> to vector<8xf32>
    %118 = vector.shape_cast %117 : vector<8xf32> to vector<8x1xf32>
    %119 = vector.broadcast %118 : vector<8x1xf32> to vector<8x8xf32>
    %120 = arith.subf %116, %119 : vector<8x8xf32>
    %121 = math.exp %120 : vector<8x8xf32>
    %cst_39 = arith.constant dense<0.000000e+00> : vector<8xf32>
    %122 = vector.multi_reduction <add>, %121, %cst_39 [1] : vector<8x8xf32> to vector<8xf32>
    %123 = vector.shape_cast %122 : vector<8xf32> to vector<8x1xf32>
    %124 = tpu.reciprocal %123 {approx = true} : vector<8x1xf32> -> vector<8x1xf32>
    %125 = vector.broadcast %124 : vector<8x1xf32> to vector<8x8xf32>
    %126 = arith.mulf %121, %125 : vector<8x8xf32>
    %cst_40 = arith.constant dense<0.000000e+00> : vector<8x8xf32>
    %127 = tpu.matmul %126, %113, %cst_40 {dimension_numbers = #tpu.dot_dimension_numbers<[1], [0], [0], [1], [0, 0, 1, 1], [], []>} : vector<8x8xf32>, vector<8x8xf32>, vector<8x8xf32> -> vector<8x8xf32>
    %128 = vector.extract_strided_slice %37 {offsets = [8, 8], sizes = [8, 8], strides = [1, 1]} : vector<16x32xf32> to vector<8x8xf32>
    %129 = vector.extract_strided_slice %38 {offsets = [8, 8], sizes = [8, 8], strides = [1, 1]} : vector<16x32xf32> to vector<8x8xf32>
    %130 = vector.extract_strided_slice %39 {offsets = [8, 8], sizes = [8, 8], strides = [1, 1]} : vector<16x32xf32> to vector<8x8xf32>
    "tpu.trace_start"() <{level = 10 : i32, message = "qd,kd->qk"}> : () -> ()
    %cst_41 = arith.constant dense<0.000000e+00> : vector<8x8xf32>
    %131 = tpu.matmul %128, %129, %cst_41 {dimension_numbers = #tpu.dot_dimension_numbers<[1], [1], [0], [0], [0, 0, 1, 0], [], []>} : vector<8x8xf32>, vector<8x8xf32>, vector<8x8xf32> -> vector<8x8xf32>
    "tpu.trace_stop"() : () -> ()
    %132 = vector.broadcast %110 : vector<1x8xf32> to vector<8x8xf32>
    %133 = arith.addf %131, %132 : vector<8x8xf32>
    %cst_42 = arith.constant dense<0xFF800000> : vector<8xf32>
    %134 = vector.multi_reduction <maximumf>, %133, %cst_42 [1] : vector<8x8xf32> to vector<8xf32>
    %135 = vector.shape_cast %134 : vector<8xf32> to vector<8x1xf32>
    %136 = vector.broadcast %135 : vector<8x1xf32> to vector<8x8xf32>
    %137 = arith.subf %133, %136 : vector<8x8xf32>
    %138 = math.exp %137 : vector<8x8xf32>
    %cst_43 = arith.constant dense<0.000000e+00> : vector<8xf32>
    %139 = vector.multi_reduction <add>, %138, %cst_43 [1] : vector<8x8xf32> to vector<8xf32>
    %140 = vector.shape_cast %139 : vector<8xf32> to vector<8x1xf32>
    %141 = tpu.reciprocal %140 {approx = true} : vector<8x1xf32> -> vector<8x1xf32>
    %142 = vector.broadcast %141 : vector<8x1xf32> to vector<8x8xf32>
    %143 = arith.mulf %138, %142 : vector<8x8xf32>
    %cst_44 = arith.constant dense<0.000000e+00> : vector<8x8xf32>
    %144 = tpu.matmul %143, %130, %cst_44 {dimension_numbers = #tpu.dot_dimension_numbers<[1], [0], [0], [1], [0, 0, 1, 1], [], []>} : vector<8x8xf32>, vector<8x8xf32>, vector<8x8xf32> -> vector<8x8xf32>
    %145 = vector.extract_strided_slice %37 {offsets = [8, 16], sizes = [8, 8], strides = [1, 1]} : vector<16x32xf32> to vector<8x8xf32>
    %146 = vector.extract_strided_slice %38 {offsets = [8, 16], sizes = [8, 8], strides = [1, 1]} : vector<16x32xf32> to vector<8x8xf32>
    %147 = vector.extract_strided_slice %39 {offsets = [8, 16], sizes = [8, 8], strides = [1, 1]} : vector<16x32xf32> to vector<8x8xf32>
    "tpu.trace_start"() <{level = 10 : i32, message = "qd,kd->qk"}> : () -> ()
    %cst_45 = arith.constant dense<0.000000e+00> : vector<8x8xf32>
    %148 = tpu.matmul %145, %146, %cst_45 {dimension_numbers = #tpu.dot_dimension_numbers<[1], [1], [0], [0], [0, 0, 1, 0], [], []>} : vector<8x8xf32>, vector<8x8xf32>, vector<8x8xf32> -> vector<8x8xf32>
    "tpu.trace_stop"() : () -> ()
    %149 = vector.broadcast %110 : vector<1x8xf32> to vector<8x8xf32>
    %150 = arith.addf %148, %149 : vector<8x8xf32>
    %cst_46 = arith.constant dense<0xFF800000> : vector<8xf32>
    %151 = vector.multi_reduction <maximumf>, %150, %cst_46 [1] : vector<8x8xf32> to vector<8xf32>
    %152 = vector.shape_cast %151 : vector<8xf32> to vector<8x1xf32>
    %153 = vector.broadcast %152 : vector<8x1xf32> to vector<8x8xf32>
    %154 = arith.subf %150, %153 : vector<8x8xf32>
    %155 = math.exp %154 : vector<8x8xf32>
    %cst_47 = arith.constant dense<0.000000e+00> : vector<8xf32>
    %156 = vector.multi_reduction <add>, %155, %cst_47 [1] : vector<8x8xf32> to vector<8xf32>
    %157 = vector.shape_cast %156 : vector<8xf32> to vector<8x1xf32>
    %158 = tpu.reciprocal %157 {approx = true} : vector<8x1xf32> -> vector<8x1xf32>
    %159 = vector.broadcast %158 : vector<8x1xf32> to vector<8x8xf32>
    %160 = arith.mulf %155, %159 : vector<8x8xf32>
    %cst_48 = arith.constant dense<0.000000e+00> : vector<8x8xf32>
    %161 = tpu.matmul %160, %147, %cst_48 {dimension_numbers = #tpu.dot_dimension_numbers<[1], [0], [0], [1], [0, 0, 1, 1], [], []>} : vector<8x8xf32>, vector<8x8xf32>, vector<8x8xf32> -> vector<8x8xf32>
    %162 = vector.extract_strided_slice %37 {offsets = [8, 24], sizes = [8, 8], strides = [1, 1]} : vector<16x32xf32> to vector<8x8xf32>
    %163 = vector.extract_strided_slice %38 {offsets = [8, 24], sizes = [8, 8], strides = [1, 1]} : vector<16x32xf32> to vector<8x8xf32>
    %164 = vector.extract_strided_slice %39 {offsets = [8, 24], sizes = [8, 8], strides = [1, 1]} : vector<16x32xf32> to vector<8x8xf32>
    "tpu.trace_start"() <{level = 10 : i32, message = "qd,kd->qk"}> : () -> ()
    %cst_49 = arith.constant dense<0.000000e+00> : vector<8x8xf32>
    %165 = tpu.matmul %162, %163, %cst_49 {dimension_numbers = #tpu.dot_dimension_numbers<[1], [1], [0], [0], [0, 0, 1, 0], [], []>} : vector<8x8xf32>, vector<8x8xf32>, vector<8x8xf32> -> vector<8x8xf32>
    "tpu.trace_stop"() : () -> ()
    %166 = vector.broadcast %110 : vector<1x8xf32> to vector<8x8xf32>
    %167 = arith.addf %165, %166 : vector<8x8xf32>
    %cst_50 = arith.constant dense<0xFF800000> : vector<8xf32>
    %168 = vector.multi_reduction <maximumf>, %167, %cst_50 [1] : vector<8x8xf32> to vector<8xf32>
    %169 = vector.shape_cast %168 : vector<8xf32> to vector<8x1xf32>
    %170 = vector.broadcast %169 : vector<8x1xf32> to vector<8x8xf32>
    %171 = arith.subf %167, %170 : vector<8x8xf32>
    %172 = math.exp %171 : vector<8x8xf32>
    %cst_51 = arith.constant dense<0.000000e+00> : vector<8xf32>
    %173 = vector.multi_reduction <add>, %172, %cst_51 [1] : vector<8x8xf32> to vector<8xf32>
    %174 = vector.shape_cast %173 : vector<8xf32> to vector<8x1xf32>
    %175 = tpu.reciprocal %174 {approx = true} : vector<8x1xf32> -> vector<8x1xf32>
    %176 = vector.broadcast %175 : vector<8x1xf32> to vector<8x8xf32>
    %177 = arith.mulf %172, %176 : vector<8x8xf32>
    %cst_52 = arith.constant dense<0.000000e+00> : vector<8x8xf32>
    %178 = tpu.matmul %177, %164, %cst_52 {dimension_numbers = #tpu.dot_dimension_numbers<[1], [0], [0], [1], [0, 0, 1, 1], [], []>} : vector<8x8xf32>, vector<8x8xf32>, vector<8x8xf32> -> vector<8x8xf32>
    %179 = tpu.concatenate %127, %144, %161, %178 in 1 : vector<8x8xf32>, vector<8x8xf32>, vector<8x8xf32>, vector<8x8xf32> -> vector<8x32xf32>
    %180 = tpu.concatenate %109, %179 in 0 : vector<8x32xf32>, vector<8x32xf32> -> vector<16x32xf32>
    %c0_53 = arith.constant 0 : index
    %c0_54 = arith.constant 0 : index
    %c0_55 = arith.constant 0 : index
    %181 = vector.load %arg6[%c0_53, %c0_54, %c0_55] : memref<2x32x32xf32, #tpu.memory_space<vmem>>, vector<1x32x32xf32>
    %182 = vector.shape_cast %181 : vector<1x32x32xf32> to vector<32x32xf32>
    %cst_56 = arith.constant dense<0.000000e+00> : vector<16x32xf32>
    %183 = tpu.matmul %180, %182, %cst_56 {dimension_numbers = #tpu.dot_dimension_numbers<[1], [0], [0], [1], [0, 0, 1, 1], [], []>} : vector<16x32xf32>, vector<32x32xf32>, vector<16x32xf32> -> vector<16x32xf32>
    %c0_57 = arith.constant 0 : index
    %c0_58 = arith.constant 0 : index
    %c0_59 = arith.constant 0 : index
    %184 = vector.load %arg7[%c0_57, %c0_58, %c0_59] : memref<2x1x32xf32, #tpu.memory_space<vmem>>, vector<1x1x32xf32>
    %185 = vector.shape_cast %184 : vector<1x1x32xf32> to vector<1x32xf32>
    %186 = vector.broadcast %185 : vector<1x32xf32> to vector<16x32xf32>
    %187 = arith.addf %183, %186 : vector<16x32xf32>
    %188 = arith.addf %187, %22 : vector<16x32xf32>
    %c0_60 = arith.constant 0 : index
    %c0_61 = arith.constant 0 : index
    %c0_62 = arith.constant 0 : index
    %189 = vector.load %arg8[%c0_60, %c0_61, %c0_62] : memref<2x1x32xf32, #tpu.memory_space<vmem>>, vector<1x1x32xf32>
    %190 = vector.shape_cast %189 : vector<1x1x32xf32> to vector<1x32xf32>
    %c0_63 = arith.constant 0 : index
    %c0_64 = arith.constant 0 : index
    %c0_65 = arith.constant 0 : index
    %191 = vector.load %arg9[%c0_63, %c0_64, %c0_65] : memref<2x1x32xf32, #tpu.memory_space<vmem>>, vector<1x1x32xf32>
    %192 = vector.shape_cast %191 : vector<1x1x32xf32> to vector<1x32xf32>
    %cst_66 = arith.constant dense<0.000000e+00> : vector<16xf32>
    %193 = vector.multi_reduction <add>, %188, %cst_66 [1] : vector<16x32xf32> to vector<16xf32>
    %194 = vector.shape_cast %193 : vector<16xf32> to vector<16x1xf32>
    %cst_67 = arith.constant 3.200000e+01 : f32
    %195 = vector.broadcast %cst_67 : f32 to vector<16x1xf32>
    %196 = arith.divf %194, %195 : vector<16x1xf32>
    %197 = vector.broadcast %196 : vector<16x1xf32> to vector<16x32xf32>
    %198 = arith.subf %188, %197 : vector<16x32xf32>
    %199 = arith.mulf %198, %198 : vector<16x32xf32>
    %cst_68 = arith.constant dense<0.000000e+00> : vector<16xf32>
    %200 = vector.multi_reduction <add>, %199, %cst_68 [1] : vector<16x32xf32> to vector<16xf32>
    %201 = vector.shape_cast %200 : vector<16xf32> to vector<16x1xf32>
    %cst_69 = arith.constant 3.200000e+01 : f32
    %202 = vector.broadcast %cst_69 : f32 to vector<16x1xf32>
    %203 = arith.divf %201, %202 : vector<16x1xf32>
    %cst_70 = arith.constant 9.99999996E-13 : f32
    %204 = vector.broadcast %cst_70 : f32 to vector<16x1xf32>
    %205 = arith.addf %203, %204 : vector<16x1xf32>
    %206 = math.rsqrt %205 : vector<16x1xf32>
    %207 = vector.broadcast %206 : vector<16x1xf32> to vector<16x32xf32>
    %208 = arith.mulf %198, %207 : vector<16x32xf32>
    %209 = vector.broadcast %190 : vector<1x32xf32> to vector<16x32xf32>
    %210 = arith.mulf %208, %209 : vector<16x32xf32>
    %211 = vector.broadcast %192 : vector<1x32xf32> to vector<16x32xf32>
    %212 = arith.addf %210, %211 : vector<16x32xf32>
    %c0_71 = arith.constant 0 : index
    %c0_72 = arith.constant 0 : index
    %c0_73 = arith.constant 0 : index
    %213 = vector.load %arg10[%c0_71, %c0_72, %c0_73] : memref<2x32x64xf32, #tpu.memory_space<vmem>>, vector<1x32x64xf32>
    %214 = vector.shape_cast %213 : vector<1x32x64xf32> to vector<32x64xf32>
    %cst_74 = arith.constant dense<0.000000e+00> : vector<16x64xf32>
    %215 = tpu.matmul %212, %214, %cst_74 {dimension_numbers = #tpu.dot_dimension_numbers<[1], [0], [0], [1], [0, 0, 1, 1], [], []>} : vector<16x32xf32>, vector<32x64xf32>, vector<16x64xf32> -> vector<16x64xf32>
    %c0_75 = arith.constant 0 : index
    %c0_76 = arith.constant 0 : index
    %c0_77 = arith.constant 0 : index
    %216 = vector.load %arg11[%c0_75, %c0_76, %c0_77] : memref<2x1x64xf32, #tpu.memory_space<vmem>>, vector<1x1x64xf32>
    %217 = vector.shape_cast %216 : vector<1x1x64xf32> to vector<1x64xf32>
    %218 = vector.broadcast %217 : vector<1x64xf32> to vector<16x64xf32>
    %219 = arith.addf %215, %218 : vector<16x64xf32>
    %cst_78 = arith.constant 5.000000e-01 : f32
    %220 = vector.broadcast %cst_78 : f32 to vector<16x64xf32>
    %221 = arith.mulf %220, %219 : vector<16x64xf32>
    %cst_79 = arith.constant 4.471500e-02 : f32
    %222 = vector.broadcast %cst_79 : f32 to vector<16x64xf32>
    %223 = arith.mulf %222, %219 : vector<16x64xf32>
    %224 = arith.mulf %223, %219 : vector<16x64xf32>
    %225 = arith.mulf %224, %219 : vector<16x64xf32>
    %226 = arith.addf %219, %225 : vector<16x64xf32>
    %cst_80 = arith.constant 0.797884583 : f32
    %227 = vector.broadcast %cst_80 : f32 to vector<16x64xf32>
    %228 = arith.mulf %227, %226 : vector<16x64xf32>
    %229 = math.tanh %228 : vector<16x64xf32>
    %cst_81 = arith.constant 1.000000e+00 : f32
    %230 = vector.broadcast %cst_81 : f32 to vector<16x64xf32>
    %231 = arith.addf %230, %229 : vector<16x64xf32>
    %232 = arith.mulf %221, %231 : vector<16x64xf32>
    %c0_82 = arith.constant 0 : index
    %c0_83 = arith.constant 0 : index
    %c0_84 = arith.constant 0 : index
    %233 = vector.load %arg12[%c0_82, %c0_83, %c0_84] : memref<2x64x32xf32, #tpu.memory_space<vmem>>, vector<1x64x32xf32>
    %234 = vector.shape_cast %233 : vector<1x64x32xf32> to vector<64x32xf32>
    %cst_85 = arith.constant dense<0.000000e+00> : vector<16x32xf32>
    %235 = tpu.matmul %232, %234, %cst_85 {dimension_numbers = #tpu.dot_dimension_numbers<[1], [0], [0], [1], [0, 0, 1, 1], [], []>} : vector<16x64xf32>, vector<64x32xf32>, vector<16x32xf32> -> vector<16x32xf32>
    %c0_86 = arith.constant 0 : index
    %c0_87 = arith.constant 0 : index
    %c0_88 = arith.constant 0 : index
    %236 = vector.load %arg13[%c0_86, %c0_87, %c0_88] : memref<2x1x32xf32, #tpu.memory_space<vmem>>, vector<1x1x32xf32>
    %237 = vector.shape_cast %236 : vector<1x1x32xf32> to vector<1x32xf32>
    %238 = vector.broadcast %237 : vector<1x32xf32> to vector<16x32xf32>
    %239 = arith.addf %235, %238 : vector<16x32xf32>
    %240 = arith.addf %239, %212 : vector<16x32xf32>
    %c0_89 = arith.constant 0 : index
    %c0_90 = arith.constant 0 : index
    %c0_91 = arith.constant 0 : index
    %241 = vector.load %arg14[%c0_89, %c0_90, %c0_91] : memref<2x1x32xf32, #tpu.memory_space<vmem>>, vector<1x1x32xf32>
    %242 = vector.shape_cast %241 : vector<1x1x32xf32> to vector<1x32xf32>
    %c0_92 = arith.constant 0 : index
    %c0_93 = arith.constant 0 : index
    %c0_94 = arith.constant 0 : index
    %243 = vector.load %arg15[%c0_92, %c0_93, %c0_94] : memref<2x1x32xf32, #tpu.memory_space<vmem>>, vector<1x1x32xf32>
    %244 = vector.shape_cast %243 : vector<1x1x32xf32> to vector<1x32xf32>
    %cst_95 = arith.constant dense<0.000000e+00> : vector<16xf32>
    %245 = vector.multi_reduction <add>, %240, %cst_95 [1] : vector<16x32xf32> to vector<16xf32>
    %246 = vector.shape_cast %245 : vector<16xf32> to vector<16x1xf32>
    %cst_96 = arith.constant 3.200000e+01 : f32
    %247 = vector.broadcast %cst_96 : f32 to vector<16x1xf32>
    %248 = arith.divf %246, %247 : vector<16x1xf32>
    %249 = vector.broadcast %248 : vector<16x1xf32> to vector<16x32xf32>
    %250 = arith.subf %240, %249 : vector<16x32xf32>
    %251 = arith.mulf %250, %250 : vector<16x32xf32>
    %cst_97 = arith.constant dense<0.000000e+00> : vector<16xf32>
    %252 = vector.multi_reduction <add>, %251, %cst_97 [1] : vector<16x32xf32> to vector<16xf32>
    %253 = vector.shape_cast %252 : vector<16xf32> to vector<16x1xf32>
    %cst_98 = arith.constant 3.200000e+01 : f32
    %254 = vector.broadcast %cst_98 : f32 to vector<16x1xf32>
    %255 = arith.divf %253, %254 : vector<16x1xf32>
    %cst_99 = arith.constant 9.99999996E-13 : f32
    %256 = vector.broadcast %cst_99 : f32 to vector<16x1xf32>
    %257 = arith.addf %255, %256 : vector<16x1xf32>
    %258 = math.rsqrt %257 : vector<16x1xf32>
    %259 = vector.broadcast %258 : vector<16x1xf32> to vector<16x32xf32>
    %260 = arith.mulf %250, %259 : vector<16x32xf32>
    %261 = vector.broadcast %242 : vector<1x32xf32> to vector<16x32xf32>
    %262 = arith.mulf %260, %261 : vector<16x32xf32>
    %263 = vector.broadcast %244 : vector<1x32xf32> to vector<16x32xf32>
    %264 = arith.addf %262, %263 : vector<16x32xf32>
    %c1 = arith.constant 1 : index
    %c0_100 = arith.constant 0 : index
    %c0_101 = arith.constant 0 : index
    %265 = vector.load %arg4[%c1, %c0_100, %c0_101] : memref<2x32x96xf32, #tpu.memory_space<vmem>>, vector<1x32x96xf32>
    %266 = vector.shape_cast %265 : vector<1x32x96xf32> to vector<32x96xf32>
    %cst_102 = arith.constant dense<0.000000e+00> : vector<16x96xf32>
    %267 = tpu.matmul %264, %266, %cst_102 {dimension_numbers = #tpu.dot_dimension_numbers<[1], [0], [0], [1], [0, 0, 1, 1], [], []>} : vector<16x32xf32>, vector<32x96xf32>, vector<16x96xf32> -> vector<16x96xf32>
    %c1_103 = arith.constant 1 : index
    %c0_104 = arith.constant 0 : index
    %c0_105 = arith.constant 0 : index
    %268 = vector.load %arg5[%c1_103, %c0_104, %c0_105] : memref<2x1x96xf32, #tpu.memory_space<vmem>>, vector<1x1x96xf32>
    %269 = vector.shape_cast %268 : vector<1x1x96xf32> to vector<1x96xf32>
    %270 = vector.broadcast %269 : vector<1x96xf32> to vector<16x96xf32>
    %271 = arith.addf %267, %270 : vector<16x96xf32>
    %272 = vector.extract_strided_slice %271 {offsets = [0, 0], sizes = [16, 32], strides = [1, 1]} : vector<16x96xf32> to vector<16x32xf32>
    %cst_106 = arith.constant 0.353553385 : f32
    %273 = vector.broadcast %cst_106 : f32 to vector<16x32xf32>
    %274 = arith.mulf %272, %273 : vector<16x32xf32>
    %275 = vector.extract_strided_slice %271 {offsets = [0, 32], sizes = [16, 32], strides = [1, 1]} : vector<16x96xf32> to vector<16x32xf32>
    %276 = vector.extract_strided_slice %271 {offsets = [0, 64], sizes = [16, 32], strides = [1, 1]} : vector<16x96xf32> to vector<16x32xf32>
    %277 = vector.extract_strided_slice %27 {offsets = [0, 0], sizes = [1, 8], strides = [1, 1]} : vector<2x8xf32> to vector<1x8xf32>
    %278 = vector.extract_strided_slice %274 {offsets = [0, 0], sizes = [8, 8], strides = [1, 1]} : vector<16x32xf32> to vector<8x8xf32>
    %279 = vector.extract_strided_slice %275 {offsets = [0, 0], sizes = [8, 8], strides = [1, 1]} : vector<16x32xf32> to vector<8x8xf32>
    %280 = vector.extract_strided_slice %276 {offsets = [0, 0], sizes = [8, 8], strides = [1, 1]} : vector<16x32xf32> to vector<8x8xf32>
    "tpu.trace_start"() <{level = 10 : i32, message = "qd,kd->qk"}> : () -> ()
    %cst_107 = arith.constant dense<0.000000e+00> : vector<8x8xf32>
    %281 = tpu.matmul %278, %279, %cst_107 {dimension_numbers = #tpu.dot_dimension_numbers<[1], [1], [0], [0], [0, 0, 1, 0], [], []>} : vector<8x8xf32>, vector<8x8xf32>, vector<8x8xf32> -> vector<8x8xf32>
    "tpu.trace_stop"() : () -> ()
    %282 = vector.broadcast %277 : vector<1x8xf32> to vector<8x8xf32>
    %283 = arith.addf %281, %282 : vector<8x8xf32>
    %cst_108 = arith.constant dense<0xFF800000> : vector<8xf32>
    %284 = vector.multi_reduction <maximumf>, %283, %cst_108 [1] : vector<8x8xf32> to vector<8xf32>
    %285 = vector.shape_cast %284 : vector<8xf32> to vector<8x1xf32>
    %286 = vector.broadcast %285 : vector<8x1xf32> to vector<8x8xf32>
    %287 = arith.subf %283, %286 : vector<8x8xf32>
    %288 = math.exp %287 : vector<8x8xf32>
    %cst_109 = arith.constant dense<0.000000e+00> : vector<8xf32>
    %289 = vector.multi_reduction <add>, %288, %cst_109 [1] : vector<8x8xf32> to vector<8xf32>
    %290 = vector.shape_cast %289 : vector<8xf32> to vector<8x1xf32>
    %291 = tpu.reciprocal %290 {approx = true} : vector<8x1xf32> -> vector<8x1xf32>
    %292 = vector.broadcast %291 : vector<8x1xf32> to vector<8x8xf32>
    %293 = arith.mulf %288, %292 : vector<8x8xf32>
    %cst_110 = arith.constant dense<0.000000e+00> : vector<8x8xf32>
    %294 = tpu.matmul %293, %280, %cst_110 {dimension_numbers = #tpu.dot_dimension_numbers<[1], [0], [0], [1], [0, 0, 1, 1], [], []>} : vector<8x8xf32>, vector<8x8xf32>, vector<8x8xf32> -> vector<8x8xf32>
    %295 = vector.extract_strided_slice %274 {offsets = [0, 8], sizes = [8, 8], strides = [1, 1]} : vector<16x32xf32> to vector<8x8xf32>
    %296 = vector.extract_strided_slice %275 {offsets = [0, 8], sizes = [8, 8], strides = [1, 1]} : vector<16x32xf32> to vector<8x8xf32>
    %297 = vector.extract_strided_slice %276 {offsets = [0, 8], sizes = [8, 8], strides = [1, 1]} : vector<16x32xf32> to vector<8x8xf32>
    "tpu.trace_start"() <{level = 10 : i32, message = "qd,kd->qk"}> : () -> ()
    %cst_111 = arith.constant dense<0.000000e+00> : vector<8x8xf32>
    %298 = tpu.matmul %295, %296, %cst_111 {dimension_numbers = #tpu.dot_dimension_numbers<[1], [1], [0], [0], [0, 0, 1, 0], [], []>} : vector<8x8xf32>, vector<8x8xf32>, vector<8x8xf32> -> vector<8x8xf32>
    "tpu.trace_stop"() : () -> ()
    %299 = vector.broadcast %277 : vector<1x8xf32> to vector<8x8xf32>
    %300 = arith.addf %298, %299 : vector<8x8xf32>
    %cst_112 = arith.constant dense<0xFF800000> : vector<8xf32>
    %301 = vector.multi_reduction <maximumf>, %300, %cst_112 [1] : vector<8x8xf32> to vector<8xf32>
    %302 = vector.shape_cast %301 : vector<8xf32> to vector<8x1xf32>
    %303 = vector.broadcast %302 : vector<8x1xf32> to vector<8x8xf32>
    %304 = arith.subf %300, %303 : vector<8x8xf32>
    %305 = math.exp %304 : vector<8x8xf32>
    %cst_113 = arith.constant dense<0.000000e+00> : vector<8xf32>
    %306 = vector.multi_reduction <add>, %305, %cst_113 [1] : vector<8x8xf32> to vector<8xf32>
    %307 = vector.shape_cast %306 : vector<8xf32> to vector<8x1xf32>
    %308 = tpu.reciprocal %307 {approx = true} : vector<8x1xf32> -> vector<8x1xf32>
    %309 = vector.broadcast %308 : vector<8x1xf32> to vector<8x8xf32>
    %310 = arith.mulf %305, %309 : vector<8x8xf32>
    %cst_114 = arith.constant dense<0.000000e+00> : vector<8x8xf32>
    %311 = tpu.matmul %310, %297, %cst_114 {dimension_numbers = #tpu.dot_dimension_numbers<[1], [0], [0], [1], [0, 0, 1, 1], [], []>} : vector<8x8xf32>, vector<8x8xf32>, vector<8x8xf32> -> vector<8x8xf32>
    %312 = vector.extract_strided_slice %274 {offsets = [0, 16], sizes = [8, 8], strides = [1, 1]} : vector<16x32xf32> to vector<8x8xf32>
    %313 = vector.extract_strided_slice %275 {offsets = [0, 16], sizes = [8, 8], strides = [1, 1]} : vector<16x32xf32> to vector<8x8xf32>
    %314 = vector.extract_strided_slice %276 {offsets = [0, 16], sizes = [8, 8], strides = [1, 1]} : vector<16x32xf32> to vector<8x8xf32>
    "tpu.trace_start"() <{level = 10 : i32, message = "qd,kd->qk"}> : () -> ()
    %cst_115 = arith.constant dense<0.000000e+00> : vector<8x8xf32>
    %315 = tpu.matmul %312, %313, %cst_115 {dimension_numbers = #tpu.dot_dimension_numbers<[1], [1], [0], [0], [0, 0, 1, 0], [], []>} : vector<8x8xf32>, vector<8x8xf32>, vector<8x8xf32> -> vector<8x8xf32>
    "tpu.trace_stop"() : () -> ()
    %316 = vector.broadcast %277 : vector<1x8xf32> to vector<8x8xf32>
    %317 = arith.addf %315, %316 : vector<8x8xf32>
    %cst_116 = arith.constant dense<0xFF800000> : vector<8xf32>
    %318 = vector.multi_reduction <maximumf>, %317, %cst_116 [1] : vector<8x8xf32> to vector<8xf32>
    %319 = vector.shape_cast %318 : vector<8xf32> to vector<8x1xf32>
    %320 = vector.broadcast %319 : vector<8x1xf32> to vector<8x8xf32>
    %321 = arith.subf %317, %320 : vector<8x8xf32>
    %322 = math.exp %321 : vector<8x8xf32>
    %cst_117 = arith.constant dense<0.000000e+00> : vector<8xf32>
    %323 = vector.multi_reduction <add>, %322, %cst_117 [1] : vector<8x8xf32> to vector<8xf32>
    %324 = vector.shape_cast %323 : vector<8xf32> to vector<8x1xf32>
    %325 = tpu.reciprocal %324 {approx = true} : vector<8x1xf32> -> vector<8x1xf32>
    %326 = vector.broadcast %325 : vector<8x1xf32> to vector<8x8xf32>
    %327 = arith.mulf %322, %326 : vector<8x8xf32>
    %cst_118 = arith.constant dense<0.000000e+00> : vector<8x8xf32>
    %328 = tpu.matmul %327, %314, %cst_118 {dimension_numbers = #tpu.dot_dimension_numbers<[1], [0], [0], [1], [0, 0, 1, 1], [], []>} : vector<8x8xf32>, vector<8x8xf32>, vector<8x8xf32> -> vector<8x8xf32>
    %329 = vector.extract_strided_slice %274 {offsets = [0, 24], sizes = [8, 8], strides = [1, 1]} : vector<16x32xf32> to vector<8x8xf32>
    %330 = vector.extract_strided_slice %275 {offsets = [0, 24], sizes = [8, 8], strides = [1, 1]} : vector<16x32xf32> to vector<8x8xf32>
    %331 = vector.extract_strided_slice %276 {offsets = [0, 24], sizes = [8, 8], strides = [1, 1]} : vector<16x32xf32> to vector<8x8xf32>
    "tpu.trace_start"() <{level = 10 : i32, message = "qd,kd->qk"}> : () -> ()
    %cst_119 = arith.constant dense<0.000000e+00> : vector<8x8xf32>
    %332 = tpu.matmul %329, %330, %cst_119 {dimension_numbers = #tpu.dot_dimension_numbers<[1], [1], [0], [0], [0, 0, 1, 0], [], []>} : vector<8x8xf32>, vector<8x8xf32>, vector<8x8xf32> -> vector<8x8xf32>
    "tpu.trace_stop"() : () -> ()
    %333 = vector.broadcast %277 : vector<1x8xf32> to vector<8x8xf32>
    %334 = arith.addf %332, %333 : vector<8x8xf32>
    %cst_120 = arith.constant dense<0xFF800000> : vector<8xf32>
    %335 = vector.multi_reduction <maximumf>, %334, %cst_120 [1] : vector<8x8xf32> to vector<8xf32>
    %336 = vector.shape_cast %335 : vector<8xf32> to vector<8x1xf32>
    %337 = vector.broadcast %336 : vector<8x1xf32> to vector<8x8xf32>
    %338 = arith.subf %334, %337 : vector<8x8xf32>
    %339 = math.exp %338 : vector<8x8xf32>
    %cst_121 = arith.constant dense<0.000000e+00> : vector<8xf32>
    %340 = vector.multi_reduction <add>, %339, %cst_121 [1] : vector<8x8xf32> to vector<8xf32>
    %341 = vector.shape_cast %340 : vector<8xf32> to vector<8x1xf32>
    %342 = tpu.reciprocal %341 {approx = true} : vector<8x1xf32> -> vector<8x1xf32>
    %343 = vector.broadcast %342 : vector<8x1xf32> to vector<8x8xf32>
    %344 = arith.mulf %339, %343 : vector<8x8xf32>
    %cst_122 = arith.constant dense<0.000000e+00> : vector<8x8xf32>
    %345 = tpu.matmul %344, %331, %cst_122 {dimension_numbers = #tpu.dot_dimension_numbers<[1], [0], [0], [1], [0, 0, 1, 1], [], []>} : vector<8x8xf32>, vector<8x8xf32>, vector<8x8xf32> -> vector<8x8xf32>
    %346 = tpu.concatenate %294, %311, %328, %345 in 1 : vector<8x8xf32>, vector<8x8xf32>, vector<8x8xf32>, vector<8x8xf32> -> vector<8x32xf32>
    %347 = vector.extract_strided_slice %27 {offsets = [1, 0], sizes = [1, 8], strides = [1, 1]} : vector<2x8xf32> to vector<1x8xf32>
    %348 = vector.extract_strided_slice %274 {offsets = [8, 0], sizes = [8, 8], strides = [1, 1]} : vector<16x32xf32> to vector<8x8xf32>
    %349 = vector.extract_strided_slice %275 {offsets = [8, 0], sizes = [8, 8], strides = [1, 1]} : vector<16x32xf32> to vector<8x8xf32>
    %350 = vector.extract_strided_slice %276 {offsets = [8, 0], sizes = [8, 8], strides = [1, 1]} : vector<16x32xf32> to vector<8x8xf32>
    "tpu.trace_start"() <{level = 10 : i32, message = "qd,kd->qk"}> : () -> ()
    %cst_123 = arith.constant dense<0.000000e+00> : vector<8x8xf32>
    %351 = tpu.matmul %348, %349, %cst_123 {dimension_numbers = #tpu.dot_dimension_numbers<[1], [1], [0], [0], [0, 0, 1, 0], [], []>} : vector<8x8xf32>, vector<8x8xf32>, vector<8x8xf32> -> vector<8x8xf32>
    "tpu.trace_stop"() : () -> ()
    %352 = vector.broadcast %347 : vector<1x8xf32> to vector<8x8xf32>
    %353 = arith.addf %351, %352 : vector<8x8xf32>
    %cst_124 = arith.constant dense<0xFF800000> : vector<8xf32>
    %354 = vector.multi_reduction <maximumf>, %353, %cst_124 [1] : vector<8x8xf32> to vector<8xf32>
    %355 = vector.shape_cast %354 : vector<8xf32> to vector<8x1xf32>
    %356 = vector.broadcast %355 : vector<8x1xf32> to vector<8x8xf32>
    %357 = arith.subf %353, %356 : vector<8x8xf32>
    %358 = math.exp %357 : vector<8x8xf32>
    %cst_125 = arith.constant dense<0.000000e+00> : vector<8xf32>
    %359 = vector.multi_reduction <add>, %358, %cst_125 [1] : vector<8x8xf32> to vector<8xf32>
    %360 = vector.shape_cast %359 : vector<8xf32> to vector<8x1xf32>
    %361 = tpu.reciprocal %360 {approx = true} : vector<8x1xf32> -> vector<8x1xf32>
    %362 = vector.broadcast %361 : vector<8x1xf32> to vector<8x8xf32>
    %363 = arith.mulf %358, %362 : vector<8x8xf32>
    %cst_126 = arith.constant dense<0.000000e+00> : vector<8x8xf32>
    %364 = tpu.matmul %363, %350, %cst_126 {dimension_numbers = #tpu.dot_dimension_numbers<[1], [0], [0], [1], [0, 0, 1, 1], [], []>} : vector<8x8xf32>, vector<8x8xf32>, vector<8x8xf32> -> vector<8x8xf32>
    %365 = vector.extract_strided_slice %274 {offsets = [8, 8], sizes = [8, 8], strides = [1, 1]} : vector<16x32xf32> to vector<8x8xf32>
    %366 = vector.extract_strided_slice %275 {offsets = [8, 8], sizes = [8, 8], strides = [1, 1]} : vector<16x32xf32> to vector<8x8xf32>
    %367 = vector.extract_strided_slice %276 {offsets = [8, 8], sizes = [8, 8], strides = [1, 1]} : vector<16x32xf32> to vector<8x8xf32>
    "tpu.trace_start"() <{level = 10 : i32, message = "qd,kd->qk"}> : () -> ()
    %cst_127 = arith.constant dense<0.000000e+00> : vector<8x8xf32>
    %368 = tpu.matmul %365, %366, %cst_127 {dimension_numbers = #tpu.dot_dimension_numbers<[1], [1], [0], [0], [0, 0, 1, 0], [], []>} : vector<8x8xf32>, vector<8x8xf32>, vector<8x8xf32> -> vector<8x8xf32>
    "tpu.trace_stop"() : () -> ()
    %369 = vector.broadcast %347 : vector<1x8xf32> to vector<8x8xf32>
    %370 = arith.addf %368, %369 : vector<8x8xf32>
    %cst_128 = arith.constant dense<0xFF800000> : vector<8xf32>
    %371 = vector.multi_reduction <maximumf>, %370, %cst_128 [1] : vector<8x8xf32> to vector<8xf32>
    %372 = vector.shape_cast %371 : vector<8xf32> to vector<8x1xf32>
    %373 = vector.broadcast %372 : vector<8x1xf32> to vector<8x8xf32>
    %374 = arith.subf %370, %373 : vector<8x8xf32>
    %375 = math.exp %374 : vector<8x8xf32>
    %cst_129 = arith.constant dense<0.000000e+00> : vector<8xf32>
    %376 = vector.multi_reduction <add>, %375, %cst_129 [1] : vector<8x8xf32> to vector<8xf32>
    %377 = vector.shape_cast %376 : vector<8xf32> to vector<8x1xf32>
    %378 = tpu.reciprocal %377 {approx = true} : vector<8x1xf32> -> vector<8x1xf32>
    %379 = vector.broadcast %378 : vector<8x1xf32> to vector<8x8xf32>
    %380 = arith.mulf %375, %379 : vector<8x8xf32>
    %cst_130 = arith.constant dense<0.000000e+00> : vector<8x8xf32>
    %381 = tpu.matmul %380, %367, %cst_130 {dimension_numbers = #tpu.dot_dimension_numbers<[1], [0], [0], [1], [0, 0, 1, 1], [], []>} : vector<8x8xf32>, vector<8x8xf32>, vector<8x8xf32> -> vector<8x8xf32>
    %382 = vector.extract_strided_slice %274 {offsets = [8, 16], sizes = [8, 8], strides = [1, 1]} : vector<16x32xf32> to vector<8x8xf32>
    %383 = vector.extract_strided_slice %275 {offsets = [8, 16], sizes = [8, 8], strides = [1, 1]} : vector<16x32xf32> to vector<8x8xf32>
    %384 = vector.extract_strided_slice %276 {offsets = [8, 16], sizes = [8, 8], strides = [1, 1]} : vector<16x32xf32> to vector<8x8xf32>
    "tpu.trace_start"() <{level = 10 : i32, message = "qd,kd->qk"}> : () -> ()
    %cst_131 = arith.constant dense<0.000000e+00> : vector<8x8xf32>
    %385 = tpu.matmul %382, %383, %cst_131 {dimension_numbers = #tpu.dot_dimension_numbers<[1], [1], [0], [0], [0, 0, 1, 0], [], []>} : vector<8x8xf32>, vector<8x8xf32>, vector<8x8xf32> -> vector<8x8xf32>
    "tpu.trace_stop"() : () -> ()
    %386 = vector.broadcast %347 : vector<1x8xf32> to vector<8x8xf32>
    %387 = arith.addf %385, %386 : vector<8x8xf32>
    %cst_132 = arith.constant dense<0xFF800000> : vector<8xf32>
    %388 = vector.multi_reduction <maximumf>, %387, %cst_132 [1] : vector<8x8xf32> to vector<8xf32>
    %389 = vector.shape_cast %388 : vector<8xf32> to vector<8x1xf32>
    %390 = vector.broadcast %389 : vector<8x1xf32> to vector<8x8xf32>
    %391 = arith.subf %387, %390 : vector<8x8xf32>
    %392 = math.exp %391 : vector<8x8xf32>
    %cst_133 = arith.constant dense<0.000000e+00> : vector<8xf32>
    %393 = vector.multi_reduction <add>, %392, %cst_133 [1] : vector<8x8xf32> to vector<8xf32>
    %394 = vector.shape_cast %393 : vector<8xf32> to vector<8x1xf32>
    %395 = tpu.reciprocal %394 {approx = true} : vector<8x1xf32> -> vector<8x1xf32>
    %396 = vector.broadcast %395 : vector<8x1xf32> to vector<8x8xf32>
    %397 = arith.mulf %392, %396 : vector<8x8xf32>
    %cst_134 = arith.constant dense<0.000000e+00> : vector<8x8xf32>
    %398 = tpu.matmul %397, %384, %cst_134 {dimension_numbers = #tpu.dot_dimension_numbers<[1], [0], [0], [1], [0, 0, 1, 1], [], []>} : vector<8x8xf32>, vector<8x8xf32>, vector<8x8xf32> -> vector<8x8xf32>
    %399 = vector.extract_strided_slice %274 {offsets = [8, 24], sizes = [8, 8], strides = [1, 1]} : vector<16x32xf32> to vector<8x8xf32>
    %400 = vector.extract_strided_slice %275 {offsets = [8, 24], sizes = [8, 8], strides = [1, 1]} : vector<16x32xf32> to vector<8x8xf32>
    %401 = vector.extract_strided_slice %276 {offsets = [8, 24], sizes = [8, 8], strides = [1, 1]} : vector<16x32xf32> to vector<8x8xf32>
    "tpu.trace_start"() <{level = 10 : i32, message = "qd,kd->qk"}> : () -> ()
    %cst_135 = arith.constant dense<0.000000e+00> : vector<8x8xf32>
    %402 = tpu.matmul %399, %400, %cst_135 {dimension_numbers = #tpu.dot_dimension_numbers<[1], [1], [0], [0], [0, 0, 1, 0], [], []>} : vector<8x8xf32>, vector<8x8xf32>, vector<8x8xf32> -> vector<8x8xf32>
    "tpu.trace_stop"() : () -> ()
    %403 = vector.broadcast %347 : vector<1x8xf32> to vector<8x8xf32>
    %404 = arith.addf %402, %403 : vector<8x8xf32>
    %cst_136 = arith.constant dense<0xFF800000> : vector<8xf32>
    %405 = vector.multi_reduction <maximumf>, %404, %cst_136 [1] : vector<8x8xf32> to vector<8xf32>
    %406 = vector.shape_cast %405 : vector<8xf32> to vector<8x1xf32>
    %407 = vector.broadcast %406 : vector<8x1xf32> to vector<8x8xf32>
    %408 = arith.subf %404, %407 : vector<8x8xf32>
    %409 = math.exp %408 : vector<8x8xf32>
    %cst_137 = arith.constant dense<0.000000e+00> : vector<8xf32>
    %410 = vector.multi_reduction <add>, %409, %cst_137 [1] : vector<8x8xf32> to vector<8xf32>
    %411 = vector.shape_cast %410 : vector<8xf32> to vector<8x1xf32>
    %412 = tpu.reciprocal %411 {approx = true} : vector<8x1xf32> -> vector<8x1xf32>
    %413 = vector.broadcast %412 : vector<8x1xf32> to vector<8x8xf32>
    %414 = arith.mulf %409, %413 : vector<8x8xf32>
    %cst_138 = arith.constant dense<0.000000e+00> : vector<8x8xf32>
    %415 = tpu.matmul %414, %401, %cst_138 {dimension_numbers = #tpu.dot_dimension_numbers<[1], [0], [0], [1], [0, 0, 1, 1], [], []>} : vector<8x8xf32>, vector<8x8xf32>, vector<8x8xf32> -> vector<8x8xf32>
    %416 = tpu.concatenate %364, %381, %398, %415 in 1 : vector<8x8xf32>, vector<8x8xf32>, vector<8x8xf32>, vector<8x8xf32> -> vector<8x32xf32>
    %417 = tpu.concatenate %346, %416 in 0 : vector<8x32xf32>, vector<8x32xf32> -> vector<16x32xf32>
    %c1_139 = arith.constant 1 : index
    %c0_140 = arith.constant 0 : index
    %c0_141 = arith.constant 0 : index
    %418 = vector.load %arg6[%c1_139, %c0_140, %c0_141] : memref<2x32x32xf32, #tpu.memory_space<vmem>>, vector<1x32x32xf32>
    %419 = vector.shape_cast %418 : vector<1x32x32xf32> to vector<32x32xf32>
    %cst_142 = arith.constant dense<0.000000e+00> : vector<16x32xf32>
    %420 = tpu.matmul %417, %419, %cst_142 {dimension_numbers = #tpu.dot_dimension_numbers<[1], [0], [0], [1], [0, 0, 1, 1], [], []>} : vector<16x32xf32>, vector<32x32xf32>, vector<16x32xf32> -> vector<16x32xf32>
    %c1_143 = arith.constant 1 : index
    %c0_144 = arith.constant 0 : index
    %c0_145 = arith.constant 0 : index
    %421 = vector.load %arg7[%c1_143, %c0_144, %c0_145] : memref<2x1x32xf32, #tpu.memory_space<vmem>>, vector<1x1x32xf32>
    %422 = vector.shape_cast %421 : vector<1x1x32xf32> to vector<1x32xf32>
    %423 = vector.broadcast %422 : vector<1x32xf32> to vector<16x32xf32>
    %424 = arith.addf %420, %423 : vector<16x32xf32>
    %425 = arith.addf %424, %264 : vector<16x32xf32>
    %c1_146 = arith.constant 1 : index
    %c0_147 = arith.constant 0 : index
    %c0_148 = arith.constant 0 : index
    %426 = vector.load %arg8[%c1_146, %c0_147, %c0_148] : memref<2x1x32xf32, #tpu.memory_space<vmem>>, vector<1x1x32xf32>
    %427 = vector.shape_cast %426 : vector<1x1x32xf32> to vector<1x32xf32>
    %c1_149 = arith.constant 1 : index
    %c0_150 = arith.constant 0 : index
    %c0_151 = arith.constant 0 : index
    %428 = vector.load %arg9[%c1_149, %c0_150, %c0_151] : memref<2x1x32xf32, #tpu.memory_space<vmem>>, vector<1x1x32xf32>
    %429 = vector.shape_cast %428 : vector<1x1x32xf32> to vector<1x32xf32>
    %cst_152 = arith.constant dense<0.000000e+00> : vector<16xf32>
    %430 = vector.multi_reduction <add>, %425, %cst_152 [1] : vector<16x32xf32> to vector<16xf32>
    %431 = vector.shape_cast %430 : vector<16xf32> to vector<16x1xf32>
    %cst_153 = arith.constant 3.200000e+01 : f32
    %432 = vector.broadcast %cst_153 : f32 to vector<16x1xf32>
    %433 = arith.divf %431, %432 : vector<16x1xf32>
    %434 = vector.broadcast %433 : vector<16x1xf32> to vector<16x32xf32>
    %435 = arith.subf %425, %434 : vector<16x32xf32>
    %436 = arith.mulf %435, %435 : vector<16x32xf32>
    %cst_154 = arith.constant dense<0.000000e+00> : vector<16xf32>
    %437 = vector.multi_reduction <add>, %436, %cst_154 [1] : vector<16x32xf32> to vector<16xf32>
    %438 = vector.shape_cast %437 : vector<16xf32> to vector<16x1xf32>
    %cst_155 = arith.constant 3.200000e+01 : f32
    %439 = vector.broadcast %cst_155 : f32 to vector<16x1xf32>
    %440 = arith.divf %438, %439 : vector<16x1xf32>
    %cst_156 = arith.constant 9.99999996E-13 : f32
    %441 = vector.broadcast %cst_156 : f32 to vector<16x1xf32>
    %442 = arith.addf %440, %441 : vector<16x1xf32>
    %443 = math.rsqrt %442 : vector<16x1xf32>
    %444 = vector.broadcast %443 : vector<16x1xf32> to vector<16x32xf32>
    %445 = arith.mulf %435, %444 : vector<16x32xf32>
    %446 = vector.broadcast %427 : vector<1x32xf32> to vector<16x32xf32>
    %447 = arith.mulf %445, %446 : vector<16x32xf32>
    %448 = vector.broadcast %429 : vector<1x32xf32> to vector<16x32xf32>
    %449 = arith.addf %447, %448 : vector<16x32xf32>
    %c1_157 = arith.constant 1 : index
    %c0_158 = arith.constant 0 : index
    %c0_159 = arith.constant 0 : index
    %450 = vector.load %arg10[%c1_157, %c0_158, %c0_159] : memref<2x32x64xf32, #tpu.memory_space<vmem>>, vector<1x32x64xf32>
    %451 = vector.shape_cast %450 : vector<1x32x64xf32> to vector<32x64xf32>
    %cst_160 = arith.constant dense<0.000000e+00> : vector<16x64xf32>
    %452 = tpu.matmul %449, %451, %cst_160 {dimension_numbers = #tpu.dot_dimension_numbers<[1], [0], [0], [1], [0, 0, 1, 1], [], []>} : vector<16x32xf32>, vector<32x64xf32>, vector<16x64xf32> -> vector<16x64xf32>
    %c1_161 = arith.constant 1 : index
    %c0_162 = arith.constant 0 : index
    %c0_163 = arith.constant 0 : index
    %453 = vector.load %arg11[%c1_161, %c0_162, %c0_163] : memref<2x1x64xf32, #tpu.memory_space<vmem>>, vector<1x1x64xf32>
    %454 = vector.shape_cast %453 : vector<1x1x64xf32> to vector<1x64xf32>
    %455 = vector.broadcast %454 : vector<1x64xf32> to vector<16x64xf32>
    %456 = arith.addf %452, %455 : vector<16x64xf32>
    %cst_164 = arith.constant 5.000000e-01 : f32
    %457 = vector.broadcast %cst_164 : f32 to vector<16x64xf32>
    %458 = arith.mulf %457, %456 : vector<16x64xf32>
    %cst_165 = arith.constant 4.471500e-02 : f32
    %459 = vector.broadcast %cst_165 : f32 to vector<16x64xf32>
    %460 = arith.mulf %459, %456 : vector<16x64xf32>
    %461 = arith.mulf %460, %456 : vector<16x64xf32>
    %462 = arith.mulf %461, %456 : vector<16x64xf32>
    %463 = arith.addf %456, %462 : vector<16x64xf32>
    %cst_166 = arith.constant 0.797884583 : f32
    %464 = vector.broadcast %cst_166 : f32 to vector<16x64xf32>
    %465 = arith.mulf %464, %463 : vector<16x64xf32>
    %466 = math.tanh %465 : vector<16x64xf32>
    %cst_167 = arith.constant 1.000000e+00 : f32
    %467 = vector.broadcast %cst_167 : f32 to vector<16x64xf32>
    %468 = arith.addf %467, %466 : vector<16x64xf32>
    %469 = arith.mulf %458, %468 : vector<16x64xf32>
    %c1_168 = arith.constant 1 : index
    %c0_169 = arith.constant 0 : index
    %c0_170 = arith.constant 0 : index
    %470 = vector.load %arg12[%c1_168, %c0_169, %c0_170] : memref<2x64x32xf32, #tpu.memory_space<vmem>>, vector<1x64x32xf32>
    %471 = vector.shape_cast %470 : vector<1x64x32xf32> to vector<64x32xf32>
    %cst_171 = arith.constant dense<0.000000e+00> : vector<16x32xf32>
    %472 = tpu.matmul %469, %471, %cst_171 {dimension_numbers = #tpu.dot_dimension_numbers<[1], [0], [0], [1], [0, 0, 1, 1], [], []>} : vector<16x64xf32>, vector<64x32xf32>, vector<16x32xf32> -> vector<16x32xf32>
    %c1_172 = arith.constant 1 : index
    %c0_173 = arith.constant 0 : index
    %c0_174 = arith.constant 0 : index
    %473 = vector.load %arg13[%c1_172, %c0_173, %c0_174] : memref<2x1x32xf32, #tpu.memory_space<vmem>>, vector<1x1x32xf32>
    %474 = vector.shape_cast %473 : vector<1x1x32xf32> to vector<1x32xf32>
    %475 = vector.broadcast %474 : vector<1x32xf32> to vector<16x32xf32>
    %476 = arith.addf %472, %475 : vector<16x32xf32>
    %477 = arith.addf %476, %449 : vector<16x32xf32>
    %c1_175 = arith.constant 1 : index
    %c0_176 = arith.constant 0 : index
    %c0_177 = arith.constant 0 : index
    %478 = vector.load %arg14[%c1_175, %c0_176, %c0_177] : memref<2x1x32xf32, #tpu.memory_space<vmem>>, vector<1x1x32xf32>
    %479 = vector.shape_cast %478 : vector<1x1x32xf32> to vector<1x32xf32>
    %c1_178 = arith.constant 1 : index
    %c0_179 = arith.constant 0 : index
    %c0_180 = arith.constant 0 : index
    %480 = vector.load %arg15[%c1_178, %c0_179, %c0_180] : memref<2x1x32xf32, #tpu.memory_space<vmem>>, vector<1x1x32xf32>
    %481 = vector.shape_cast %480 : vector<1x1x32xf32> to vector<1x32xf32>
    %cst_181 = arith.constant dense<0.000000e+00> : vector<16xf32>
    %482 = vector.multi_reduction <add>, %477, %cst_181 [1] : vector<16x32xf32> to vector<16xf32>
    %483 = vector.shape_cast %482 : vector<16xf32> to vector<16x1xf32>
    %cst_182 = arith.constant 3.200000e+01 : f32
    %484 = vector.broadcast %cst_182 : f32 to vector<16x1xf32>
    %485 = arith.divf %483, %484 : vector<16x1xf32>
    %486 = vector.broadcast %485 : vector<16x1xf32> to vector<16x32xf32>
    %487 = arith.subf %477, %486 : vector<16x32xf32>
    %488 = arith.mulf %487, %487 : vector<16x32xf32>
    %cst_183 = arith.constant dense<0.000000e+00> : vector<16xf32>
    %489 = vector.multi_reduction <add>, %488, %cst_183 [1] : vector<16x32xf32> to vector<16xf32>
    %490 = vector.shape_cast %489 : vector<16xf32> to vector<16x1xf32>
    %cst_184 = arith.constant 3.200000e+01 : f32
    %491 = vector.broadcast %cst_184 : f32 to vector<16x1xf32>
    %492 = arith.divf %490, %491 : vector<16x1xf32>
    %cst_185 = arith.constant 9.99999996E-13 : f32
    %493 = vector.broadcast %cst_185 : f32 to vector<16x1xf32>
    %494 = arith.addf %492, %493 : vector<16x1xf32>
    %495 = math.rsqrt %494 : vector<16x1xf32>
    %496 = vector.broadcast %495 : vector<16x1xf32> to vector<16x32xf32>
    %497 = arith.mulf %487, %496 : vector<16x32xf32>
    %498 = vector.broadcast %479 : vector<1x32xf32> to vector<16x32xf32>
    %499 = arith.mulf %497, %498 : vector<16x32xf32>
    %500 = vector.broadcast %481 : vector<1x32xf32> to vector<16x32xf32>
    %501 = arith.addf %499, %500 : vector<16x32xf32>
    %c0_186 = arith.constant 0 : index
    %c0_187 = arith.constant 0 : index
    %502 = vector.load %arg16[%c0_186, %c0_187] : memref<32x128xf32, #tpu.memory_space<vmem>>, vector<32x128xf32>
    %cst_188 = arith.constant dense<0.000000e+00> : vector<16x128xf32>
    %503 = tpu.matmul %501, %502, %cst_188 {dimension_numbers = #tpu.dot_dimension_numbers<[1], [0], [0], [1], [0, 0, 1, 1], [], []>} : vector<16x32xf32>, vector<32x128xf32>, vector<16x128xf32> -> vector<16x128xf32>
    %c0_189 = arith.constant 0 : index
    %c0_190 = arith.constant 0 : index
    %504 = vector.load %arg17[%c0_189, %c0_190] : memref<1x128xf32, #tpu.memory_space<vmem>>, vector<1x128xf32>
    %505 = vector.broadcast %504 : vector<1x128xf32> to vector<16x128xf32>
    %506 = arith.addf %503, %505 : vector<16x128xf32>
    %c0_191 = arith.constant 0 : index
    %c0_192 = arith.constant 0 : index
    %507 = vector.load %arg18[%c0_191, %c0_192] : memref<16x1xi32, #tpu.memory_space<vmem>>, vector<16x1xi32>
    %cst_193 = arith.constant dense<0xFF800000> : vector<16xf32>
    %508 = vector.multi_reduction <maximumf>, %506, %cst_193 [1] : vector<16x128xf32> to vector<16xf32>
    %509 = vector.shape_cast %508 : vector<16xf32> to vector<16x1xf32>
    %510 = vector.broadcast %509 : vector<16x1xf32> to vector<16x128xf32>
    %511 = arith.subf %506, %510 : vector<16x128xf32>
    %512 = math.exp %511 : vector<16x128xf32>
    %cst_194 = arith.constant dense<0.000000e+00> : vector<16xf32>
    %513 = vector.multi_reduction <add>, %512, %cst_194 [1] : vector<16x128xf32> to vector<16xf32>
    %514 = vector.shape_cast %513 : vector<16xf32> to vector<16x1xf32>
    %515 = math.log %514 : vector<16x1xf32>
    %516 = tpu.iota {dimensions = array<i32: 1>} : vector<16x128xi32>
    %517 = vector.broadcast %507 : vector<16x1xi32> to vector<16x128xi32>
    %518 = arith.cmpi eq, %516, %517 : vector<16x128xi32>
    %cst_195 = arith.constant 0.000000e+00 : f32
    %519 = vector.broadcast %cst_195 : f32 to vector<16x128xf32>
    %520 = arith.select %518, %511, %519 : vector<16x128xi1>, vector<16x128xf32>
    %cst_196 = arith.constant dense<0.000000e+00> : vector<16xf32>
    %521 = vector.multi_reduction <add>, %520, %cst_196 [1] : vector<16x128xf32> to vector<16xf32>
    %522 = vector.shape_cast %521 : vector<16xf32> to vector<16x1xf32>
    %c-1_i32 = arith.constant -1 : i32
    %523 = vector.broadcast %c-1_i32 : i32 to vector<16x1xi32>
    %524 = arith.cmpi ne, %507, %523 : vector<16x1xi32>
    %525 = arith.extui %524 : vector<16x1xi1> to vector<16x1xi32>
    %526 = arith.sitofp %525 : vector<16x1xi32> to vector<16x1xf32>
    %527 = arith.subf %515, %522 : vector<16x1xf32>
    %528 = arith.mulf %527, %526 : vector<16x1xf32>
    %529 = vector.shape_cast %526 : vector<16x1xf32> to vector<1x16x1xf32>
    %cst_197 = arith.constant dense<0.000000e+00> : vector<1xf32>
    %530 = vector.multi_reduction <add>, %529, %cst_197 [1, 2] : vector<1x16x1xf32> to vector<1xf32>
    %531 = vector.shape_cast %530 : vector<1xf32> to vector<1x1x1xf32>
    %532 = vector.extract %531[0, 0, 0] : f32 from vector<1x1x1xf32>
    %cst_198 = arith.constant 1.000000e+00 : f32
    %533 = arith.maximumf %532, %cst_198 : f32
    %534 = vector.shape_cast %528 : vector<16x1xf32> to vector<1x16x1xf32>
    %cst_199 = arith.constant dense<0.000000e+00> : vector<1xf32>
    %535 = vector.multi_reduction <add>, %534, %cst_199 [1, 2] : vector<1x16x1xf32> to vector<1xf32>
    %536 = vector.shape_cast %535 : vector<1xf32> to vector<1x1x1xf32>
    %537 = vector.extract %536[0, 0, 0] : f32 from vector<1x1x1xf32>
    %538 = arith.divf %537, %533 : f32
    %c0_200 = arith.constant 0 : index
    %c0_201 = arith.constant 0 : index
    %539 = memref.load %arg19[%c0_200, %c0_201] : memref<1x1xf32, #tpu.memory_space<smem>>
    memref.store %538, %arg19[%c0_200, %c0_201] : memref<1x1xf32, #tpu.memory_space<smem>>
    return
  }
}

</mosaic_0001>

<llo_original>
// kernel: bert_sft_forward.1
$region0: #{bert_sft_forward.1}
  #allocation0 [shape = 'u32[]', space=smem, size = 0x4, offset = 0x4, fixed_abs, tag = 'smem constant byte address 0x4 - core index']
  #allocation1 [shape = 'u32[144,128]{1,0:T(1,128)}', space=vmem, size = 0x12000, scoped, tag = 'internal scratch']
  %s0 = inlined_call_operand.vmem [shape: f32[16,32], index: 0, kind: input, shape index: {}]
  %s1 = inlined_call_operand.vmem [shape: f32[2,8], index: 1, kind: input, shape index: {}]
  %s2 = inlined_call_operand.vmem [shape: f32[1,32], index: 2, kind: input, shape index: {}]
  %s3 = inlined_call_operand.vmem [shape: f32[1,32], index: 3, kind: input, shape index: {}]
  %s4 = inlined_call_operand.vmem [shape: f32[2,32,96], index: 4, kind: input, shape index: {}]
  %s5 = inlined_call_operand.vmem [shape: f32[2,1,96], index: 5, kind: input, shape index: {}]
  %s6 = inlined_call_operand.vmem [shape: f32[2,32,32], index: 6, kind: input, shape index: {}]
  %s7 = inlined_call_operand.vmem [shape: f32[2,1,32], index: 7, kind: input, shape index: {}]
  %s8 = inlined_call_operand.vmem [shape: f32[2,1,32], index: 8, kind: input, shape index: {}]
  %s9 = inlined_call_operand.vmem [shape: f32[2,1,32], index: 9, kind: input, shape index: {}]
  %s10 = inlined_call_operand.vmem [shape: f32[2,32,64], index: 10, kind: input, shape index: {}]
  %s11 = inlined_call_operand.vmem [shape: f32[2,1,64], index: 11, kind: input, shape index: {}]
  %s12 = inlined_call_operand.vmem [shape: f32[2,64,32], index: 12, kind: input, shape index: {}]
  %s13 = inlined_call_operand.vmem [shape: f32[2,1,32], index: 13, kind: input, shape index: {}]
  %s14 = inlined_call_operand.vmem [shape: f32[2,1,32], index: 14, kind: input, shape index: {}]
  %s15 = inlined_call_operand.vmem [shape: f32[2,1,32], index: 15, kind: input, shape index: {}]
  %s16 = inlined_call_operand.vmem [shape: f32[32,128], index: 16, kind: input, shape index: {}]
  %s17 = inlined_call_operand.vmem [shape: f32[1,128], index: 17, kind: input, shape index: {}]
  %s18 = inlined_call_operand.vmem [shape: s32[16,1], index: 18, kind: input, shape index: {}]
  %s19 = inlined_call_operand.hbm [shape: f32[1,1], index: 19, kind: output, shape index: {}]
  %s20 = sld [smem:[#allocation0]]
  $region86: #{bert_sft_forward.1} parent=0
    _
  %s22 = ssub.s32 1, %s20
  %s23 = scalar_select 0, %s22, %s20
  $region1: #{bert_sft_forward.1} parent=0
    #allocation2 [shape = 'u8[512]{0}', space=smem, size = 0x200, scoped, tag = 'output window, operand 0, single buffered']
    #allocation3 [shape = 's32[1]{0}', space=sflag, size = 0x4, scoped, tag = 'scoped memory for bert_sft_forward.1']
    %24 = vsyncpa [#allocation3], 0
    // Predicated region
    $region2: #{bert_sft_forward.1} parent=1 // pred_check
      _
    $region3: #{bert_sft_forward.1} parent=1 // pred_check_branch
      %26 = sbr.rel (0) target = $region5
    $region4: #{bert_sft_forward.1} parent=1 // pred_region
      _
    $region5: #{bert_sft_forward.1} parent=1 // pred_fallthru
      _
    // Predicated region
    $region6: #{bert_sft_forward.1} parent=1 // pred_check
      _
    $region7: #{bert_sft_forward.1} parent=1 // pred_check_branch
      %28 = sbr.rel (0) target = $region9
    $region8: #{bert_sft_forward.1} parent=1 // pred_region
      _
    $region9: #{bert_sft_forward.1} parent=1 // pred_fallthru
      _
    // Predicated region
    $region10: #{bert_sft_forward.1} parent=1 // pred_check
      _
    $region11: #{bert_sft_forward.1} parent=1 // pred_check_branch
      %30 = sbr.rel (0) target = $region13
    $region12: #{bert_sft_forward.1} parent=1 // pred_region
      _
    $region13: #{bert_sft_forward.1} parent=1 // pred_fallthru
      _
    // Predicated region
    $region14: #{bert_sft_forward.1} parent=1 // pred_check
      _
    $region15: #{bert_sft_forward.1} parent=1 // pred_check_branch
      %32 = sbr.rel (0) target = $region17
    $region16: #{bert_sft_forward.1} parent=1 // pred_region
      _
    $region17: #{bert_sft_forward.1} parent=1 // pred_fallthru
      _
    // Predicated region
    $region18: #{bert_sft_forward.1} parent=1 // pred_check
      _
    $region19: #{bert_sft_forward.1} parent=1 // pred_check_branch
      %34 = sbr.rel (0) target = $region21
    $region20: #{bert_sft_forward.1} parent=1 // pred_region
      _
    $region21: #{bert_sft_forward.1} parent=1 // pred_fallthru
      _
    // Predicated region
    $region22: #{bert_sft_forward.1} parent=1 // pred_check
      _
    $region23: #{bert_sft_forward.1} parent=1 // pred_check_branch
      %36 = sbr.rel (0) target = $region25
    $region24: #{bert_sft_forward.1} parent=1 // pred_region
      _
    $region25: #{bert_sft_forward.1} parent=1 // pred_fallthru
      _
    // Predicated region
    $region26: #{bert_sft_forward.1} parent=1 // pred_check
      _
    $region27: #{bert_sft_forward.1} parent=1 // pred_check_branch
      %38 = sbr.rel (0) target = $region29
    $region28: #{bert_sft_forward.1} parent=1 // pred_region
      _
    $region29: #{bert_sft_forward.1} parent=1 // pred_fallthru
      _
    // Predicated region
    $region30: #{bert_sft_forward.1} parent=1 // pred_check
      _
    $region31: #{bert_sft_forward.1} parent=1 // pred_check_branch
      %40 = sbr.rel (0) target = $region33
    $region32: #{bert_sft_forward.1} parent=1 // pred_region
      _
    $region33: #{bert_sft_forward.1} parent=1 // pred_fallthru
      _
    // Predicated region
    $region34: #{bert_sft_forward.1} parent=1 // pred_check
      _
    $region35: #{bert_sft_forward.1} parent=1 // pred_check_branch
      %42 = sbr.rel (0) target = $region37
    $region36: #{bert_sft_forward.1} parent=1 // pred_region
      _
    $region37: #{bert_sft_forward.1} parent=1 // pred_fallthru
      _
    // Predicated region
    $region38: #{bert_sft_forward.1} parent=1 // pred_check
      _
    $region39: #{bert_sft_forward.1} parent=1 // pred_check_branch
      %44 = sbr.rel (0) target = $region41
    $region40: #{bert_sft_forward.1} parent=1 // pred_region
      _
    $region41: #{bert_sft_forward.1} parent=1 // pred_fallthru
      _
    // Predicated region
    $region42: #{bert_sft_forward.1} parent=1 // pred_check
      _
    $region43: #{bert_sft_forward.1} parent=1 // pred_check_branch
      %46 = sbr.rel (0) target = $region45
    $region44: #{bert_sft_forward.1} parent=1 // pred_region
      _
    $region45: #{bert_sft_forward.1} parent=1 // pred_fallthru
      _
    // Predicated region
    $region46: #{bert_sft_forward.1} parent=1 // pred_check
      _
    $region47: #{bert_sft_forward.1} parent=1 // pred_check_branch
      %48 = sbr.rel (0) target = $region49
    $region48: #{bert_sft_forward.1} parent=1 // pred_region
      _
    $region49: #{bert_sft_forward.1} parent=1 // pred_fallthru
      _
    // Predicated region
    $region50: #{bert_sft_forward.1} parent=1 // pred_check
      _
    $region51: #{bert_sft_forward.1} parent=1 // pred_check_branch
      %50 = sbr.rel (0) target = $region53
    $region52: #{bert_sft_forward.1} parent=1 // pred_region
      _
    $region53: #{bert_sft_forward.1} parent=1 // pred_fallthru
      _
    // Predicated region
    $region54: #{bert_sft_forward.1} parent=1 // pred_check
      _
    $region55: #{bert_sft_forward.1} parent=1 // pred_check_branch
      %52 = sbr.rel (0) target = $region57
    $region56: #{bert_sft_forward.1} parent=1 // pred_region
      _
    $region57: #{bert_sft_forward.1} parent=1 // pred_fallthru
      _
    // Predicated region
    $region58: #{bert_sft_forward.1} parent=1 // pred_check
      _
    $region59: #{bert_sft_forward.1} parent=1 // pred_check_branch
      %54 = sbr.rel (0) target = $region61
    $region60: #{bert_sft_forward.1} parent=1 // pred_region
      _
    $region61: #{bert_sft_forward.1} parent=1 // pred_fallthru
      _
    // Predicated region
    $region62: #{bert_sft_forward.1} parent=1 // pred_check
      _
    $region63: #{bert_sft_forward.1} parent=1 // pred_check_branch
      %56 = sbr.rel (0) target = $region65
    $region64: #{bert_sft_forward.1} parent=1 // pred_region
      _
    $region65: #{bert_sft_forward.1} parent=1 // pred_fallthru
      _
    // Predicated region
    $region66: #{bert_sft_forward.1} parent=1 // pred_check
      _
    $region67: #{bert_sft_forward.1} parent=1 // pred_check_branch
      %58 = sbr.rel (0) target = $region69
    $region68: #{bert_sft_forward.1} parent=1 // pred_region
      _
    $region69: #{bert_sft_forward.1} parent=1 // pred_fallthru
      _
    // Predicated region
    $region70: #{bert_sft_forward.1} parent=1 // pred_check
      _
    $region71: #{bert_sft_forward.1} parent=1 // pred_check_branch
      %60 = sbr.rel (0) target = $region73
    $region72: #{bert_sft_forward.1} parent=1 // pred_region
      _
    $region73: #{bert_sft_forward.1} parent=1 // pred_fallthru
      _
    // Predicated region
    $region74: #{bert_sft_forward.1} parent=1 // pred_check
      _
    $region75: #{bert_sft_forward.1} parent=1 // pred_check_branch
      %62 = sbr.rel (0) target = $region77
    $region76: #{bert_sft_forward.1} parent=1 // pred_region
      _
    $region77: #{bert_sft_forward.1} parent=1 // pred_fallthru
      _
    %v63 = vld [vmem:[%s0] sm:$0xff]
    %v64 = vld [vmem:[%s0 + $0x8] sm:$0xff]
    %v65 = vld [vmem:[%s2] sm:$0x1]
    %v66 = vld [vmem:[%s3] sm:$0x1]
    %vm67 = vcmask 261120
    %v68 = vsel %vm67, %v63, 0.0
    %69 = vadd.xlane.f32.xlu0 %v68
    %v70 = vpop.xlane.xlu0 %69
    %v71 = vsel %vm67, %v64, 0.0
    %72 = vadd.xlane.f32.xlu0 %v71
    %v73 = vpop.xlane.xlu0 %72
    %v74 = vrcp.pop 32.0
    %v75 = vmul.f32 %v70, %v74
    %v76 = vmul.f32 %v73, %v74
    %v77 = vsub.f32 %v63, %v75
    %v78 = vsub.f32 %v64, %v76
    %v79 = vmul.f32 %v77, %v77
    %v80 = vmul.f32 %v78, %v78
    %v81 = vsel %vm67, %v79, 0.0
    %82 = vadd.xlane.f32.xlu0 %v81
    %v83 = vpop.xlane.xlu0 %82
    %v84 = vsel %vm67, %v80, 0.0
    %85 = vadd.xlane.f32.xlu0 %v84
    %v86 = vpop.xlane.xlu0 %85
    %v87 = vmul.f32 %v83, %v74
    %v88 = vmul.f32 %v86, %v74
    %v89 = vadd.f32 %v87, 1e-12
    %v90 = vadd.f32 %v88, 1e-12
    %v91 = vrsqrt.pop %v89
    %v92 = vrsqrt.pop %v90
    %v93 = vmul.f32 %v77, %v91
    %v94 = vmul.f32 %v78, %v92
    %v96 = vlaneseq
    %v97 = vshrl.u32 %v96, 7
    %v98 = vsub.s32 0, %v97
    %v99 = vrot.slane %v65, %v98
    %v101 = vmul.f32 %v93, %v99
    %v102 = vmul.f32 %v94, %v99
    %v104 = vlaneseq
    %v105 = vshrl.u32 %v104, 7
    %v106 = vsub.s32 0, %v105
    %v107 = vrot.slane %v66, %v106
    %v109 = vadd.f32 %v101, %v107
    %v110 = vadd.f32 %v102, %v107
    %v111 = vld [vmem:[%s1] sm:$0x3]
    %v112 = vsub.f32 1.0, %v111
    %v113 = vmul.f32 %v112, -10000.0
    %v114 = vld [vmem:[%s4] sm:$0xff]
    %v115 = vld [vmem:[%s4 + $0x8] sm:$0xff]
    %v116 = vld [vmem:[%s4 + $0x10] sm:$0xff]
    %v117 = vld [vmem:[%s4 + $0x18] sm:$0xff]
    %v118 = vld [vmem:[%s5] sm:$0x1]
    %v120 = vlaneseq
    %v121 = vshrl.u32 %v120, 7
    %v122 = vsub.s32 0, %v121
    %v123 = vrot.slane %v118, %v122
    %v126 = vsel %vm67, %v109, 0
    %v129 = vsel %vm67, %v110, 0
    %131 = vmatprep.subr.mxu0 0.0
    %132 = vmatpush1.msra.mxu0 0.0
    %133 = vmatprep.subr.mxu0 0.0
    %134 = vmatpush1.msra.mxu0 0.0
    %135 = vmatprep.subr.mxu0 0.0
    %136 = vmatpush1.msra.mxu0 0.0
    %137 = vmatprep.subr.mxu0 0.0
    %138 = vmatpush1.msra.mxu0 0.0
    %139 = vmatprep.subr.mxu0 0.0
    %140 = vmatpush1.msra.mxu0 0.0
    %141 = vmatprep.subr.mxu0 0.0
    %142 = vmatpush1.msra.mxu0 0.0
    %143 = vmatprep.subr.mxu0 0.0
    %144 = vmatpush1.msra.mxu0 0.0
    %145 = vmatprep.subr.mxu0 0.0
    %146 = vmatpush1.msra.mxu0 0.0
    %147 = vmatprep.subr.mxu0 0.0
    %148 = vmatpush1.msra.mxu0 0.0
    %149 = vmatprep.subr.mxu0 0.0
    %150 = vmatpush1.msra.mxu0 0.0
    %151 = vmatprep.subr.mxu0 0.0
    %152 = vmatpush1.msra.mxu0 0.0
    %153 = vmatprep.subr.mxu0 0.0
    %154 = vmatpush1.msra.mxu0 0.0
    %155 = vmatprep.subr.mxu0 0.0
    %156 = vmatpush1.msra.mxu0 %v117
    %157 = vmatprep.subr.mxu0 0.0
    %158 = vmatpush1.msra.mxu0 %v116
    %159 = vmatprep.subr.mxu0 0.0
    %160 = vmatpush1.msra.mxu0 %v115
    %161 = vmatprep.subr.mxu0 0.0
    %162 = vmatpush1.msra.mxu0 %v114
    %163 = vmatprep.subr.mxu0 0.0
    %164 = vmatpush2.msra.mxu0 0.0
    %165 = vmatprep.subr.mxu0 0.0
    %166 = vmatpush2.msra.mxu0 0.0
    %167 = vmatprep.subr.mxu0 0.0
    %168 = vmatpush2.msra.mxu0 0.0
    %169 = vmatprep.subr.mxu0 0.0
    %170 = vmatpush2.msra.mxu0 0.0
    %171 = vmatprep.subr.mxu0 0.0
    %172 = vmatpush2.msra.mxu0 0.0
    %173 = vmatprep.subr.mxu0 0.0
    %174 = vmatpush2.msra.mxu0 0.0
    %175 = vmatprep.subr.mxu0 0.0
    %176 = vmatpush2.msra.mxu0 0.0
    %177 = vmatprep.subr.mxu0 0.0
    %178 = vmatpush2.msra.mxu0 0.0
    %179 = vmatprep.subr.mxu0 0.0
    %180 = vmatpush2.msra.mxu0 0.0
    %181 = vmatprep.subr.mxu0 0.0
    %182 = vmatpush2.msra.mxu0 0.0
    %183 = vmatprep.subr.mxu0 0.0
    %184 = vmatpush2.msra.mxu0 0.0
    %185 = vmatprep.subr.mxu0 0.0
    %186 = vmatpush2.msra.mxu0 0.0
    %187 = vmatprep.subr.mxu0 0.0
    %188 = vmatpush2.msra.mxu0 0.0
    %189 = vmatprep.subr.mxu0 0.0
    %190 = vmatpush2.msra.mxu0 0.0
    %191 = vmatprep.subr.mxu0 0.0
    %192 = vmatpush2.msra.mxu0 0.0
    %193 = vmatprep.subr.mxu0 0.0
    %194 = vmatpush2.msra.mxu0 0.0
    %195 = vmatprep.mubr.f32.mxu0 0.0
    %196 = vmatmul.mubr.f32.gmra.mxu0 %v126
    %v197 = vpop.f32.mrf.mxu0
    %v198 = vadd.f32 %v123, %v197
    %v199 = vpop.f32.mrf.mxu0
    %200 = vmatprep.mubr.f32.mxu0 0.0
    %201 = vmatmul.mubr.f32.gmra.mxu0 %v129
    %v202 = vpop.f32.mrf.mxu0
    %v203 = vadd.f32 %v123, %v202
    %v204 = vpop.f32.mrf.mxu0
    %205 = vdwg.mxu0
    %v206 = vmul.f32 %v198, 0.35355338
    %v207 = vmul.f32 %v203, 0.35355338
    %v208 = vlaneseq
    %v209 = vshrl.u32 %v208, 7
    %v210 = vsub.s32 0, %v209
    %v211 = vrot.slane %v113, %v210
    %213 = vrot.lane.b32.xlu0 %v198, 96
    %v214 = vpop.permute.xlu0 %213
    %vm215 = vcmask 64512
    %v217 = vsel %vm215, %v206, 0
    %v219 = vsel %vm215, %v214, 0
    %221 = vmatprep.subr.mxu0 0.0
    %222 = vmatpush1.xpose.msra.mxu0 0.0
    %223 = vmatprep.subr.mxu0 0.0
    %224 = vmatpush1.xpose.msra.mxu0 0.0
    %225 = vmatprep.subr.mxu0 0.0
    %226 = vmatpush1.xpose.msra.mxu0 0.0
    %227 = vmatprep.subr.mxu0 0.0
    %228 = vmatpush1.xpose.msra.mxu0 0.0
    %229 = vmatprep.subr.mxu0 0.0
    %230 = vmatpush1.xpose.msra.mxu0 0.0
    %231 = vmatprep.subr.mxu0 0.0
    %232 = vmatpush1.xpose.msra.mxu0 0.0
    %233 = vmatprep.subr.mxu0 0.0
    %234 = vmatpush1.xpose.msra.mxu0 0.0
    %235 = vmatprep.subr.mxu0 0.0
    %236 = vmatpush1.xpose.msra.mxu0 0.0
    %237 = vmatprep.subr.mxu0 0.0
    %238 = vmatpush1.xpose.msra.mxu0 0.0
    %239 = vmatprep.subr.mxu0 0.0
    %240 = vmatpush1.xpose.msra.mxu0 0.0
    %241 = vmatprep.subr.mxu0 0.0
    %242 = vmatpush1.xpose.msra.mxu0 0.0
    %243 = vmatprep.subr.mxu0 0.0
    %244 = vmatpush1.xpose.msra.mxu0 0.0
    %245 = vmatprep.subr.mxu0 0.0
    %246 = vmatpush1.xpose.msra.mxu0 0.0
    %247 = vmatprep.subr.mxu0 0.0
    %248 = vmatpush1.xpose.msra.mxu0 0.0
    %249 = vmatprep.subr.mxu0 0.0
    %250 = vmatpush1.xpose.msra.mxu0 0.0
    %251 = vmatprep.subr.mxu0 0.0
    %252 = vmatpush1.xpose.msra.mxu0 %v219
    %253 = vmatprep.subr.mxu0 0.0
    %254 = vmatpush2.xpose.msra.mxu0 0.0
    %255 = vmatprep.subr.mxu0 0.0
    %256 = vmatpush2.xpose.msra.mxu0 0.0
    %257 = vmatprep.subr.mxu0 0.0
    %258 = vmatpush2.xpose.msra.mxu0 0.0
    %259 = vmatprep.subr.mxu0 0.0
    %260 = vmatpush2.xpose.msra.mxu0 0.0
    %261 = vmatprep.subr.mxu0 0.0
    %262 = vmatpush2.xpose.msra.mxu0 0.0
    %263 = vmatprep.subr.mxu0 0.0
    %264 = vmatpush2.xpose.msra.mxu0 0.0
    %265 = vmatprep.subr.mxu0 0.0
    %266 = vmatpush2.xpose.msra.mxu0 0.0
    %267 = vmatprep.subr.mxu0 0.0
    %268 = vmatpush2.xpose.msra.mxu0 0.0
    %269 = vmatprep.subr.mxu0 0.0
    %270 = vmatpush2.xpose.msra.mxu0 0.0
    %271 = vmatprep.subr.mxu0 0.0
    %272 = vmatpush2.xpose.msra.mxu0 0.0
    %273 = vmatprep.subr.mxu0 0.0
    %274 = vmatpush2.xpose.msra.mxu0 0.0
    %275 = vmatprep.subr.mxu0 0.0
    %276 = vmatpush2.xpose.msra.mxu0 0.0
    %277 = vmatprep.subr.mxu0 0.0
    %278 = vmatpush2.xpose.msra.mxu0 0.0
    %279 = vmatprep.subr.mxu0 0.0
    %280 = vmatpush2.xpose.msra.mxu0 0.0
    %281 = vmatprep.subr.mxu0 0.0
    %282 = vmatpush2.xpose.msra.mxu0 0.0
    %283 = vmatprep.subr.mxu0 0.0
    %284 = vmatpush2.xpose.msra.mxu0 0.0
    %285 = vmatprep.mubr.f32.mxu0 0.0
    %286 = vmatmul.mubr.f32.gmra.mxu0 %v217
    %v287 = vpop.f32.mrf.mxu0
    %v288 = vadd.f32 %v211, %v287
    %v289 = vpop.f32.mrf.mxu0
    %290 = vdwg.mxu0
    %v291 = vsel %vm215, %v288, -inf
    %292 = vmax.xlane.f32.xlu0 %v291
    %v293 = vpop.xlane.xlu0 %292
    %v294 = vsub.f32 %v288, %v293
    %v295 = vmul.f32 %v294, 1.442695
    %v296 = vpow.pop %v295
    %v297 = vsel %vm215, %v296, 0.0
    %298 = vadd.xlane.f32.xlu0 %v297
    %v299 = vpop.xlane.xlu0 %298
    %v300 = vrcp.pop %v299
    %v301 = vmul.f32 %v296, %v300
    %302 = vrot.lane.b32.xlu0 %v198, 64
    %v303 = vpop.permute.xlu0 %302
    %v306 = vsel %vm215, %v301, 0
    %308 = vmatprep.subr.mxu0 0.0
    %309 = vmatpush1.msra.mxu0 0.0
    %310 = vmatprep.subr.mxu0 0.0
    %311 = vmatpush1.msra.mxu0 0.0
    %312 = vmatprep.subr.mxu0 0.0
    %313 = vmatpush1.msra.mxu0 0.0
    %314 = vmatprep.subr.mxu0 0.0
    %315 = vmatpush1.msra.mxu0 0.0
    %316 = vmatprep.subr.mxu0 0.0
    %317 = vmatpush1.msra.mxu0 0.0
    %318 = vmatprep.subr.mxu0 0.0
    %319 = vmatpush1.msra.mxu0 0.0
    %320 = vmatprep.subr.mxu0 0.0
    %321 = vmatpush1.msra.mxu0 0.0
    %322 = vmatprep.subr.mxu0 0.0
    %323 = vmatpush1.msra.mxu0 0.0
    %324 = vmatprep.subr.mxu0 0.0
    %325 = vmatpush1.msra.mxu0 0.0
    %326 = vmatprep.subr.mxu0 0.0
    %327 = vmatpush1.msra.mxu0 0.0
    %328 = vmatprep.subr.mxu0 0.0
    %329 = vmatpush1.msra.mxu0 0.0
    %330 = vmatprep.subr.mxu0 0.0
    %331 = vmatpush1.msra.mxu0 0.0
    %332 = vmatprep.subr.mxu0 0.0
    %333 = vmatpush1.msra.mxu0 0.0
    %334 = vmatprep.subr.mxu0 0.0
    %335 = vmatpush1.msra.mxu0 0.0
    %336 = vmatprep.subr.mxu0 0.0
    %337 = vmatpush1.msra.mxu0 0.0
    %338 = vmatprep.subr.mxu0 0.0
    %339 = vmatpush1.msra.mxu0 %v303
    %340 = vmatprep.subr.mxu0 0.0
    %341 = vmatpush2.msra.mxu0 0.0
    %342 = vmatprep.subr.mxu0 0.0
    %343 = vmatpush2.msra.mxu0 0.0
    %344 = vmatprep.subr.mxu0 0.0
    %345 = vmatpush2.msra.mxu0 0.0
    %346 = vmatprep.subr.mxu0 0.0
    %347 = vmatpush2.msra.mxu0 0.0
    %348 = vmatprep.subr.mxu0 0.0
    %349 = vmatpush2.msra.mxu0 0.0
    %350 = vmatprep.subr.mxu0 0.0
    %351 = vmatpush2.msra.mxu0 0.0
    %352 = vmatprep.subr.mxu0 0.0
    %353 = vmatpush2.msra.mxu0 0.0
    %354 = vmatprep.subr.mxu0 0.0
    %355 = vmatpush2.msra.mxu0 0.0
    %356 = vmatprep.subr.mxu0 0.0
    %357 = vmatpush2.msra.mxu0 0.0
    %358 = vmatprep.subr.mxu0 0.0
    %359 = vmatpush2.msra.mxu0 0.0
    %360 = vmatprep.subr.mxu0 0.0
    %361 = vmatpush2.msra.mxu0 0.0
    %362 = vmatprep.subr.mxu0 0.0
    %363 = vmatpush2.msra.mxu0 0.0
    %364 = vmatprep.subr.mxu0 0.0
    %365 = vmatpush2.msra.mxu0 0.0
    %366 = vmatprep.subr.mxu0 0.0
    %367 = vmatpush2.msra.mxu0 0.0
    %368 = vmatprep.subr.mxu0 0.0
    %369 = vmatpush2.msra.mxu0 0.0
    %370 = vmatprep.subr.mxu0 0.0
    %371 = vmatpush2.msra.mxu0 0.0
    %372 = vmatprep.mubr.f32.mxu0 0.0
    %373 = vmatmul.mubr.f32.gmra.mxu0 %v306
    %v374 = vpop.f32.mrf.mxu0
    %v375 = vadd.f32 0.0, %v374
    %v376 = vpop.f32.mrf.mxu0
    %377 = vdwg.mxu0
    %378 = vrot.lane.b32.xlu0 %v206, 120
    %v379 = vpop.permute.xlu0 %378
    %380 = vrot.lane.b32.xlu0 %v198, 88
    %v381 = vpop.permute.xlu0 %380
    %v382 = vsel %vm215, %v379, 0
    %v384 = vsel %vm215, %v381, 0
    %386 = vmatprep.subr.mxu0 0.0
    %387 = vmatpush1.xpose.msra.mxu0 0.0
    %388 = vmatprep.subr.mxu0 0.0
    %389 = vmatpush1.xpose.msra.mxu0 0.0
    %390 = vmatprep.subr.mxu0 0.0
    %391 = vmatpush1.xpose.msra.mxu0 0.0
    %392 = vmatprep.subr.mxu0 0.0
    %393 = vmatpush1.xpose.msra.mxu0 0.0
    %394 = vmatprep.subr.mxu0 0.0
    %395 = vmatpush1.xpose.msra.mxu0 0.0
    %396 = vmatprep.subr.mxu0 0.0
    %397 = vmatpush1.xpose.msra.mxu0 0.0
    %398 = vmatprep.subr.mxu0 0.0
    %399 = vmatpush1.xpose.msra.mxu0 0.0
    %400 = vmatprep.subr.mxu0 0.0
    %401 = vmatpush1.xpose.msra.mxu0 0.0
    %402 = vmatprep.subr.mxu0 0.0
    %403 = vmatpush1.xpose.msra.mxu0 0.0
    %404 = vmatprep.subr.mxu0 0.0
    %405 = vmatpush1.xpose.msra.mxu0 0.0
    %406 = vmatprep.subr.mxu0 0.0
    %407 = vmatpush1.xpose.msra.mxu0 0.0
    %408 = vmatprep.subr.mxu0 0.0
    %409 = vmatpush1.xpose.msra.mxu0 0.0
    %410 = vmatprep.subr.mxu0 0.0
    %411 = vmatpush1.xpose.msra.mxu0 0.0
    %412 = vmatprep.subr.mxu0 0.0
    %413 = vmatpush1.xpose.msra.mxu0 0.0
    %414 = vmatprep.subr.mxu0 0.0
    %415 = vmatpush1.xpose.msra.mxu0 0.0
    %416 = vmatprep.subr.mxu0 0.0
    %417 = vmatpush1.xpose.msra.mxu0 %v384
    %418 = vmatprep.subr.mxu0 0.0
    %419 = vmatpush2.xpose.msra.mxu0 0.0
    %420 = vmatprep.subr.mxu0 0.0
    %421 = vmatpush2.xpose.msra.mxu0 0.0
    %422 = vmatprep.subr.mxu0 0.0
    %423 = vmatpush2.xpose.msra.mxu0 0.0
    %424 = vmatprep.subr.mxu0 0.0
    %425 = vmatpush2.xpose.msra.mxu0 0.0
    %426 = vmatprep.subr.mxu0 0.0
    %427 = vmatpush2.xpose.msra.mxu0 0.0
    %428 = vmatprep.subr.mxu0 0.0
    %429 = vmatpush2.xpose.msra.mxu0 0.0
    %430 = vmatprep.subr.mxu0 0.0
    %431 = vmatpush2.xpose.msra.mxu0 0.0
    %432 = vmatprep.subr.mxu0 0.0
    %433 = vmatpush2.xpose.msra.mxu0 0.0
    %434 = vmatprep.subr.mxu0 0.0
    %435 = vmatpush2.xpose.msra.mxu0 0.0
    %436 = vmatprep.subr.mxu0 0.0
    %437 = vmatpush2.xpose.msra.mxu0 0.0
    %438 = vmatprep.subr.mxu0 0.0
    %439 = vmatpush2.xpose.msra.mxu0 0.0
    %440 = vmatprep.subr.mxu0 0.0
    %441 = vmatpush2.xpose.msra.mxu0 0.0
    %442 = vmatprep.subr.mxu0 0.0
    %443 = vmatpush2.xpose.msra.mxu0 0.0
    %444 = vmatprep.subr.mxu0 0.0
    %445 = vmatpush2.xpose.msra.mxu0 0.0
    %446 = vmatprep.subr.mxu0 0.0
    %447 = vmatpush2.xpose.msra.mxu0 0.0
    %448 = vmatprep.subr.mxu0 0.0
    %449 = vmatpush2.xpose.msra.mxu0 0.0
    %450 = vmatprep.mubr.f32.mxu0 0.0
    %451 = vmatmul.mubr.f32.gmra.mxu0 %v382
    %v452 = vpop.f32.mrf.mxu0
    %v453 = vadd.f32 %v211, %v452
    %v454 = vpop.f32.mrf.mxu0
    %455 = vdwg.mxu0
    %v456 = vsel %vm215, %v453, -inf
    %457 = vmax.xlane.f32.xlu0 %v456
    %v458 = vpop.xlane.xlu0 %457
    %v459 = vsub.f32 %v453, %v458
    %v460 = vmul.f32 %v459, 1.442695
    %v461 = vpow.pop %v460
    %v462 = vsel %vm215, %v461, 0.0
    %463 = vadd.xlane.f32.xlu0 %v462
    %v464 = vpop.xlane.xlu0 %463
    %v465 = vrcp.pop %v464
    %v466 = vmul.f32 %v461, %v465
    %467 = vrot.lane.b32.xlu0 %v198, 56
    %v468 = vpop.permute.xlu0 %467
    %v471 = vsel %vm215, %v466, 0
    %473 = vmatprep.subr.mxu0 0.0
    %474 = vmatpush1.msra.mxu0 0.0
    %475 = vmatprep.subr.mxu0 0.0
    %476 = vmatpush1.msra.mxu0 0.0
    %477 = vmatprep.subr.mxu0 0.0
    %478 = vmatpush1.msra.mxu0 0.0
    %479 = vmatprep.subr.mxu0 0.0
    %480 = vmatpush1.msra.mxu0 0.0
    %481 = vmatprep.subr.mxu0 0.0
    %482 = vmatpush1.msra.mxu0 0.0
    %483 = vmatprep.subr.mxu0 0.0
    %484 = vmatpush1.msra.mxu0 0.0
    %485 = vmatprep.subr.mxu0 0.0
    %486 = vmatpush1.msra.mxu0 0.0
    %487 = vmatprep.subr.mxu0 0.0
    %488 = vmatpush1.msra.mxu0 0.0
    %489 = vmatprep.subr.mxu0 0.0
    %490 = vmatpush1.msra.mxu0 0.0
    %491 = vmatprep.subr.mxu0 0.0
    %492 = vmatpush1.msra.mxu0 0.0
    %493 = vmatprep.subr.mxu0 0.0
    %494 = vmatpush1.msra.mxu0 0.0
    %495 = vmatprep.subr.mxu0 0.0
    %496 = vmatpush1.msra.mxu0 0.0
    %497 = vmatprep.subr.mxu0 0.0
    %498 = vmatpush1.msra.mxu0 0.0
    %499 = vmatprep.subr.mxu0 0.0
    %500 = vmatpush1.msra.mxu0 0.0
    %501 = vmatprep.subr.mxu0 0.0
    %502 = vmatpush1.msra.mxu0 0.0
    %503 = vmatprep.subr.mxu0 0.0
    %504 = vmatpush1.msra.mxu0 %v468
    %505 = vmatprep.subr.mxu0 0.0
    %506 = vmatpush2.msra.mxu0 0.0
    %507 = vmatprep.subr.mxu0 0.0
    %508 = vmatpush2.msra.mxu0 0.0
    %509 = vmatprep.subr.mxu0 0.0
    %510 = vmatpush2.msra.mxu0 0.0
    %511 = vmatprep.subr.mxu0 0.0
    %512 = vmatpush2.msra.mxu0 0.0
    %513 = vmatprep.subr.mxu0 0.0
    %514 = vmatpush2.msra.mxu0 0.0
    %515 = vmatprep.subr.mxu0 0.0
    %516 = vmatpush2.msra.mxu0 0.0
    %517 = vmatprep.subr.mxu0 0.0
    %518 = vmatpush2.msra.mxu0 0.0
    %519 = vmatprep.subr.mxu0 0.0
    %520 = vmatpush2.msra.mxu0 0.0
    %521 = vmatprep.subr.mxu0 0.0
    %522 = vmatpush2.msra.mxu0 0.0
    %523 = vmatprep.subr.mxu0 0.0
    %524 = vmatpush2.msra.mxu0 0.0
    %525 = vmatprep.subr.mxu0 0.0
    %526 = vmatpush2.msra.mxu0 0.0
    %527 = vmatprep.subr.mxu0 0.0
    %528 = vmatpush2.msra.mxu0 0.0
    %529 = vmatprep.subr.mxu0 0.0
    %530 = vmatpush2.msra.mxu0 0.0
    %531 = vmatprep.subr.mxu0 0.0
    %532 = vmatpush2.msra.mxu0 0.0
    %533 = vmatprep.subr.mxu0 0.0
    %534 = vmatpush2.msra.mxu0 0.0
    %535 = vmatprep.subr.mxu0 0.0
    %536 = vmatpush2.msra.mxu0 0.0
    %537 = vmatprep.mubr.f32.mxu0 0.0
    %538 = vmatmul.mubr.f32.gmra.mxu0 %v471
    %v539 = vpop.f32.mrf.mxu0
    %v540 = vadd.f32 0.0, %v539
    %v541 = vpop.f32.mrf.mxu0
    %542 = vdwg.mxu0
    %543 = vrot.lane.b32.xlu0 %v206, 112
    %v544 = vpop.permute.xlu0 %543
    %545 = vrot.lane.b32.xlu0 %v198, 80
    %v546 = vpop.permute.xlu0 %545
    %v547 = vsel %vm215, %v544, 0
    %v549 = vsel %vm215, %v546, 0
    %551 = vmatprep.subr.mxu0 0.0
    %552 = vmatpush1.xpose.msra.mxu0 0.0
    %553 = vmatprep.subr.mxu0 0.0
    %554 = vmatpush1.xpose.msra.mxu0 0.0
    %555 = vmatprep.subr.mxu0 0.0
    %556 = vmatpush1.xpose.msra.mxu0 0.0
    %557 = vmatprep.subr.mxu0 0.0
    %558 = vmatpush1.xpose.msra.mxu0 0.0
    %559 = vmatprep.subr.mxu0 0.0
    %560 = vmatpush1.xpose.msra.mxu0 0.0
    %561 = vmatprep.subr.mxu0 0.0
    %562 = vmatpush1.xpose.msra.mxu0 0.0
    %563 = vmatprep.subr.mxu0 0.0
    %564 = vmatpush1.xpose.msra.mxu0 0.0
    %565 = vmatprep.subr.mxu0 0.0
    %566 = vmatpush1.xpose.msra.mxu0 0.0
    %567 = vmatprep.subr.mxu0 0.0
    %568 = vmatpush1.xpose.msra.mxu0 0.0
    %569 = vmatprep.subr.mxu0 0.0
    %570 = vmatpush1.xpose.msra.mxu0 0.0
    %571 = vmatprep.subr.mxu0 0.0
    %572 = vmatpush1.xpose.msra.mxu0 0.0
    %573 = vmatprep.subr.mxu0 0.0
    %574 = vmatpush1.xpose.msra.mxu0 0.0
    %575 = vmatprep.subr.mxu0 0.0
    %576 = vmatpush1.xpose.msra.mxu0 0.0
    %577 = vmatprep.subr.mxu0 0.0
    %578 = vmatpush1.xpose.msra.mxu0 0.0
    %579 = vmatprep.subr.mxu0 0.0
    %580 = vmatpush1.xpose.msra.mxu0 0.0
    %581 = vmatprep.subr.mxu0 0.0
    %582 = vmatpush1.xpose.msra.mxu0 %v549
    %583 = vmatprep.subr.mxu0 0.0
    %584 = vmatpush2.xpose.msra.mxu0 0.0
    %585 = vmatprep.subr.mxu0 0.0
    %586 = vmatpush2.xpose.msra.mxu0 0.0
    %587 = vmatprep.subr.mxu0 0.0
    %588 = vmatpush2.xpose.msra.mxu0 0.0
    %589 = vmatprep.subr.mxu0 0.0
    %590 = vmatpush2.xpose.msra.mxu0 0.0
    %591 = vmatprep.subr.mxu0 0.0
    %592 = vmatpush2.xpose.msra.mxu0 0.0
    %593 = vmatprep.subr.mxu0 0.0
    %594 = vmatpush2.xpose.msra.mxu0 0.0
    %595 = vmatprep.subr.mxu0 0.0
    %596 = vmatpush2.xpose.msra.mxu0 0.0
    %597 = vmatprep.subr.mxu0 0.0
    %598 = vmatpush2.xpose.msra.mxu0 0.0
    %599 = vmatprep.subr.mxu0 0.0
    %600 = vmatpush2.xpose.msra.mxu0 0.0
    %601 = vmatprep.subr.mxu0 0.0
    %602 = vmatpush2.xpose.msra.mxu0 0.0
    %603 = vmatprep.subr.mxu0 0.0
    %604 = vmatpush2.xpose.msra.mxu0 0.0
    %605 = vmatprep.subr.mxu0 0.0
    %606 = vmatpush2.xpose.msra.mxu0 0.0
    %607 = vmatprep.subr.mxu0 0.0
    %608 = vmatpush2.xpose.msra.mxu0 0.0
    %609 = vmatprep.subr.mxu0 0.0
    %610 = vmatpush2.xpose.msra.mxu0 0.0
    %611 = vmatprep.subr.mxu0 0.0
    %612 = vmatpush2.xpose.msra.mxu0 0.0
    %613 = vmatprep.subr.mxu0 0.0
    %614 = vmatpush2.xpose.msra.mxu0 0.0
    %615 = vmatprep.mubr.f32.mxu0 0.0
    %616 = vmatmul.mubr.f32.gmra.mxu0 %v547
    %v617 = vpop.f32.mrf.mxu0
    %v618 = vadd.f32 %v211, %v617
    %v619 = vpop.f32.mrf.mxu0
    %620 = vdwg.mxu0
    %v621 = vsel %vm215, %v618, -inf
    %622 = vmax.xlane.f32.xlu0 %v621
    %v623 = vpop.xlane.xlu0 %622
    %v624 = vsub.f32 %v618, %v623
    %v625 = vmul.f32 %v624, 1.442695
    %v626 = vpow.pop %v625
    %v627 = vsel %vm215, %v626, 0.0
    %628 = vadd.xlane.f32.xlu0 %v627
    %v629 = vpop.xlane.xlu0 %628
    %v630 = vrcp.pop %v629
    %v631 = vmul.f32 %v626, %v630
    %632 = vrot.lane.b32.xlu0 %v198, 48
    %v633 = vpop.permute.xlu0 %632
    %v636 = vsel %vm215, %v631, 0
    %638 = vmatprep.subr.mxu0 0.0
    %639 = vmatpush1.msra.mxu0 0.0
    %640 = vmatprep.subr.mxu0 0.0
    %641 = vmatpush1.msra.mxu0 0.0
    %642 = vmatprep.subr.mxu0 0.0
    %643 = vmatpush1.msra.mxu0 0.0
    %644 = vmatprep.subr.mxu0 0.0
    %645 = vmatpush1.msra.mxu0 0.0
    %646 = vmatprep.subr.mxu0 0.0
    %647 = vmatpush1.msra.mxu0 0.0
    %648 = vmatprep.subr.mxu0 0.0
    %649 = vmatpush1.msra.mxu0 0.0
    %650 = vmatprep.subr.mxu0 0.0
    %651 = vmatpush1.msra.mxu0 0.0
    %652 = vmatprep.subr.mxu0 0.0
    %653 = vmatpush1.msra.mxu0 0.0
    %654 = vmatprep.subr.mxu0 0.0
    %655 = vmatpush1.msra.mxu0 0.0
    %656 = vmatprep.subr.mxu0 0.0
    %657 = vmatpush1.msra.mxu0 0.0
    %658 = vmatprep.subr.mxu0 0.0
    %659 = vmatpush1.msra.mxu0 0.0
    %660 = vmatprep.subr.mxu0 0.0
    %661 = vmatpush1.msra.mxu0 0.0
    %662 = vmatprep.subr.mxu0 0.0
    %663 = vmatpush1.msra.mxu0 0.0
    %664 = vmatprep.subr.mxu0 0.0
    %665 = vmatpush1.msra.mxu0 0.0
    %666 = vmatprep.subr.mxu0 0.0
    %667 = vmatpush1.msra.mxu0 0.0
    %668 = vmatprep.subr.mxu0 0.0
    %669 = vmatpush1.msra.mxu0 %v633
    %670 = vmatprep.subr.mxu0 0.0
    %671 = vmatpush2.msra.mxu0 0.0
    %672 = vmatprep.subr.mxu0 0.0
    %673 = vmatpush2.msra.mxu0 0.0
    %674 = vmatprep.subr.mxu0 0.0
    %675 = vmatpush2.msra.mxu0 0.0
    %676 = vmatprep.subr.mxu0 0.0
    %677 = vmatpush2.msra.mxu0 0.0
    %678 = vmatprep.subr.mxu0 0.0
    %679 = vmatpush2.msra.mxu0 0.0
    %680 = vmatprep.subr.mxu0 0.0
    %681 = vmatpush2.msra.mxu0 0.0
    %682 = vmatprep.subr.mxu0 0.0
    %683 = vmatpush2.msra.mxu0 0.0
    %684 = vmatprep.subr.mxu0 0.0
    %685 = vmatpush2.msra.mxu0 0.0
    %686 = vmatprep.subr.mxu0 0.0
    %687 = vmatpush2.msra.mxu0 0.0
    %688 = vmatprep.subr.mxu0 0.0
    %689 = vmatpush2.msra.mxu0 0.0
    %690 = vmatprep.subr.mxu0 0.0
    %691 = vmatpush2.msra.mxu0 0.0
    %692 = vmatprep.subr.mxu0 0.0
    %693 = vmatpush2.msra.mxu0 0.0
    %694 = vmatprep.subr.mxu0 0.0
    %695 = vmatpush2.msra.mxu0 0.0
    %696 = vmatprep.subr.mxu0 0.0
    %697 = vmatpush2.msra.mxu0 0.0
    %698 = vmatprep.subr.mxu0 0.0
    %699 = vmatpush2.msra.mxu0 0.0
    %700 = vmatprep.subr.mxu0 0.0
    %701 = vmatpush2.msra.mxu0 0.0
    %702 = vmatprep.mubr.f32.mxu0 0.0
    %703 = vmatmul.mubr.f32.gmra.mxu0 %v636
    %v704 = vpop.f32.mrf.mxu0
    %v705 = vadd.f32 0.0, %v704
    %v706 = vpop.f32.mrf.mxu0
    %707 = vdwg.mxu0
    %708 = vrot.lane.b32.xlu0 %v206, 104
    %v709 = vpop.permute.xlu0 %708
    %710 = vrot.lane.b32.xlu0 %v198, 72
    %v711 = vpop.permute.xlu0 %710
    %v712 = vsel %vm215, %v709, 0
    %v714 = vsel %vm215, %v711, 0
    %716 = vmatprep.subr.mxu0 0.0
    %717 = vmatpush1.xpose.msra.mxu0 0.0
    %718 = vmatprep.subr.mxu0 0.0
    %719 = vmatpush1.xpose.msra.mxu0 0.0
    %720 = vmatprep.subr.mxu0 0.0
    %721 = vmatpush1.xpose.msra.mxu0 0.0
    %722 = vmatprep.subr.mxu0 0.0
    %723 = vmatpush1.xpose.msra.mxu0 0.0
    %724 = vmatprep.subr.mxu0 0.0
    %725 = vmatpush1.xpose.msra.mxu0 0.0
    %726 = vmatprep.subr.mxu0 0.0
    %727 = vmatpush1.xpose.msra.mxu0 0.0
    %728 = vmatprep.subr.mxu0 0.0
    %729 = vmatpush1.xpose.msra.mxu0 0.0
    %730 = vmatprep.subr.mxu0 0.0
    %731 = vmatpush1.xpose.msra.mxu0 0.0
    %732 = vmatprep.subr.mxu0 0.0
    %733 = vmatpush1.xpose.msra.mxu0 0.0
    %734 = vmatprep.subr.mxu0 0.0
    %735 = vmatpush1.xpose.msra.mxu0 0.0
    %736 = vmatprep.subr.mxu0 0.0
    %737 = vmatpush1.xpose.msra.mxu0 0.0
    %738 = vmatprep.subr.mxu0 0.0
    %739 = vmatpush1.xpose.msra.mxu0 0.0
    %740 = vmatprep.subr.mxu0 0.0
    %741 = vmatpush1.xpose.msra.mxu0 0.0
    %742 = vmatprep.subr.mxu0 0.0
    %743 = vmatpush1.xpose.msra.mxu0 0.0
    %744 = vmatprep.subr.mxu0 0.0
    %745 = vmatpush1.xpose.msra.mxu0 0.0
    %746 = vmatprep.subr.mxu0 0.0
    %747 = vmatpush1.xpose.msra.mxu0 %v714
    %748 = vmatprep.subr.mxu0 0.0
    %749 = vmatpush2.xpose.msra.mxu0 0.0
    %750 = vmatprep.subr.mxu0 0.0
    %751 = vmatpush2.xpose.msra.mxu0 0.0
    %752 = vmatprep.subr.mxu0 0.0
    %753 = vmatpush2.xpose.msra.mxu0 0.0
    %754 = vmatprep.subr.mxu0 0.0
    %755 = vmatpush2.xpose.msra.mxu0 0.0
    %756 = vmatprep.subr.mxu0 0.0
    %757 = vmatpush2.xpose.msra.mxu0 0.0
    %758 = vmatprep.subr.mxu0 0.0
    %759 = vmatpush2.xpose.msra.mxu0 0.0
    %760 = vmatprep.subr.mxu0 0.0
    %761 = vmatpush2.xpose.msra.mxu0 0.0
    %762 = vmatprep.subr.mxu0 0.0
    %763 = vmatpush2.xpose.msra.mxu0 0.0
    %764 = vmatprep.subr.mxu0 0.0
    %765 = vmatpush2.xpose.msra.mxu0 0.0
    %766 = vmatprep.subr.mxu0 0.0
    %767 = vmatpush2.xpose.msra.mxu0 0.0
    %768 = vmatprep.subr.mxu0 0.0
    %769 = vmatpush2.xpose.msra.mxu0 0.0
    %770 = vmatprep.subr.mxu0 0.0
    %771 = vmatpush2.xpose.msra.mxu0 0.0
    %772 = vmatprep.subr.mxu0 0.0
    %773 = vmatpush2.xpose.msra.mxu0 0.0
    %774 = vmatprep.subr.mxu0 0.0
    %775 = vmatpush2.xpose.msra.mxu0 0.0
    %776 = vmatprep.subr.mxu0 0.0
    %777 = vmatpush2.xpose.msra.mxu0 0.0
    %778 = vmatprep.subr.mxu0 0.0
    %779 = vmatpush2.xpose.msra.mxu0 0.0
    %780 = vmatprep.mubr.f32.mxu0 0.0
    %781 = vmatmul.mubr.f32.gmra.mxu0 %v712
    %v782 = vpop.f32.mrf.mxu0
    %v783 = vadd.f32 %v211, %v782
    %v784 = vpop.f32.mrf.mxu0
    %785 = vdwg.mxu0
    %v786 = vsel %vm215, %v783, -inf
    %787 = vmax.xlane.f32.xlu0 %v786
    %v788 = vpop.xlane.xlu0 %787
    %v789 = vsub.f32 %v783, %v788
    %v790 = vmul.f32 %v789, 1.442695
    %v791 = vpow.pop %v790
    %v792 = vsel %vm215, %v791, 0.0
    %793 = vadd.xlane.f32.xlu0 %v792
    %v794 = vpop.xlane.xlu0 %793
    %v795 = vrcp.pop %v794
    %v796 = vmul.f32 %v791, %v795
    %797 = vrot.lane.b32.xlu0 %v198, 40
    %v798 = vpop.permute.xlu0 %797
    %v801 = vsel %vm215, %v796, 0
    %803 = vmatprep.subr.mxu0 0.0
    %804 = vmatpush1.msra.mxu0 0.0
    %805 = vmatprep.subr.mxu0 0.0
    %806 = vmatpush1.msra.mxu0 0.0
    %807 = vmatprep.subr.mxu0 0.0
    %808 = vmatpush1.msra.mxu0 0.0
    %809 = vmatprep.subr.mxu0 0.0
    %810 = vmatpush1.msra.mxu0 0.0
    %811 = vmatprep.subr.mxu0 0.0
    %812 = vmatpush1.msra.mxu0 0.0
    %813 = vmatprep.subr.mxu0 0.0
    %814 = vmatpush1.msra.mxu0 0.0
    %815 = vmatprep.subr.mxu0 0.0
    %816 = vmatpush1.msra.mxu0 0.0
    %817 = vmatprep.subr.mxu0 0.0
    %818 = vmatpush1.msra.mxu0 0.0
    %819 = vmatprep.subr.mxu0 0.0
    %820 = vmatpush1.msra.mxu0 0.0
    %821 = vmatprep.subr.mxu0 0.0
    %822 = vmatpush1.msra.mxu0 0.0
    %823 = vmatprep.subr.mxu0 0.0
    %824 = vmatpush1.msra.mxu0 0.0
    %825 = vmatprep.subr.mxu0 0.0
    %826 = vmatpush1.msra.mxu0 0.0
    %827 = vmatprep.subr.mxu0 0.0
    %828 = vmatpush1.msra.mxu0 0.0
    %829 = vmatprep.subr.mxu0 0.0
    %830 = vmatpush1.msra.mxu0 0.0
    %831 = vmatprep.subr.mxu0 0.0
    %832 = vmatpush1.msra.mxu0 0.0
    %833 = vmatprep.subr.mxu0 0.0
    %834 = vmatpush1.msra.mxu0 %v798
    %835 = vmatprep.subr.mxu0 0.0
    %836 = vmatpush2.msra.mxu0 0.0
    %837 = vmatprep.subr.mxu0 0.0
    %838 = vmatpush2.msra.mxu0 0.0
    %839 = vmatprep.subr.mxu0 0.0
    %840 = vmatpush2.msra.mxu0 0.0
    %841 = vmatprep.subr.mxu0 0.0
    %842 = vmatpush2.msra.mxu0 0.0
    %843 = vmatprep.subr.mxu0 0.0
    %844 = vmatpush2.msra.mxu0 0.0
    %845 = vmatprep.subr.mxu0 0.0
    %846 = vmatpush2.msra.mxu0 0.0
    %847 = vmatprep.subr.mxu0 0.0
    %848 = vmatpush2.msra.mxu0 0.0
    %849 = vmatprep.subr.mxu0 0.0
    %850 = vmatpush2.msra.mxu0 0.0
    %851 = vmatprep.subr.mxu0 0.0
    %852 = vmatpush2.msra.mxu0 0.0
    %853 = vmatprep.subr.mxu0 0.0
    %854 = vmatpush2.msra.mxu0 0.0
    %855 = vmatprep.subr.mxu0 0.0
    %856 = vmatpush2.msra.mxu0 0.0
    %857 = vmatprep.subr.mxu0 0.0
    %858 = vmatpush2.msra.mxu0 0.0
    %859 = vmatprep.subr.mxu0 0.0
    %860 = vmatpush2.msra.mxu0 0.0
    %861 = vmatprep.subr.mxu0 0.0
    %862 = vmatpush2.msra.mxu0 0.0
    %863 = vmatprep.subr.mxu0 0.0
    %864 = vmatpush2.msra.mxu0 0.0
    %865 = vmatprep.subr.mxu0 0.0
    %866 = vmatpush2.msra.mxu0 0.0
    %867 = vmatprep.mubr.f32.mxu0 0.0
    %868 = vmatmul.mubr.f32.gmra.mxu0 %v801
    %v869 = vpop.f32.mrf.mxu0
    %v870 = vadd.f32 0.0, %v869
    %v871 = vpop.f32.mrf.mxu0
    %872 = vdwg.mxu0
    %874 = vrot.lane.b32.xlu0 %v540, 8
    %v875 = vpop.permute.xlu0 %874
    %878 = vrot.lane.b32.xlu0 %v705, 16
    %v879 = vpop.permute.xlu0 %878
    %882 = vrot.lane.b32.xlu0 %v870, 24
    %v883 = vpop.permute.xlu0 %882
    %v885 = vsel %vm215, %v375, %v875
    %vm886 = vcmask 130048
    %v887 = vsel %vm886, %v885, %v879
    %vm888 = vcmask 195584
    %v889 = vsel %vm888, %v887, %v883
    %v890 = vlaneseq
    %v891 = vshrl.u32 %v890, 7
    %v892 = vsub.s32 1, %v891
    %v893 = vrot.slane %v113, %v892
    %895 = vrot.lane.b32.xlu0 %v203, 96
    %v896 = vpop.permute.xlu0 %895
    %v898 = vsel %vm215, %v207, 0
    %v900 = vsel %vm215, %v896, 0
    %902 = vmatprep.subr.mxu0 0.0
    %903 = vmatpush1.xpose.msra.mxu0 0.0
    %904 = vmatprep.subr.mxu0 0.0
    %905 = vmatpush1.xpose.msra.mxu0 0.0
    %906 = vmatprep.subr.mxu0 0.0
    %907 = vmatpush1.xpose.msra.mxu0 0.0
    %908 = vmatprep.subr.mxu0 0.0
    %909 = vmatpush1.xpose.msra.mxu0 0.0
    %910 = vmatprep.subr.mxu0 0.0
    %911 = vmatpush1.xpose.msra.mxu0 0.0
    %912 = vmatprep.subr.mxu0 0.0
    %913 = vmatpush1.xpose.msra.mxu0 0.0
    %914 = vmatprep.subr.mxu0 0.0
    %915 = vmatpush1.xpose.msra.mxu0 0.0
    %916 = vmatprep.subr.mxu0 0.0
    %917 = vmatpush1.xpose.msra.mxu0 0.0
    %918 = vmatprep.subr.mxu0 0.0
    %919 = vmatpush1.xpose.msra.mxu0 0.0
    %920 = vmatprep.subr.mxu0 0.0
    %921 = vmatpush1.xpose.msra.mxu0 0.0
    %922 = vmatprep.subr.mxu0 0.0
    %923 = vmatpush1.xpose.msra.mxu0 0.0
    %924 = vmatprep.subr.mxu0 0.0
    %925 = vmatpush1.xpose.msra.mxu0 0.0
    %926 = vmatprep.subr.mxu0 0.0
    %927 = vmatpush1.xpose.msra.mxu0 0.0
    %928 = vmatprep.subr.mxu0 0.0
    %929 = vmatpush1.xpose.msra.mxu0 0.0
    %930 = vmatprep.subr.mxu0 0.0
    %931 = vmatpush1.xpose.msra.mxu0 0.0
    %932 = vmatprep.subr.mxu0 0.0
    %933 = vmatpush1.xpose.msra.mxu0 %v900
    %934 = vmatprep.subr.mxu0 0.0
    %935 = vmatpush2.xpose.msra.mxu0 0.0
    %936 = vmatprep.subr.mxu0 0.0
    %937 = vmatpush2.xpose.msra.mxu0 0.0
    %938 = vmatprep.subr.mxu0 0.0
    %939 = vmatpush2.xpose.msra.mxu0 0.0
    %940 = vmatprep.subr.mxu0 0.0
    %941 = vmatpush2.xpose.msra.mxu0 0.0
    %942 = vmatprep.subr.mxu0 0.0
    %943 = vmatpush2.xpose.msra.mxu0 0.0
    %944 = vmatprep.subr.mxu0 0.0
    %945 = vmatpush2.xpose.msra.mxu0 0.0
    %946 = vmatprep.subr.mxu0 0.0
    %947 = vmatpush2.xpose.msra.mxu0 0.0
    %948 = vmatprep.subr.mxu0 0.0
    %949 = vmatpush2.xpose.msra.mxu0 0.0
    %950 = vmatprep.subr.mxu0 0.0
    %951 = vmatpush2.xpose.msra.mxu0 0.0
    %952 = vmatprep.subr.mxu0 0.0
    %953 = vmatpush2.xpose.msra.mxu0 0.0
    %954 = vmatprep.subr.mxu0 0.0
    %955 = vmatpush2.xpose.msra.mxu0 0.0
    %956 = vmatprep.subr.mxu0 0.0
    %957 = vmatpush2.xpose.msra.mxu0 0.0
    %958 = vmatprep.subr.mxu0 0.0
    %959 = vmatpush2.xpose.msra.mxu0 0.0
    %960 = vmatprep.subr.mxu0 0.0
    %961 = vmatpush2.xpose.msra.mxu0 0.0
    %962 = vmatprep.subr.mxu0 0.0
    %963 = vmatpush2.xpose.msra.mxu0 0.0
    %964 = vmatprep.subr.mxu0 0.0
    %965 = vmatpush2.xpose.msra.mxu0 0.0
    %966 = vmatprep.mubr.f32.mxu0 0.0
    %967 = vmatmul.mubr.f32.gmra.mxu0 %v898
    %v968 = vpop.f32.mrf.mxu0
    %v969 = vadd.f32 %v893, %v968
    %v970 = vpop.f32.mrf.mxu0
    %971 = vdwg.mxu0
    %v972 = vsel %vm215, %v969, -inf
    %973 = vmax.xlane.f32.xlu0 %v972
    %v974 = vpop.xlane.xlu0 %973
    %v975 = vsub.f32 %v969, %v974
    %v976 = vmul.f32 %v975, 1.442695
    %v977 = vpow.pop %v976
    %v978 = vsel %vm215, %v977, 0.0
    %979 = vadd.xlane.f32.xlu0 %v978
    %v980 = vpop.xlane.xlu0 %979
    %v981 = vrcp.pop %v980
    %v982 = vmul.f32 %v977, %v981
    %983 = vrot.lane.b32.xlu0 %v203, 64
    %v984 = vpop.permute.xlu0 %983
    %v987 = vsel %vm215, %v982, 0
    %989 = vmatprep.subr.mxu0 0.0
    %990 = vmatpush1.msra.mxu0 0.0
    %991 = vmatprep.subr.mxu0 0.0
    %992 = vmatpush1.msra.mxu0 0.0
    %993 = vmatprep.subr.mxu0 0.0
    %994 = vmatpush1.msra.mxu0 0.0
    %995 = vmatprep.subr.mxu0 0.0
    %996 = vmatpush1.msra.mxu0 0.0
    %997 = vmatprep.subr.mxu0 0.0
    %998 = vmatpush1.msra.mxu0 0.0
    %999 = vmatprep.subr.mxu0 0.0
    %1000 = vmatpush1.msra.mxu0 0.0
    %1001 = vmatprep.subr.mxu0 0.0
    %1002 = vmatpush1.msra.mxu0 0.0
    %1003 = vmatprep.subr.mxu0 0.0
    %1004 = vmatpush1.msra.mxu0 0.0
    %1005 = vmatprep.subr.mxu0 0.0
    %1006 = vmatpush1.msra.mxu0 0.0
    %1007 = vmatprep.subr.mxu0 0.0
    %1008 = vmatpush1.msra.mxu0 0.0
    %1009 = vmatprep.subr.mxu0 0.0
    %1010 = vmatpush1.msra.mxu0 0.0
    %1011 = vmatprep.subr.mxu0 0.0
    %1012 = vmatpush1.msra.mxu0 0.0
    %1013 = vmatprep.subr.mxu0 0.0
    %1014 = vmatpush1.msra.mxu0 0.0
    %1015 = vmatprep.subr.mxu0 0.0
    %1016 = vmatpush1.msra.mxu0 0.0
    %1017 = vmatprep.subr.mxu0 0.0
    %1018 = vmatpush1.msra.mxu0 0.0
    %1019 = vmatprep.subr.mxu0 0.0
    %1020 = vmatpush1.msra.mxu0 %v984
    %1021 = vmatprep.subr.mxu0 0.0
    %1022 = vmatpush2.msra.mxu0 0.0
    %1023 = vmatprep.subr.mxu0 0.0
    %1024 = vmatpush2.msra.mxu0 0.0
    %1025 = vmatprep.subr.mxu0 0.0
    %1026 = vmatpush2.msra.mxu0 0.0
    %1027 = vmatprep.subr.mxu0 0.0
    %1028 = vmatpush2.msra.mxu0 0.0
    %1029 = vmatprep.subr.mxu0 0.0
    %1030 = vmatpush2.msra.mxu0 0.0
    %1031 = vmatprep.subr.mxu0 0.0
    %1032 = vmatpush2.msra.mxu0 0.0
    %1033 = vmatprep.subr.mxu0 0.0
    %1034 = vmatpush2.msra.mxu0 0.0
    %1035 = vmatprep.subr.mxu0 0.0
    %1036 = vmatpush2.msra.mxu0 0.0
    %1037 = vmatprep.subr.mxu0 0.0
    %1038 = vmatpush2.msra.mxu0 0.0
    %1039 = vmatprep.subr.mxu0 0.0
    %1040 = vmatpush2.msra.mxu0 0.0
    %1041 = vmatprep.subr.mxu0 0.0
    %1042 = vmatpush2.msra.mxu0 0.0
    %1043 = vmatprep.subr.mxu0 0.0
    %1044 = vmatpush2.msra.mxu0 0.0
    %1045 = vmatprep.subr.mxu0 0.0
    %1046 = vmatpush2.msra.mxu0 0.0
    %1047 = vmatprep.subr.mxu0 0.0
    %1048 = vmatpush2.msra.mxu0 0.0
    %1049 = vmatprep.subr.mxu0 0.0
    %1050 = vmatpush2.msra.mxu0 0.0
    %1051 = vmatprep.subr.mxu0 0.0
    %1052 = vmatpush2.msra.mxu0 0.0
    %1053 = vmatprep.mubr.f32.mxu0 0.0
    %1054 = vmatmul.mubr.f32.gmra.mxu0 %v987
    %v1055 = vpop.f32.mrf.mxu0
    %v1056 = vadd.f32 0.0, %v1055
    %v1057 = vpop.f32.mrf.mxu0
    %1058 = vdwg.mxu0
    %1059 = vrot.lane.b32.xlu0 %v207, 120
    %v1060 = vpop.permute.xlu0 %1059
    %1061 = vrot.lane.b32.xlu0 %v203, 88
    %v1062 = vpop.permute.xlu0 %1061
    %v1063 = vsel %vm215, %v1060, 0
    %v1065 = vsel %vm215, %v1062, 0
    %1067 = vmatprep.subr.mxu0 0.0
    %1068 = vmatpush1.xpose.msra.mxu0 0.0
    %1069 = vmatprep.subr.mxu0 0.0
    %1070 = vmatpush1.xpose.msra.mxu0 0.0
    %1071 = vmatprep.subr.mxu0 0.0
    %1072 = vmatpush1.xpose.msra.mxu0 0.0
    %1073 = vmatprep.subr.mxu0 0.0
    %1074 = vmatpush1.xpose.msra.mxu0 0.0
    %1075 = vmatprep.subr.mxu0 0.0
    %1076 = vmatpush1.xpose.msra.mxu0 0.0
    %1077 = vmatprep.subr.mxu0 0.0
    %1078 = vmatpush1.xpose.msra.mxu0 0.0
    %1079 = vmatprep.subr.mxu0 0.0
    %1080 = vmatpush1.xpose.msra.mxu0 0.0
    %1081 = vmatprep.subr.mxu0 0.0
    %1082 = vmatpush1.xpose.msra.mxu0 0.0
    %1083 = vmatprep.subr.mxu0 0.0
    %1084 = vmatpush1.xpose.msra.mxu0 0.0
    %1085 = vmatprep.subr.mxu0 0.0
    %1086 = vmatpush1.xpose.msra.mxu0 0.0
    %1087 = vmatprep.subr.mxu0 0.0
    %1088 = vmatpush1.xpose.msra.mxu0 0.0
    %1089 = vmatprep.subr.mxu0 0.0
    %1090 = vmatpush1.xpose.msra.mxu0 0.0
    %1091 = vmatprep.subr.mxu0 0.0
    %1092 = vmatpush1.xpose.msra.mxu0 0.0
    %1093 = vmatprep.subr.mxu0 0.0
    %1094 = vmatpush1.xpose.msra.mxu0 0.0
    %1095 = vmatprep.subr.mxu0 0.0
    %1096 = vmatpush1.xpose.msra.mxu0 0.0
    %1097 = vmatprep.subr.mxu0 0.0
    %1098 = vmatpush1.xpose.msra.mxu0 %v1065
    %1099 = vmatprep.subr.mxu0 0.0
    %1100 = vmatpush2.xpose.msra.mxu0 0.0
    %1101 = vmatprep.subr.mxu0 0.0
    %1102 = vmatpush2.xpose.msra.mxu0 0.0
    %1103 = vmatprep.subr.mxu0 0.0
    %1104 = vmatpush2.xpose.msra.mxu0 0.0
    %1105 = vmatprep.subr.mxu0 0.0
    %1106 = vmatpush2.xpose.msra.mxu0 0.0
    %1107 = vmatprep.subr.mxu0 0.0
    %1108 = vmatpush2.xpose.msra.mxu0 0.0
    %1109 = vmatprep.subr.mxu0 0.0
    %1110 = vmatpush2.xpose.msra.mxu0 0.0
    %1111 = vmatprep.subr.mxu0 0.0
    %1112 = vmatpush2.xpose.msra.mxu0 0.0
    %1113 = vmatprep.subr.mxu0 0.0
    %1114 = vmatpush2.xpose.msra.mxu0 0.0
    %1115 = vmatprep.subr.mxu0 0.0
    %1116 = vmatpush2.xpose.msra.mxu0 0.0
    %1117 = vmatprep.subr.mxu0 0.0
    %1118 = vmatpush2.xpose.msra.mxu0 0.0
    %1119 = vmatprep.subr.mxu0 0.0
    %1120 = vmatpush2.xpose.msra.mxu0 0.0
    %1121 = vmatprep.subr.mxu0 0.0
    %1122 = vmatpush2.xpose.msra.mxu0 0.0
    %1123 = vmatprep.subr.mxu0 0.0
    %1124 = vmatpush2.xpose.msra.mxu0 0.0
    %1125 = vmatprep.subr.mxu0 0.0
    %1126 = vmatpush2.xpose.msra.mxu0 0.0
    %1127 = vmatprep.subr.mxu0 0.0
    %1128 = vmatpush2.xpose.msra.mxu0 0.0
    %1129 = vmatprep.subr.mxu0 0.0
    %1130 = vmatpush2.xpose.msra.mxu0 0.0
    %1131 = vmatprep.mubr.f32.mxu0 0.0
    %1132 = vmatmul.mubr.f32.gmra.mxu0 %v1063
    %v1133 = vpop.f32.mrf.mxu0
    %v1134 = vadd.f32 %v893, %v1133
    %v1135 = vpop.f32.mrf.mxu0
    %1136 = vdwg.mxu0
    %v1137 = vsel %vm215, %v1134, -inf
    %1138 = vmax.xlane.f32.xlu0 %v1137
    %v1139 = vpop.xlane.xlu0 %1138
    %v1140 = vsub.f32 %v1134, %v1139
    %v1141 = vmul.f32 %v1140, 1.442695
    %v1142 = vpow.pop %v1141
    %v1143 = vsel %vm215, %v1142, 0.0
    %1144 = vadd.xlane.f32.xlu0 %v1143
    %v1145 = vpop.xlane.xlu0 %1144
    %v1146 = vrcp.pop %v1145
    %v1147 = vmul.f32 %v1142, %v1146
    %1148 = vrot.lane.b32.xlu0 %v203, 56
    %v1149 = vpop.permute.xlu0 %1148
    %v1152 = vsel %vm215, %v1147, 0
    %1154 = vmatprep.subr.mxu0 0.0
    %1155 = vmatpush1.msra.mxu0 0.0
    %1156 = vmatprep.subr.mxu0 0.0
    %1157 = vmatpush1.msra.mxu0 0.0
    %1158 = vmatprep.subr.mxu0 0.0
    %1159 = vmatpush1.msra.mxu0 0.0
    %1160 = vmatprep.subr.mxu0 0.0
    %1161 = vmatpush1.msra.mxu0 0.0
    %1162 = vmatprep.subr.mxu0 0.0
    %1163 = vmatpush1.msra.mxu0 0.0
    %1164 = vmatprep.subr.mxu0 0.0
    %1165 = vmatpush1.msra.mxu0 0.0
    %1166 = vmatprep.subr.mxu0 0.0
    %1167 = vmatpush1.msra.mxu0 0.0
    %1168 = vmatprep.subr.mxu0 0.0
    %1169 = vmatpush1.msra.mxu0 0.0
    %1170 = vmatprep.subr.mxu0 0.0
    %1171 = vmatpush1.msra.mxu0 0.0
    %1172 = vmatprep.subr.mxu0 0.0
    %1173 = vmatpush1.msra.mxu0 0.0
    %1174 = vmatprep.subr.mxu0 0.0
    %1175 = vmatpush1.msra.mxu0 0.0
    %1176 = vmatprep.subr.mxu0 0.0
    %1177 = vmatpush1.msra.mxu0 0.0
    %1178 = vmatprep.subr.mxu0 0.0
    %1179 = vmatpush1.msra.mxu0 0.0
    %1180 = vmatprep.subr.mxu0 0.0
    %1181 = vmatpush1.msra.mxu0 0.0
    %1182 = vmatprep.subr.mxu0 0.0
    %1183 = vmatpush1.msra.mxu0 0.0
    %1184 = vmatprep.subr.mxu0 0.0
    %1185 = vmatpush1.msra.mxu0 %v1149
    %1186 = vmatprep.subr.mxu0 0.0
    %1187 = vmatpush2.msra.mxu0 0.0
    %1188 = vmatprep.subr.mxu0 0.0
    %1189 = vmatpush2.msra.mxu0 0.0
    %1190 = vmatprep.subr.mxu0 0.0
    %1191 = vmatpush2.msra.mxu0 0.0
    %1192 = vmatprep.subr.mxu0 0.0
    %1193 = vmatpush2.msra.mxu0 0.0
    %1194 = vmatprep.subr.mxu0 0.0
    %1195 = vmatpush2.msra.mxu0 0.0
    %1196 = vmatprep.subr.mxu0 0.0
    %1197 = vmatpush2.msra.mxu0 0.0
    %1198 = vmatprep.subr.mxu0 0.0
    %1199 = vmatpush2.msra.mxu0 0.0
    %1200 = vmatprep.subr.mxu0 0.0
    %1201 = vmatpush2.msra.mxu0 0.0
    %1202 = vmatprep.subr.mxu0 0.0
    %1203 = vmatpush2.msra.mxu0 0.0
    %1204 = vmatprep.subr.mxu0 0.0
    %1205 = vmatpush2.msra.mxu0 0.0
    %1206 = vmatprep.subr.mxu0 0.0
    %1207 = vmatpush2.msra.mxu0 0.0
    %1208 = vmatprep.subr.mxu0 0.0
    %1209 = vmatpush2.msra.mxu0 0.0
    %1210 = vmatprep.subr.mxu0 0.0
    %1211 = vmatpush2.msra.mxu0 0.0
    %1212 = vmatprep.subr.mxu0 0.0
    %1213 = vmatpush2.msra.mxu0 0.0
    %1214 = vmatprep.subr.mxu0 0.0
    %1215 = vmatpush2.msra.mxu0 0.0
    %1216 = vmatprep.subr.mxu0 0.0
    %1217 = vmatpush2.msra.mxu0 0.0
    %1218 = vmatprep.mubr.f32.mxu0 0.0
    %1219 = vmatmul.mubr.f32.gmra.mxu0 %v1152
    %v1220 = vpop.f32.mrf.mxu0
    %v1221 = vadd.f32 0.0, %v1220
    %v1222 = vpop.f32.mrf.mxu0
    %1223 = vdwg.mxu0
    %1224 = vrot.lane.b32.xlu0 %v207, 112
    %v1225 = vpop.permute.xlu0 %1224
    %1226 = vrot.lane.b32.xlu0 %v203, 80
    %v1227 = vpop.permute.xlu0 %1226
    %v1228 = vsel %vm215, %v1225, 0
    %v1230 = vsel %vm215, %v1227, 0
    %1232 = vmatprep.subr.mxu0 0.0
    %1233 = vmatpush1.xpose.msra.mxu0 0.0
    %1234 = vmatprep.subr.mxu0 0.0
    %1235 = vmatpush1.xpose.msra.mxu0 0.0
    %1236 = vmatprep.subr.mxu0 0.0
    %1237 = vmatpush1.xpose.msra.mxu0 0.0
    %1238 = vmatprep.subr.mxu0 0.0
    %1239 = vmatpush1.xpose.msra.mxu0 0.0
    %1240 = vmatprep.subr.mxu0 0.0
    %1241 = vmatpush1.xpose.msra.mxu0 0.0
    %1242 = vmatprep.subr.mxu0 0.0
    %1243 = vmatpush1.xpose.msra.mxu0 0.0
    %1244 = vmatprep.subr.mxu0 0.0
    %1245 = vmatpush1.xpose.msra.mxu0 0.0
    %1246 = vmatprep.subr.mxu0 0.0
    %1247 = vmatpush1.xpose.msra.mxu0 0.0
    %1248 = vmatprep.subr.mxu0 0.0
    %1249 = vmatpush1.xpose.msra.mxu0 0.0
    %1250 = vmatprep.subr.mxu0 0.0
    %1251 = vmatpush1.xpose.msra.mxu0 0.0
    %1252 = vmatprep.subr.mxu0 0.0
    %1253 = vmatpush1.xpose.msra.mxu0 0.0
    %1254 = vmatprep.subr.mxu0 0.0
    %1255 = vmatpush1.xpose.msra.mxu0 0.0
    %1256 = vmatprep.subr.mxu0 0.0
    %1257 = vmatpush1.xpose.msra.mxu0 0.0
    %1258 = vmatprep.subr.mxu0 0.0
    %1259 = vmatpush1.xpose.msra.mxu0 0.0
    %1260 = vmatprep.subr.mxu0 0.0
    %1261 = vmatpush1.xpose.msra.mxu0 0.0
    %1262 = vmatprep.subr.mxu0 0.0
    %1263 = vmatpush1.xpose.msra.mxu0 %v1230
    %1264 = vmatprep.subr.mxu0 0.0
    %1265 = vmatpush2.xpose.msra.mxu0 0.0
    %1266 = vmatprep.subr.mxu0 0.0
    %1267 = vmatpush2.xpose.msra.mxu0 0.0
    %1268 = vmatprep.subr.mxu0 0.0
    %1269 = vmatpush2.xpose.msra.mxu0 0.0
    %1270 = vmatprep.subr.mxu0 0.0
    %1271 = vmatpush2.xpose.msra.mxu0 0.0
    %1272 = vmatprep.subr.mxu0 0.0
    %1273 = vmatpush2.xpose.msra.mxu0 0.0
    %1274 = vmatprep.subr.mxu0 0.0
    %1275 = vmatpush2.xpose.msra.mxu0 0.0
    %1276 = vmatprep.subr.mxu0 0.0
    %1277 = vmatpush2.xpose.msra.mxu0 0.0
    %1278 = vmatprep.subr.mxu0 0.0
    %1279 = vmatpush2.xpose.msra.mxu0 0.0
    %1280 = vmatprep.subr.mxu0 0.0
    %1281 = vmatpush2.xpose.msra.mxu0 0.0
    %1282 = vmatprep.subr.mxu0 0.0
    %1283 = vmatpush2.xpose.msra.mxu0 0.0
    %1284 = vmatprep.subr.mxu0 0.0
    %1285 = vmatpush2.xpose.msra.mxu0 0.0
    %1286 = vmatprep.subr.mxu0 0.0
    %1287 = vmatpush2.xpose.msra.mxu0 0.0
    %1288 = vmatprep.subr.mxu0 0.0
    %1289 = vmatpush2.xpose.msra.mxu0 0.0
    %1290 = vmatprep.subr.mxu0 0.0
    %1291 = vmatpush2.xpose.msra.mxu0 0.0
    %1292 = vmatprep.subr.mxu0 0.0
    %1293 = vmatpush2.xpose.msra.mxu0 0.0
    %1294 = vmatprep.subr.mxu0 0.0
    %1295 = vmatpush2.xpose.msra.mxu0 0.0
    %1296 = vmatprep.mubr.f32.mxu0 0.0
    %1297 = vmatmul.mubr.f32.gmra.mxu0 %v1228
    %v1298 = vpop.f32.mrf.mxu0
    %v1299 = vadd.f32 %v893, %v1298
    %v1300 = vpop.f32.mrf.mxu0
    %1301 = vdwg.mxu0
    %v1302 = vsel %vm215, %v1299, -inf
    %1303 = vmax.xlane.f32.xlu0 %v1302
    %v1304 = vpop.xlane.xlu0 %1303
    %v1305 = vsub.f32 %v1299, %v1304
    %v1306 = vmul.f32 %v1305, 1.442695
    %v1307 = vpow.pop %v1306
    %v1308 = vsel %vm215, %v1307, 0.0
    %1309 = vadd.xlane.f32.xlu0 %v1308
    %v1310 = vpop.xlane.xlu0 %1309
    %v1311 = vrcp.pop %v1310
    %v1312 = vmul.f32 %v1307, %v1311
    %1313 = vrot.lane.b32.xlu0 %v203, 48
    %v1314 = vpop.permute.xlu0 %1313
    %v1317 = vsel %vm215, %v1312, 0
    %1319 = vmatprep.subr.mxu0 0.0
    %1320 = vmatpush1.msra.mxu0 0.0
    %1321 = vmatprep.subr.mxu0 0.0
    %1322 = vmatpush1.msra.mxu0 0.0
    %1323 = vmatprep.subr.mxu0 0.0
    %1324 = vmatpush1.msra.mxu0 0.0
    %1325 = vmatprep.subr.mxu0 0.0
    %1326 = vmatpush1.msra.mxu0 0.0
    %1327 = vmatprep.subr.mxu0 0.0
    %1328 = vmatpush1.msra.mxu0 0.0
    %1329 = vmatprep.subr.mxu0 0.0
    %1330 = vmatpush1.msra.mxu0 0.0
    %1331 = vmatprep.subr.mxu0 0.0
    %1332 = vmatpush1.msra.mxu0 0.0
    %1333 = vmatprep.subr.mxu0 0.0
    %1334 = vmatpush1.msra.mxu0 0.0
    %1335 = vmatprep.subr.mxu0 0.0
    %1336 = vmatpush1.msra.mxu0 0.0
    %1337 = vmatprep.subr.mxu0 0.0
    %1338 = vmatpush1.msra.mxu0 0.0
    %1339 = vmatprep.subr.mxu0 0.0
    %1340 = vmatpush1.msra.mxu0 0.0
    %1341 = vmatprep.subr.mxu0 0.0
    %1342 = vmatpush1.msra.mxu0 0.0
    %1343 = vmatprep.subr.mxu0 0.0
    %1344 = vmatpush1.msra.mxu0 0.0
    %1345 = vmatprep.subr.mxu0 0.0
    %1346 = vmatpush1.msra.mxu0 0.0
    %1347 = vmatprep.subr.mxu0 0.0
    %1348 = vmatpush1.msra.mxu0 0.0
    %1349 = vmatprep.subr.mxu0 0.0
    %1350 = vmatpush1.msra.mxu0 %v1314
    %1351 = vmatprep.subr.mxu0 0.0
    %1352 = vmatpush2.msra.mxu0 0.0
    %1353 = vmatprep.subr.mxu0 0.0
    %1354 = vmatpush2.msra.mxu0 0.0
    %1355 = vmatprep.subr.mxu0 0.0
    %1356 = vmatpush2.msra.mxu0 0.0
    %1357 = vmatprep.subr.mxu0 0.0
    %1358 = vmatpush2.msra.mxu0 0.0
    %1359 = vmatprep.subr.mxu0 0.0
    %1360 = vmatpush2.msra.mxu0 0.0
    %1361 = vmatprep.subr.mxu0 0.0
    %1362 = vmatpush2.msra.mxu0 0.0
    %1363 = vmatprep.subr.mxu0 0.0
    %1364 = vmatpush2.msra.mxu0 0.0
    %1365 = vmatprep.subr.mxu0 0.0
    %1366 = vmatpush2.msra.mxu0 0.0
    %1367 = vmatprep.subr.mxu0 0.0
    %1368 = vmatpush2.msra.mxu0 0.0
    %1369 = vmatprep.subr.mxu0 0.0
    %1370 = vmatpush2.msra.mxu0 0.0
    %1371 = vmatprep.subr.mxu0 0.0
    %1372 = vmatpush2.msra.mxu0 0.0
    %1373 = vmatprep.subr.mxu0 0.0
    %1374 = vmatpush2.msra.mxu0 0.0
    %1375 = vmatprep.subr.mxu0 0.0
    %1376 = vmatpush2.msra.mxu0 0.0
    %1377 = vmatprep.subr.mxu0 0.0
    %1378 = vmatpush2.msra.mxu0 0.0
    %1379 = vmatprep.subr.mxu0 0.0
    %1380 = vmatpush2.msra.mxu0 0.0
    %1381 = vmatprep.subr.mxu0 0.0
    %1382 = vmatpush2.msra.mxu0 0.0
    %1383 = vmatprep.mubr.f32.mxu0 0.0
    %1384 = vmatmul.mubr.f32.gmra.mxu0 %v1317
    %v1385 = vpop.f32.mrf.mxu0
    %v1386 = vadd.f32 0.0, %v1385
    %v1387 = vpop.f32.mrf.mxu0
    %1388 = vdwg.mxu0
    %1389 = vrot.lane.b32.xlu0 %v207, 104
    %v1390 = vpop.permute.xlu0 %1389
    %1391 = vrot.lane.b32.xlu0 %v203, 72
    %v1392 = vpop.permute.xlu0 %1391
    %v1393 = vsel %vm215, %v1390, 0
    %v1395 = vsel %vm215, %v1392, 0
    %1397 = vmatprep.subr.mxu0 0.0
    %1398 = vmatpush1.xpose.msra.mxu0 0.0
    %1399 = vmatprep.subr.mxu0 0.0
    %1400 = vmatpush1.xpose.msra.mxu0 0.0
    %1401 = vmatprep.subr.mxu0 0.0
    %1402 = vmatpush1.xpose.msra.mxu0 0.0
    %1403 = vmatprep.subr.mxu0 0.0
    %1404 = vmatpush1.xpose.msra.mxu0 0.0
    %1405 = vmatprep.subr.mxu0 0.0
    %1406 = vmatpush1.xpose.msra.mxu0 0.0
    %1407 = vmatprep.subr.mxu0 0.0
    %1408 = vmatpush1.xpose.msra.mxu0 0.0
    %1409 = vmatprep.subr.mxu0 0.0
    %1410 = vmatpush1.xpose.msra.mxu0 0.0
    %1411 = vmatprep.subr.mxu0 0.0
    %1412 = vmatpush1.xpose.msra.mxu0 0.0
    %1413 = vmatprep.subr.mxu0 0.0
    %1414 = vmatpush1.xpose.msra.mxu0 0.0
    %1415 = vmatprep.subr.mxu0 0.0
    %1416 = vmatpush1.xpose.msra.mxu0 0.0
    %1417 = vmatprep.subr.mxu0 0.0
    %1418 = vmatpush1.xpose.msra.mxu0 0.0
    %1419 = vmatprep.subr.mxu0 0.0
    %1420 = vmatpush1.xpose.msra.mxu0 0.0
    %1421 = vmatprep.subr.mxu0 0.0
    %1422 = vmatpush1.xpose.msra.mxu0 0.0
    %1423 = vmatprep.subr.mxu0 0.0
    %1424 = vmatpush1.xpose.msra.mxu0 0.0
    %1425 = vmatprep.subr.mxu0 0.0
    %1426 = vmatpush1.xpose.msra.mxu0 0.0
    %1427 = vmatprep.subr.mxu0 0.0
    %1428 = vmatpush1.xpose.msra.mxu0 %v1395
    %1429 = vmatprep.subr.mxu0 0.0
    %1430 = vmatpush2.xpose.msra.mxu0 0.0
    %1431 = vmatprep.subr.mxu0 0.0
    %1432 = vmatpush2.xpose.msra.mxu0 0.0
    %1433 = vmatprep.subr.mxu0 0.0
    %1434 = vmatpush2.xpose.msra.mxu0 0.0
    %1435 = vmatprep.subr.mxu0 0.0
    %1436 = vmatpush2.xpose.msra.mxu0 0.0
    %1437 = vmatprep.subr.mxu0 0.0
    %1438 = vmatpush2.xpose.msra.mxu0 0.0
    %1439 = vmatprep.subr.mxu0 0.0
    %1440 = vmatpush2.xpose.msra.mxu0 0.0
    %1441 = vmatprep.subr.mxu0 0.0
    %1442 = vmatpush2.xpose.msra.mxu0 0.0
    %1443 = vmatprep.subr.mxu0 0.0
    %1444 = vmatpush2.xpose.msra.mxu0 0.0
    %1445 = vmatprep.subr.mxu0 0.0
    %1446 = vmatpush2.xpose.msra.mxu0 0.0
    %1447 = vmatprep.subr.mxu0 0.0
    %1448 = vmatpush2.xpose.msra.mxu0 0.0
    %1449 = vmatprep.subr.mxu0 0.0
    %1450 = vmatpush2.xpose.msra.mxu0 0.0
    %1451 = vmatprep.subr.mxu0 0.0
    %1452 = vmatpush2.xpose.msra.mxu0 0.0
    %1453 = vmatprep.subr.mxu0 0.0
    %1454 = vmatpush2.xpose.msra.mxu0 0.0
    %1455 = vmatprep.subr.mxu0 0.0
    %1456 = vmatpush2.xpose.msra.mxu0 0.0
    %1457 = vmatprep.subr.mxu0 0.0
    %1458 = vmatpush2.xpose.msra.mxu0 0.0
    %1459 = vmatprep.subr.mxu0 0.0
    %1460 = vmatpush2.xpose.msra.mxu0 0.0
    %1461 = vmatprep.mubr.f32.mxu0 0.0
    %1462 = vmatmul.mubr.f32.gmra.mxu0 %v1393
    %v1463 = vpop.f32.mrf.mxu0
    %v1464 = vadd.f32 %v893, %v1463
    %v1465 = vpop.f32.mrf.mxu0
    %1466 = vdwg.mxu0
    %v1467 = vsel %vm215, %v1464, -inf
    %1468 = vmax.xlane.f32.xlu0 %v1467
    %v1469 = vpop.xlane.xlu0 %1468
    %v1470 = vsub.f32 %v1464, %v1469
    %v1471 = vmul.f32 %v1470, 1.442695
    %v1472 = vpow.pop %v1471
    %v1473 = vsel %vm215, %v1472, 0.0
    %1474 = vadd.xlane.f32.xlu0 %v1473
    %v1475 = vpop.xlane.xlu0 %1474
    %v1476 = vrcp.pop %v1475
    %v1477 = vmul.f32 %v1472, %v1476
    %1478 = vrot.lane.b32.xlu0 %v203, 40
    %v1479 = vpop.permute.xlu0 %1478
    %v1482 = vsel %vm215, %v1477, 0
    %1484 = vmatprep.subr.mxu0 0.0
    %1485 = vmatpush1.msra.mxu0 0.0
    %1486 = vmatprep.subr.mxu0 0.0
    %1487 = vmatpush1.msra.mxu0 0.0
    %1488 = vmatprep.subr.mxu0 0.0
    %1489 = vmatpush1.msra.mxu0 0.0
    %1490 = vmatprep.subr.mxu0 0.0
    %1491 = vmatpush1.msra.mxu0 0.0
    %1492 = vmatprep.subr.mxu0 0.0
    %1493 = vmatpush1.msra.mxu0 0.0
    %1494 = vmatprep.subr.mxu0 0.0
    %1495 = vmatpush1.msra.mxu0 0.0
    %1496 = vmatprep.subr.mxu0 0.0
    %1497 = vmatpush1.msra.mxu0 0.0
    %1498 = vmatprep.subr.mxu0 0.0
    %1499 = vmatpush1.msra.mxu0 0.0
    %1500 = vmatprep.subr.mxu0 0.0
    %1501 = vmatpush1.msra.mxu0 0.0
    %1502 = vmatprep.subr.mxu0 0.0
    %1503 = vmatpush1.msra.mxu0 0.0
    %1504 = vmatprep.subr.mxu0 0.0
    %1505 = vmatpush1.msra.mxu0 0.0
    %1506 = vmatprep.subr.mxu0 0.0
    %1507 = vmatpush1.msra.mxu0 0.0
    %1508 = vmatprep.subr.mxu0 0.0
    %1509 = vmatpush1.msra.mxu0 0.0
    %1510 = vmatprep.subr.mxu0 0.0
    %1511 = vmatpush1.msra.mxu0 0.0
    %1512 = vmatprep.subr.mxu0 0.0
    %1513 = vmatpush1.msra.mxu0 0.0
    %1514 = vmatprep.subr.mxu0 0.0
    %1515 = vmatpush1.msra.mxu0 %v1479
    %1516 = vmatprep.subr.mxu0 0.0
    %1517 = vmatpush2.msra.mxu0 0.0
    %1518 = vmatprep.subr.mxu0 0.0
    %1519 = vmatpush2.msra.mxu0 0.0
    %1520 = vmatprep.subr.mxu0 0.0
    %1521 = vmatpush2.msra.mxu0 0.0
    %1522 = vmatprep.subr.mxu0 0.0
    %1523 = vmatpush2.msra.mxu0 0.0
    %1524 = vmatprep.subr.mxu0 0.0
    %1525 = vmatpush2.msra.mxu0 0.0
    %1526 = vmatprep.subr.mxu0 0.0
    %1527 = vmatpush2.msra.mxu0 0.0
    %1528 = vmatprep.subr.mxu0 0.0
    %1529 = vmatpush2.msra.mxu0 0.0
    %1530 = vmatprep.subr.mxu0 0.0
    %1531 = vmatpush2.msra.mxu0 0.0
    %1532 = vmatprep.subr.mxu0 0.0
    %1533 = vmatpush2.msra.mxu0 0.0
    %1534 = vmatprep.subr.mxu0 0.0
    %1535 = vmatpush2.msra.mxu0 0.0
    %1536 = vmatprep.subr.mxu0 0.0
    %1537 = vmatpush2.msra.mxu0 0.0
    %1538 = vmatprep.subr.mxu0 0.0
    %1539 = vmatpush2.msra.mxu0 0.0
    %1540 = vmatprep.subr.mxu0 0.0
    %1541 = vmatpush2.msra.mxu0 0.0
    %1542 = vmatprep.subr.mxu0 0.0
    %1543 = vmatpush2.msra.mxu0 0.0
    %1544 = vmatprep.subr.mxu0 0.0
    %1545 = vmatpush2.msra.mxu0 0.0
    %1546 = vmatprep.subr.mxu0 0.0
    %1547 = vmatpush2.msra.mxu0 0.0
    %1548 = vmatprep.mubr.f32.mxu0 0.0
    %1549 = vmatmul.mubr.f32.gmra.mxu0 %v1482
    %v1550 = vpop.f32.mrf.mxu0
    %v1551 = vadd.f32 0.0, %v1550
    %v1552 = vpop.f32.mrf.mxu0
    %1553 = vdwg.mxu0
    %1555 = vrot.lane.b32.xlu0 %v1221, 8
    %v1556 = vpop.permute.xlu0 %1555
    %1559 = vrot.lane.b32.xlu0 %v1386, 16
    %v1560 = vpop.permute.xlu0 %1559
    %1563 = vrot.lane.b32.xlu0 %v1551, 24
    %v1564 = vpop.permute.xlu0 %1563
    %v1566 = vsel %vm215, %v1056, %v1556
    %v1567 = vsel %vm886, %v1566, %v1560
    %v1568 = vsel %vm888, %v1567, %v1564
    %v1569 = vld [vmem:[%s6] sm:$0xff]
    %v1570 = vld [vmem:[%s6 + $0x8] sm:$0xff]
    %v1571 = vld [vmem:[%s6 + $0x10] sm:$0xff]
    %v1572 = vld [vmem:[%s6 + $0x18] sm:$0xff]
    %v1573 = vld [vmem:[%s7] sm:$0x1]
    %v1575 = vlaneseq
    %v1576 = vshrl.u32 %v1575, 7
    %v1577 = vsub.s32 0, %v1576
    %v1578 = vrot.slane %v1573, %v1577
    %v1581 = vsel %vm67, %v889, 0
    %v1584 = vsel %vm67, %v1568, 0
    %1586 = vmatprep.subr.mxu0 0.0
    %1587 = vmatpush1.msra.mxu0 0.0
    %1588 = vmatprep.subr.mxu0 0.0
    %1589 = vmatpush1.msra.mxu0 0.0
    %1590 = vmatprep.subr.mxu0 0.0
    %1591 = vmatpush1.msra.mxu0 0.0
    %1592 = vmatprep.subr.mxu0 0.0
    %1593 = vmatpush1.msra.mxu0 0.0
    %1594 = vmatprep.subr.mxu0 0.0
    %1595 = vmatpush1.msra.mxu0 0.0
    %1596 = vmatprep.subr.mxu0 0.0
    %1597 = vmatpush1.msra.mxu0 0.0
    %1598 = vmatprep.subr.mxu0 0.0
    %1599 = vmatpush1.msra.mxu0 0.0
    %1600 = vmatprep.subr.mxu0 0.0
    %1601 = vmatpush1.msra.mxu0 0.0
    %1602 = vmatprep.subr.mxu0 0.0
    %1603 = vmatpush1.msra.mxu0 0.0
    %1604 = vmatprep.subr.mxu0 0.0
    %1605 = vmatpush1.msra.mxu0 0.0
    %1606 = vmatprep.subr.mxu0 0.0
    %1607 = vmatpush1.msra.mxu0 0.0
    %1608 = vmatprep.subr.mxu0 0.0
    %1609 = vmatpush1.msra.mxu0 0.0
    %1610 = vmatprep.subr.mxu0 0.0
    %1611 = vmatpush1.msra.mxu0 %v1572
    %1612 = vmatprep.subr.mxu0 0.0
    %1613 = vmatpush1.msra.mxu0 %v1571
    %1614 = vmatprep.subr.mxu0 0.0
    %1615 = vmatpush1.msra.mxu0 %v1570
    %1616 = vmatprep.subr.mxu0 0.0
    %1617 = vmatpush1.msra.mxu0 %v1569
    %1618 = vmatprep.subr.mxu0 0.0
    %1619 = vmatpush2.msra.mxu0 0.0
    %1620 = vmatprep.subr.mxu0 0.0
    %1621 = vmatpush2.msra.mxu0 0.0
    %1622 = vmatprep.subr.mxu0 0.0
    %1623 = vmatpush2.msra.mxu0 0.0
    %1624 = vmatprep.subr.mxu0 0.0
    %1625 = vmatpush2.msra.mxu0 0.0
    %1626 = vmatprep.subr.mxu0 0.0
    %1627 = vmatpush2.msra.mxu0 0.0
    %1628 = vmatprep.subr.mxu0 0.0
    %1629 = vmatpush2.msra.mxu0 0.0
    %1630 = vmatprep.subr.mxu0 0.0
    %1631 = vmatpush2.msra.mxu0 0.0
    %1632 = vmatprep.subr.mxu0 0.0
    %1633 = vmatpush2.msra.mxu0 0.0
    %1634 = vmatprep.subr.mxu0 0.0
    %1635 = vmatpush2.msra.mxu0 0.0
    %1636 = vmatprep.subr.mxu0 0.0
    %1637 = vmatpush2.msra.mxu0 0.0
    %1638 = vmatprep.subr.mxu0 0.0
    %1639 = vmatpush2.msra.mxu0 0.0
    %1640 = vmatprep.subr.mxu0 0.0
    %1641 = vmatpush2.msra.mxu0 0.0
    %1642 = vmatprep.subr.mxu0 0.0
    %1643 = vmatpush2.msra.mxu0 0.0
    %1644 = vmatprep.subr.mxu0 0.0
    %1645 = vmatpush2.msra.mxu0 0.0
    %1646 = vmatprep.subr.mxu0 0.0
    %1647 = vmatpush2.msra.mxu0 0.0
    %1648 = vmatprep.subr.mxu0 0.0
    %1649 = vmatpush2.msra.mxu0 0.0
    %1650 = vmatprep.mubr.f32.mxu0 0.0
    %1651 = vmatmul.mubr.f32.gmra.mxu0 %v1581
    %v1652 = vpop.f32.mrf.mxu0
    %v1653 = vadd.f32 %v1578, %v1652
    %v1654 = vpop.f32.mrf.mxu0
    %1655 = vmatprep.mubr.f32.mxu0 0.0
    %1656 = vmatmul.mubr.f32.gmra.mxu0 %v1584
    %v1657 = vpop.f32.mrf.mxu0
    %v1658 = vadd.f32 %v1578, %v1657
    %v1659 = vpop.f32.mrf.mxu0
    %1660 = vdwg.mxu0
    %v1661 = vadd.f32 %v1653, %v109
    %v1662 = vadd.f32 %v1658, %v110
    %v1663 = vld [vmem:[%s8] sm:$0x1]
    %v1664 = vld [vmem:[%s9] sm:$0x1]
    %v1665 = vsel %vm67, %v1661, 0.0
    %1666 = vadd.xlane.f32.xlu0 %v1665
    %v1667 = vpop.xlane.xlu0 %1666
    %v1668 = vsel %vm67, %v1662, 0.0
    %1669 = vadd.xlane.f32.xlu0 %v1668
    %v1670 = vpop.xlane.xlu0 %1669
    %v1671 = vmul.f32 %v1667, %v74
    %v1672 = vmul.f32 %v1670, %v74
    %v1673 = vsub.f32 %v1661, %v1671
    %v1674 = vsub.f32 %v1662, %v1672
    %v1675 = vmul.f32 %v1673, %v1673
    %v1676 = vmul.f32 %v1674, %v1674
    %v1677 = vsel %vm67, %v1675, 0.0
    %1678 = vadd.xlane.f32.xlu0 %v1677
    %v1679 = vpop.xlane.xlu0 %1678
    %v1680 = vsel %vm67, %v1676, 0.0
    %1681 = vadd.xlane.f32.xlu0 %v1680
    %v1682 = vpop.xlane.xlu0 %1681
    %v1683 = vmul.f32 %v1679, %v74
    %v1684 = vmul.f32 %v1682, %v74
    %v1685 = vadd.f32 %v1683, 1e-12
    %v1686 = vadd.f32 %v1684, 1e-12
    %v1687 = vrsqrt.pop %v1685
    %v1688 = vrsqrt.pop %v1686
    %v1689 = vmul.f32 %v1673, %v1687
    %v1690 = vmul.f32 %v1674, %v1688
    %v1692 = vlaneseq
    %v1693 = vshrl.u32 %v1692, 7
    %v1694 = vsub.s32 0, %v1693
    %v1695 = vrot.slane %v1663, %v1694
    %v1697 = vmul.f32 %v1689, %v1695
    %v1698 = vmul.f32 %v1690, %v1695
    %v1700 = vlaneseq
    %v1701 = vshrl.u32 %v1700, 7
    %v1702 = vsub.s32 0, %v1701
    %v1703 = vrot.slane %v1664, %v1702
    %v1705 = vadd.f32 %v1697, %v1703
    %v1706 = vadd.f32 %v1698, %v1703
    %v1707 = vld [vmem:[%s10] sm:$0xff]
    %v1708 = vld [vmem:[%s10 + $0x8] sm:$0xff]
    %v1709 = vld [vmem:[%s10 + $0x10] sm:$0xff]
    %v1710 = vld [vmem:[%s10 + $0x18] sm:$0xff]
    %v1711 = vld [vmem:[%s11] sm:$0x1]
    %v1713 = vlaneseq
    %v1714 = vshrl.u32 %v1713, 7
    %v1715 = vsub.s32 0, %v1714
    %v1716 = vrot.slane %v1711, %v1715
    %v1719 = vsel %vm67, %v1705, 0
    %v1722 = vsel %vm67, %v1706, 0
    %1724 = vmatprep.subr.mxu0 0.0
    %1725 = vmatpush1.msra.mxu0 0.0
    %1726 = vmatprep.subr.mxu0 0.0
    %1727 = vmatpush1.msra.mxu0 0.0
    %1728 = vmatprep.subr.mxu0 0.0
    %1729 = vmatpush1.msra.mxu0 0.0
    %1730 = vmatprep.subr.mxu0 0.0
    %1731 = vmatpush1.msra.mxu0 0.0
    %1732 = vmatprep.subr.mxu0 0.0
    %1733 = vmatpush1.msra.mxu0 0.0
    %1734 = vmatprep.subr.mxu0 0.0
    %1735 = vmatpush1.msra.mxu0 0.0
    %1736 = vmatprep.subr.mxu0 0.0
    %1737 = vmatpush1.msra.mxu0 0.0
    %1738 = vmatprep.subr.mxu0 0.0
    %1739 = vmatpush1.msra.mxu0 0.0
    %1740 = vmatprep.subr.mxu0 0.0
    %1741 = vmatpush1.msra.mxu0 0.0
    %1742 = vmatprep.subr.mxu0 0.0
    %1743 = vmatpush1.msra.mxu0 0.0
    %1744 = vmatprep.subr.mxu0 0.0
    %1745 = vmatpush1.msra.mxu0 0.0
    %1746 = vmatprep.subr.mxu0 0.0
    %1747 = vmatpush1.msra.mxu0 0.0
    %1748 = vmatprep.subr.mxu0 0.0
    %1749 = vmatpush1.msra.mxu0 %v1710
    %1750 = vmatprep.subr.mxu0 0.0
    %1751 = vmatpush1.msra.mxu0 %v1709
    %1752 = vmatprep.subr.mxu0 0.0
    %1753 = vmatpush1.msra.mxu0 %v1708
    %1754 = vmatprep.subr.mxu0 0.0
    %1755 = vmatpush1.msra.mxu0 %v1707
    %1756 = vmatprep.subr.mxu0 0.0
    %1757 = vmatpush2.msra.mxu0 0.0
    %1758 = vmatprep.subr.mxu0 0.0
    %1759 = vmatpush2.msra.mxu0 0.0
    %1760 = vmatprep.subr.mxu0 0.0
    %1761 = vmatpush2.msra.mxu0 0.0
    %1762 = vmatprep.subr.mxu0 0.0
    %1763 = vmatpush2.msra.mxu0 0.0
    %1764 = vmatprep.subr.mxu0 0.0
    %1765 = vmatpush2.msra.mxu0 0.0
    %1766 = vmatprep.subr.mxu0 0.0
    %1767 = vmatpush2.msra.mxu0 0.0
    %1768 = vmatprep.subr.mxu0 0.0
    %1769 = vmatpush2.msra.mxu0 0.0
    %1770 = vmatprep.subr.mxu0 0.0
    %1771 = vmatpush2.msra.mxu0 0.0
    %1772 = vmatprep.subr.mxu0 0.0
    %1773 = vmatpush2.msra.mxu0 0.0
    %1774 = vmatprep.subr.mxu0 0.0
    %1775 = vmatpush2.msra.mxu0 0.0
    %1776 = vmatprep.subr.mxu0 0.0
    %1777 = vmatpush2.msra.mxu0 0.0
    %1778 = vmatprep.subr.mxu0 0.0
    %1779 = vmatpush2.msra.mxu0 0.0
    %1780 = vmatprep.subr.mxu0 0.0
    %1781 = vmatpush2.msra.mxu0 0.0
    %1782 = vmatprep.subr.mxu0 0.0
    %1783 = vmatpush2.msra.mxu0 0.0
    %1784 = vmatprep.subr.mxu0 0.0
    %1785 = vmatpush2.msra.mxu0 0.0
    %1786 = vmatprep.subr.mxu0 0.0
    %1787 = vmatpush2.msra.mxu0 0.0
    %1788 = vmatprep.mubr.f32.mxu0 0.0
    %1789 = vmatmul.mubr.f32.gmra.mxu0 %v1719
    %v1790 = vpop.f32.mrf.mxu0
    %v1791 = vadd.f32 %v1716, %v1790
    %v1792 = vpop.f32.mrf.mxu0
    %1793 = vmatprep.mubr.f32.mxu0 0.0
    %1794 = vmatmul.mubr.f32.gmra.mxu0 %v1722
    %v1795 = vpop.f32.mrf.mxu0
    %v1796 = vadd.f32 %v1716, %v1795
    %v1797 = vpop.f32.mrf.mxu0
    %1798 = vdwg.mxu0
    %v1799 = vmul.f32 %v1791, 0.5
    %v1800 = vmul.f32 %v1796, 0.5
    %v1801 = vmul.f32 %v1791, 0.044715
    %v1802 = vmul.f32 %v1796, 0.044715
    %v1803 = vmul.f32 %v1801, %v1791
    %v1804 = vmul.f32 %v1802, %v1796
    %v1805 = vmul.f32 %v1803, %v1791
    %v1806 = vmul.f32 %v1804, %v1796
    %v1807 = vadd.f32 %v1791, %v1805
    %v1808 = vadd.f32 %v1796, %v1806
    %v1809 = vmul.f32 %v1807, 0.7978846
    %v1810 = vmul.f32 %v1808, 0.7978846
    %v1811 = vtanh.pop %v1809
    %v1812 = vtanh.pop %v1810
    %v1813 = vadd.f32 %v1811, 1.0
    %v1814 = vadd.f32 %v1812, 1.0
    %v1815 = vmul.f32 %v1799, %v1813
    %v1816 = vmul.f32 %v1800, %v1814
    %v1817 = vld [vmem:[%s12] sm:$0xff]
    %v1818 = vld [vmem:[%s12 + $0x8] sm:$0xff]
    %v1819 = vld [vmem:[%s12 + $0x10] sm:$0xff]
    %v1820 = vld [vmem:[%s12 + $0x18] sm:$0xff]
    %v1821 = vld [vmem:[%s12 + $0x20] sm:$0xff]
    %v1822 = vld [vmem:[%s12 + $0x28] sm:$0xff]
    %v1823 = vld [vmem:[%s12 + $0x30] sm:$0xff]
    %v1824 = vld [vmem:[%s12 + $0x38] sm:$0xff]
    %v1825 = vld [vmem:[%s13] sm:$0x1]
    %v1827 = vlaneseq
    %v1828 = vshrl.u32 %v1827, 7
    %v1829 = vsub.s32 0, %v1828
    %v1830 = vrot.slane %v1825, %v1829
    %vm1832 = vcmask 523264
    %v1834 = vsel %vm1832, %v1815, 0
    %v1837 = vsel %vm1832, %v1816, 0
    %1839 = vmatprep.subr.mxu0 0.0
    %1840 = vmatpush1.msra.mxu0 0.0
    %1841 = vmatprep.subr.mxu0 0.0
    %1842 = vmatpush1.msra.mxu0 0.0
    %1843 = vmatprep.subr.mxu0 0.0
    %1844 = vmatpush1.msra.mxu0 0.0
    %1845 = vmatprep.subr.mxu0 0.0
    %1846 = vmatpush1.msra.mxu0 0.0
    %1847 = vmatprep.subr.mxu0 0.0
    %1848 = vmatpush1.msra.mxu0 0.0
    %1849 = vmatprep.subr.mxu0 0.0
    %1850 = vmatpush1.msra.mxu0 0.0
    %1851 = vmatprep.subr.mxu0 0.0
    %1852 = vmatpush1.msra.mxu0 0.0
    %1853 = vmatprep.subr.mxu0 0.0
    %1854 = vmatpush1.msra.mxu0 0.0
    %1855 = vmatprep.subr.mxu0 0.0
    %1856 = vmatpush1.msra.mxu0 %v1824
    %1857 = vmatprep.subr.mxu0 0.0
    %1858 = vmatpush1.msra.mxu0 %v1823
    %1859 = vmatprep.subr.mxu0 0.0
    %1860 = vmatpush1.msra.mxu0 %v1822
    %1861 = vmatprep.subr.mxu0 0.0
    %1862 = vmatpush1.msra.mxu0 %v1821
    %1863 = vmatprep.subr.mxu0 0.0
    %1864 = vmatpush1.msra.mxu0 %v1820
    %1865 = vmatprep.subr.mxu0 0.0
    %1866 = vmatpush1.msra.mxu0 %v1819
    %1867 = vmatprep.subr.mxu0 0.0
    %1868 = vmatpush1.msra.mxu0 %v1818
    %1869 = vmatprep.subr.mxu0 0.0
    %1870 = vmatpush1.msra.mxu0 %v1817
    %1871 = vmatprep.subr.mxu0 0.0
    %1872 = vmatpush2.msra.mxu0 0.0
    %1873 = vmatprep.subr.mxu0 0.0
    %1874 = vmatpush2.msra.mxu0 0.0
    %1875 = vmatprep.subr.mxu0 0.0
    %1876 = vmatpush2.msra.mxu0 0.0
    %1877 = vmatprep.subr.mxu0 0.0
    %1878 = vmatpush2.msra.mxu0 0.0
    %1879 = vmatprep.subr.mxu0 0.0
    %1880 = vmatpush2.msra.mxu0 0.0
    %1881 = vmatprep.subr.mxu0 0.0
    %1882 = vmatpush2.msra.mxu0 0.0
    %1883 = vmatprep.subr.mxu0 0.0
    %1884 = vmatpush2.msra.mxu0 0.0
    %1885 = vmatprep.subr.mxu0 0.0
    %1886 = vmatpush2.msra.mxu0 0.0
    %1887 = vmatprep.subr.mxu0 0.0
    %1888 = vmatpush2.msra.mxu0 0.0
    %1889 = vmatprep.subr.mxu0 0.0
    %1890 = vmatpush2.msra.mxu0 0.0
    %1891 = vmatprep.subr.mxu0 0.0
    %1892 = vmatpush2.msra.mxu0 0.0
    %1893 = vmatprep.subr.mxu0 0.0
    %1894 = vmatpush2.msra.mxu0 0.0
    %1895 = vmatprep.subr.mxu0 0.0
    %1896 = vmatpush2.msra.mxu0 0.0
    %1897 = vmatprep.subr.mxu0 0.0
    %1898 = vmatpush2.msra.mxu0 0.0
    %1899 = vmatprep.subr.mxu0 0.0
    %1900 = vmatpush2.msra.mxu0 0.0
    %1901 = vmatprep.subr.mxu0 0.0
    %1902 = vmatpush2.msra.mxu0 0.0
    %1903 = vmatprep.mubr.f32.mxu0 0.0
    %1904 = vmatmul.mubr.f32.gmra.mxu0 %v1834
    %v1905 = vpop.f32.mrf.mxu0
    %v1906 = vadd.f32 %v1830, %v1905
    %v1907 = vpop.f32.mrf.mxu0
    %1908 = vmatprep.mubr.f32.mxu0 0.0
    %1909 = vmatmul.mubr.f32.gmra.mxu0 %v1837
    %v1910 = vpop.f32.mrf.mxu0
    %v1911 = vadd.f32 %v1830, %v1910
    %v1912 = vpop.f32.mrf.mxu0
    %1913 = vdwg.mxu0
    %v1914 = vadd.f32 %v1906, %v1705
    %v1915 = vadd.f32 %v1911, %v1706
    %v1916 = vld [vmem:[%s14] sm:$0x1]
    %v1917 = vld [vmem:[%s15] sm:$0x1]
    %v1918 = vsel %vm67, %v1914, 0.0
    %1919 = vadd.xlane.f32.xlu0 %v1918
    %v1920 = vpop.xlane.xlu0 %1919
    %v1921 = vsel %vm67, %v1915, 0.0
    %1922 = vadd.xlane.f32.xlu0 %v1921
    %v1923 = vpop.xlane.xlu0 %1922
    %v1924 = vmul.f32 %v1920, %v74
    %v1925 = vmul.f32 %v1923, %v74
    %v1926 = vsub.f32 %v1914, %v1924
    %v1927 = vsub.f32 %v1915, %v1925
    %v1928 = vmul.f32 %v1926, %v1926
    %v1929 = vmul.f32 %v1927, %v1927
    %v1930 = vsel %vm67, %v1928, 0.0
    %1931 = vadd.xlane.f32.xlu0 %v1930
    %v1932 = vpop.xlane.xlu0 %1931
    %v1933 = vsel %vm67, %v1929, 0.0
    %1934 = vadd.xlane.f32.xlu0 %v1933
    %v1935 = vpop.xlane.xlu0 %1934
    %v1936 = vmul.f32 %v1932, %v74
    %v1937 = vmul.f32 %v1935, %v74
    %v1938 = vadd.f32 %v1936, 1e-12
    %v1939 = vadd.f32 %v1937, 1e-12
    %v1940 = vrsqrt.pop %v1938
    %v1941 = vrsqrt.pop %v1939
    %v1942 = vmul.f32 %v1926, %v1940
    %v1943 = vmul.f32 %v1927, %v1941
    %v1945 = vlaneseq
    %v1946 = vshrl.u32 %v1945, 7
    %v1947 = vsub.s32 0, %v1946
    %v1948 = vrot.slane %v1916, %v1947
    %v1950 = vmul.f32 %v1942, %v1948
    %v1951 = vmul.f32 %v1943, %v1948
    %v1953 = vlaneseq
    %v1954 = vshrl.u32 %v1953, 7
    %v1955 = vsub.s32 0, %v1954
    %v1956 = vrot.slane %v1917, %v1955
    %v1958 = vadd.f32 %v1950, %v1956
    %v1959 = vadd.f32 %v1951, %v1956
    %s1960 = scalar_lea.vmem %s4, 32
    %v1961 = vld [vmem:[%s1960] sm:$0xff]
    %v1962 = vld [vmem:[%s1960 + $0x8] sm:$0xff]
    %v1963 = vld [vmem:[%s1960 + $0x10] sm:$0xff]
    %v1964 = vld [vmem:[%s1960 + $0x18] sm:$0xff]
    %s1965 = scalar_lea.vmem %s5, 1
    %v1966 = vld [vmem:[%s1965] sm:$0x1]
    %v1968 = vlaneseq
    %v1969 = vshrl.u32 %v1968, 7
    %v1970 = vsub.s32 0, %v1969
    %v1971 = vrot.slane %v1966, %v1970
    %v1974 = vsel %vm67, %v1958, 0
    %v1977 = vsel %vm67, %v1959, 0
    %1979 = vmatprep.subr.mxu0 0.0
    %1980 = vmatpush1.msra.mxu0 0.0
    %1981 = vmatprep.subr.mxu0 0.0
    %1982 = vmatpush1.msra.mxu0 0.0
    %1983 = vmatprep.subr.mxu0 0.0
    %1984 = vmatpush1.msra.mxu0 0.0
    %1985 = vmatprep.subr.mxu0 0.0
    %1986 = vmatpush1.msra.mxu0 0.0
    %1987 = vmatprep.subr.mxu0 0.0
    %1988 = vmatpush1.msra.mxu0 0.0
    %1989 = vmatprep.subr.mxu0 0.0
    %1990 = vmatpush1.msra.mxu0 0.0
    %1991 = vmatprep.subr.mxu0 0.0
    %1992 = vmatpush1.msra.mxu0 0.0
    %1993 = vmatprep.subr.mxu0 0.0
    %1994 = vmatpush1.msra.mxu0 0.0
    %1995 = vmatprep.subr.mxu0 0.0
    %1996 = vmatpush1.msra.mxu0 0.0
    %1997 = vmatprep.subr.mxu0 0.0
    %1998 = vmatpush1.msra.mxu0 0.0
    %1999 = vmatprep.subr.mxu0 0.0
    %2000 = vmatpush1.msra.mxu0 0.0
    %2001 = vmatprep.subr.mxu0 0.0
    %2002 = vmatpush1.msra.mxu0 0.0
    %2003 = vmatprep.subr.mxu0 0.0
    %2004 = vmatpush1.msra.mxu0 %v1964
    %2005 = vmatprep.subr.mxu0 0.0
    %2006 = vmatpush1.msra.mxu0 %v1963
    %2007 = vmatprep.subr.mxu0 0.0
    %2008 = vmatpush1.msra.mxu0 %v1962
    %2009 = vmatprep.subr.mxu0 0.0
    %2010 = vmatpush1.msra.mxu0 %v1961
    %2011 = vmatprep.subr.mxu0 0.0
    %2012 = vmatpush2.msra.mxu0 0.0
    %2013 = vmatprep.subr.mxu0 0.0
    %2014 = vmatpush2.msra.mxu0 0.0
    %2015 = vmatprep.subr.mxu0 0.0
    %2016 = vmatpush2.msra.mxu0 0.0
    %2017 = vmatprep.subr.mxu0 0.0
    %2018 = vmatpush2.msra.mxu0 0.0
    %2019 = vmatprep.subr.mxu0 0.0
    %2020 = vmatpush2.msra.mxu0 0.0
    %2021 = vmatprep.subr.mxu0 0.0
    %2022 = vmatpush2.msra.mxu0 0.0
    %2023 = vmatprep.subr.mxu0 0.0
    %2024 = vmatpush2.msra.mxu0 0.0
    %2025 = vmatprep.subr.mxu0 0.0
    %2026 = vmatpush2.msra.mxu0 0.0
    %2027 = vmatprep.subr.mxu0 0.0
    %2028 = vmatpush2.msra.mxu0 0.0
    %2029 = vmatprep.subr.mxu0 0.0
    %2030 = vmatpush2.msra.mxu0 0.0
    %2031 = vmatprep.subr.mxu0 0.0
    %2032 = vmatpush2.msra.mxu0 0.0
    %2033 = vmatprep.subr.mxu0 0.0
    %2034 = vmatpush2.msra.mxu0 0.0
    %2035 = vmatprep.subr.mxu0 0.0
    %2036 = vmatpush2.msra.mxu0 0.0
    %2037 = vmatprep.subr.mxu0 0.0
    %2038 = vmatpush2.msra.mxu0 0.0
    %2039 = vmatprep.subr.mxu0 0.0
    %2040 = vmatpush2.msra.mxu0 0.0
    %2041 = vmatprep.subr.mxu0 0.0
    %2042 = vmatpush2.msra.mxu0 0.0
    %2043 = vmatprep.mubr.f32.mxu0 0.0
    %2044 = vmatmul.mubr.f32.gmra.mxu0 %v1974
    %v2045 = vpop.f32.mrf.mxu0
    %v2046 = vadd.f32 %v1971, %v2045
    %v2047 = vpop.f32.mrf.mxu0
    %2048 = vmatprep.mubr.f32.mxu0 0.0
    %2049 = vmatmul.mubr.f32.gmra.mxu0 %v1977
    %v2050 = vpop.f32.mrf.mxu0
    %v2051 = vadd.f32 %v1971, %v2050
    %v2052 = vpop.f32.mrf.mxu0
    %2053 = vdwg.mxu0
    %v2054 = vmul.f32 %v2046, 0.35355338
    %v2055 = vmul.f32 %v2051, 0.35355338
    %2057 = vrot.lane.b32.xlu0 %v2046, 96
    %v2058 = vpop.permute.xlu0 %2057
    %v2060 = vsel %vm215, %v2054, 0
    %v2062 = vsel %vm215, %v2058, 0
    %2064 = vmatprep.subr.mxu0 0.0
    %2065 = vmatpush1.xpose.msra.mxu0 0.0
    %2066 = vmatprep.subr.mxu0 0.0
    %2067 = vmatpush1.xpose.msra.mxu0 0.0
    %2068 = vmatprep.subr.mxu0 0.0
    %2069 = vmatpush1.xpose.msra.mxu0 0.0
    %2070 = vmatprep.subr.mxu0 0.0
    %2071 = vmatpush1.xpose.msra.mxu0 0.0
    %2072 = vmatprep.subr.mxu0 0.0
    %2073 = vmatpush1.xpose.msra.mxu0 0.0
    %2074 = vmatprep.subr.mxu0 0.0
    %2075 = vmatpush1.xpose.msra.mxu0 0.0
    %2076 = vmatprep.subr.mxu0 0.0
    %2077 = vmatpush1.xpose.msra.mxu0 0.0
    %2078 = vmatprep.subr.mxu0 0.0
    %2079 = vmatpush1.xpose.msra.mxu0 0.0
    %2080 = vmatprep.subr.mxu0 0.0
    %2081 = vmatpush1.xpose.msra.mxu0 0.0
    %2082 = vmatprep.subr.mxu0 0.0
    %2083 = vmatpush1.xpose.msra.mxu0 0.0
    %2084 = vmatprep.subr.mxu0 0.0
    %2085 = vmatpush1.xpose.msra.mxu0 0.0
    %2086 = vmatprep.subr.mxu0 0.0
    %2087 = vmatpush1.xpose.msra.mxu0 0.0
    %2088 = vmatprep.subr.mxu0 0.0
    %2089 = vmatpush1.xpose.msra.mxu0 0.0
    %2090 = vmatprep.subr.mxu0 0.0
    %2091 = vmatpush1.xpose.msra.mxu0 0.0
    %2092 = vmatprep.subr.mxu0 0.0
    %2093 = vmatpush1.xpose.msra.mxu0 0.0
    %2094 = vmatprep.subr.mxu0 0.0
    %2095 = vmatpush1.xpose.msra.mxu0 %v2062
    %2096 = vmatprep.subr.mxu0 0.0
    %2097 = vmatpush2.xpose.msra.mxu0 0.0
    %2098 = vmatprep.subr.mxu0 0.0
    %2099 = vmatpush2.xpose.msra.mxu0 0.0
    %2100 = vmatprep.subr.mxu0 0.0
    %2101 = vmatpush2.xpose.msra.mxu0 0.0
    %2102 = vmatprep.subr.mxu0 0.0
    %2103 = vmatpush2.xpose.msra.mxu0 0.0
    %2104 = vmatprep.subr.mxu0 0.0
    %2105 = vmatpush2.xpose.msra.mxu0 0.0
    %2106 = vmatprep.subr.mxu0 0.0
    %2107 = vmatpush2.xpose.msra.mxu0 0.0
    %2108 = vmatprep.subr.mxu0 0.0
    %2109 = vmatpush2.xpose.msra.mxu0 0.0
    %2110 = vmatprep.subr.mxu0 0.0
    %2111 = vmatpush2.xpose.msra.mxu0 0.0
    %2112 = vmatprep.subr.mxu0 0.0
    %2113 = vmatpush2.xpose.msra.mxu0 0.0
    %2114 = vmatprep.subr.mxu0 0.0
    %2115 = vmatpush2.xpose.msra.mxu0 0.0
    %2116 = vmatprep.subr.mxu0 0.0
    %2117 = vmatpush2.xpose.msra.mxu0 0.0
    %2118 = vmatprep.subr.mxu0 0.0
    %2119 = vmatpush2.xpose.msra.mxu0 0.0
    %2120 = vmatprep.subr.mxu0 0.0
    %2121 = vmatpush2.xpose.msra.mxu0 0.0
    %2122 = vmatprep.subr.mxu0 0.0
    %2123 = vmatpush2.xpose.msra.mxu0 0.0
    %2124 = vmatprep.subr.mxu0 0.0
    %2125 = vmatpush2.xpose.msra.mxu0 0.0
    %2126 = vmatprep.subr.mxu0 0.0
    %2127 = vmatpush2.xpose.msra.mxu0 0.0
    %2128 = vmatprep.mubr.f32.mxu0 0.0
    %2129 = vmatmul.mubr.f32.gmra.mxu0 %v2060
    %v2130 = vpop.f32.mrf.mxu0
    %v2131 = vadd.f32 %v211, %v2130
    %v2132 = vpop.f32.mrf.mxu0
    %2133 = vdwg.mxu0
    %v2134 = vsel %vm215, %v2131, -inf
    %2135 = vmax.xlane.f32.xlu0 %v2134
    %v2136 = vpop.xlane.xlu0 %2135
    %v2137 = vsub.f32 %v2131, %v2136
    %v2138 = vmul.f32 %v2137, 1.442695
    %v2139 = vpow.pop %v2138
    %v2140 = vsel %vm215, %v2139, 0.0
    %2141 = vadd.xlane.f32.xlu0 %v2140
    %v2142 = vpop.xlane.xlu0 %2141
    %v2143 = vrcp.pop %v2142
    %v2144 = vmul.f32 %v2139, %v2143
    %2145 = vrot.lane.b32.xlu0 %v2046, 64
    %v2146 = vpop.permute.xlu0 %2145
    %v2149 = vsel %vm215, %v2144, 0
    %2151 = vmatprep.subr.mxu0 0.0
    %2152 = vmatpush1.msra.mxu0 0.0
    %2153 = vmatprep.subr.mxu0 0.0
    %2154 = vmatpush1.msra.mxu0 0.0
    %2155 = vmatprep.subr.mxu0 0.0
    %2156 = vmatpush1.msra.mxu0 0.0
    %2157 = vmatprep.subr.mxu0 0.0
    %2158 = vmatpush1.msra.mxu0 0.0
    %2159 = vmatprep.subr.mxu0 0.0
    %2160 = vmatpush1.msra.mxu0 0.0
    %2161 = vmatprep.subr.mxu0 0.0
    %2162 = vmatpush1.msra.mxu0 0.0
    %2163 = vmatprep.subr.mxu0 0.0
    %2164 = vmatpush1.msra.mxu0 0.0
    %2165 = vmatprep.subr.mxu0 0.0
    %2166 = vmatpush1.msra.mxu0 0.0
    %2167 = vmatprep.subr.mxu0 0.0
    %2168 = vmatpush1.msra.mxu0 0.0
    %2169 = vmatprep.subr.mxu0 0.0
    %2170 = vmatpush1.msra.mxu0 0.0
    %2171 = vmatprep.subr.mxu0 0.0
    %2172 = vmatpush1.msra.mxu0 0.0
    %2173 = vmatprep.subr.mxu0 0.0
    %2174 = vmatpush1.msra.mxu0 0.0
    %2175 = vmatprep.subr.mxu0 0.0
    %2176 = vmatpush1.msra.mxu0 0.0
    %2177 = vmatprep.subr.mxu0 0.0
    %2178 = vmatpush1.msra.mxu0 0.0
    %2179 = vmatprep.subr.mxu0 0.0
    %2180 = vmatpush1.msra.mxu0 0.0
    %2181 = vmatprep.subr.mxu0 0.0
    %2182 = vmatpush1.msra.mxu0 %v2146
    %2183 = vmatprep.subr.mxu0 0.0
    %2184 = vmatpush2.msra.mxu0 0.0
    %2185 = vmatprep.subr.mxu0 0.0
    %2186 = vmatpush2.msra.mxu0 0.0
    %2187 = vmatprep.subr.mxu0 0.0
    %2188 = vmatpush2.msra.mxu0 0.0
    %2189 = vmatprep.subr.mxu0 0.0
    %2190 = vmatpush2.msra.mxu0 0.0
    %2191 = vmatprep.subr.mxu0 0.0
    %2192 = vmatpush2.msra.mxu0 0.0
    %2193 = vmatprep.subr.mxu0 0.0
    %2194 = vmatpush2.msra.mxu0 0.0
    %2195 = vmatprep.subr.mxu0 0.0
    %2196 = vmatpush2.msra.mxu0 0.0
    %2197 = vmatprep.subr.mxu0 0.0
    %2198 = vmatpush2.msra.mxu0 0.0
    %2199 = vmatprep.subr.mxu0 0.0
    %2200 = vmatpush2.msra.mxu0 0.0
    %2201 = vmatprep.subr.mxu0 0.0
    %2202 = vmatpush2.msra.mxu0 0.0
    %2203 = vmatprep.subr.mxu0 0.0
    %2204 = vmatpush2.msra.mxu0 0.0
    %2205 = vmatprep.subr.mxu0 0.0
    %2206 = vmatpush2.msra.mxu0 0.0
    %2207 = vmatprep.subr.mxu0 0.0
    %2208 = vmatpush2.msra.mxu0 0.0
    %2209 = vmatprep.subr.mxu0 0.0
    %2210 = vmatpush2.msra.mxu0 0.0
    %2211 = vmatprep.subr.mxu0 0.0
    %2212 = vmatpush2.msra.mxu0 0.0
    %2213 = vmatprep.subr.mxu0 0.0
    %2214 = vmatpush2.msra.mxu0 0.0
    %2215 = vmatprep.mubr.f32.mxu0 0.0
    %2216 = vmatmul.mubr.f32.gmra.mxu0 %v2149
    %v2217 = vpop.f32.mrf.mxu0
    %v2218 = vadd.f32 0.0, %v2217
    %v2219 = vpop.f32.mrf.mxu0
    %2220 = vdwg.mxu0
    %2221 = vrot.lane.b32.xlu0 %v2054, 120
    %v2222 = vpop.permute.xlu0 %2221
    %2223 = vrot.lane.b32.xlu0 %v2046, 88
    %v2224 = vpop.permute.xlu0 %2223
    %v2225 = vsel %vm215, %v2222, 0
    %v2227 = vsel %vm215, %v2224, 0
    %2229 = vmatprep.subr.mxu0 0.0
    %2230 = vmatpush1.xpose.msra.mxu0 0.0
    %2231 = vmatprep.subr.mxu0 0.0
    %2232 = vmatpush1.xpose.msra.mxu0 0.0
    %2233 = vmatprep.subr.mxu0 0.0
    %2234 = vmatpush1.xpose.msra.mxu0 0.0
    %2235 = vmatprep.subr.mxu0 0.0
    %2236 = vmatpush1.xpose.msra.mxu0 0.0
    %2237 = vmatprep.subr.mxu0 0.0
    %2238 = vmatpush1.xpose.msra.mxu0 0.0
    %2239 = vmatprep.subr.mxu0 0.0
    %2240 = vmatpush1.xpose.msra.mxu0 0.0
    %2241 = vmatprep.subr.mxu0 0.0
    %2242 = vmatpush1.xpose.msra.mxu0 0.0
    %2243 = vmatprep.subr.mxu0 0.0
    %2244 = vmatpush1.xpose.msra.mxu0 0.0
    %2245 = vmatprep.subr.mxu0 0.0
    %2246 = vmatpush1.xpose.msra.mxu0 0.0
    %2247 = vmatprep.subr.mxu0 0.0
    %2248 = vmatpush1.xpose.msra.mxu0 0.0
    %2249 = vmatprep.subr.mxu0 0.0
    %2250 = vmatpush1.xpose.msra.mxu0 0.0
    %2251 = vmatprep.subr.mxu0 0.0
    %2252 = vmatpush1.xpose.msra.mxu0 0.0
    %2253 = vmatprep.subr.mxu0 0.0
    %2254 = vmatpush1.xpose.msra.mxu0 0.0
    %2255 = vmatprep.subr.mxu0 0.0
    %2256 = vmatpush1.xpose.msra.mxu0 0.0
    %2257 = vmatprep.subr.mxu0 0.0
    %2258 = vmatpush1.xpose.msra.mxu0 0.0
    %2259 = vmatprep.subr.mxu0 0.0
    %2260 = vmatpush1.xpose.msra.mxu0 %v2227
    %2261 = vmatprep.subr.mxu0 0.0
    %2262 = vmatpush2.xpose.msra.mxu0 0.0
    %2263 = vmatprep.subr.mxu0 0.0
    %2264 = vmatpush2.xpose.msra.mxu0 0.0
    %2265 = vmatprep.subr.mxu0 0.0
    %2266 = vmatpush2.xpose.msra.mxu0 0.0
    %2267 = vmatprep.subr.mxu0 0.0
    %2268 = vmatpush2.xpose.msra.mxu0 0.0
    %2269 = vmatprep.subr.mxu0 0.0
    %2270 = vmatpush2.xpose.msra.mxu0 0.0
    %2271 = vmatprep.subr.mxu0 0.0
    %2272 = vmatpush2.xpose.msra.mxu0 0.0
    %2273 = vmatprep.subr.mxu0 0.0
    %2274 = vmatpush2.xpose.msra.mxu0 0.0
    %2275 = vmatprep.subr.mxu0 0.0
    %2276 = vmatpush2.xpose.msra.mxu0 0.0
    %2277 = vmatprep.subr.mxu0 0.0
    %2278 = vmatpush2.xpose.msra.mxu0 0.0
    %2279 = vmatprep.subr.mxu0 0.0
    %2280 = vmatpush2.xpose.msra.mxu0 0.0
    %2281 = vmatprep.subr.mxu0 0.0
    %2282 = vmatpush2.xpose.msra.mxu0 0.0
    %2283 = vmatprep.subr.mxu0 0.0
    %2284 = vmatpush2.xpose.msra.mxu0 0.0
    %2285 = vmatprep.subr.mxu0 0.0
    %2286 = vmatpush2.xpose.msra.mxu0 0.0
    %2287 = vmatprep.subr.mxu0 0.0
    %2288 = vmatpush2.xpose.msra.mxu0 0.0
    %2289 = vmatprep.subr.mxu0 0.0
    %2290 = vmatpush2.xpose.msra.mxu0 0.0
    %2291 = vmatprep.subr.mxu0 0.0
    %2292 = vmatpush2.xpose.msra.mxu0 0.0
    %2293 = vmatprep.mubr.f32.mxu0 0.0
    %2294 = vmatmul.mubr.f32.gmra.mxu0 %v2225
    %v2295 = vpop.f32.mrf.mxu0
    %v2296 = vadd.f32 %v211, %v2295
    %v2297 = vpop.f32.mrf.mxu0
    %2298 = vdwg.mxu0
    %v2299 = vsel %vm215, %v2296, -inf
    %2300 = vmax.xlane.f32.xlu0 %v2299
    %v2301 = vpop.xlane.xlu0 %2300
    %v2302 = vsub.f32 %v2296, %v2301
    %v2303 = vmul.f32 %v2302, 1.442695
    %v2304 = vpow.pop %v2303
    %v2305 = vsel %vm215, %v2304, 0.0
    %2306 = vadd.xlane.f32.xlu0 %v2305
    %v2307 = vpop.xlane.xlu0 %2306
    %v2308 = vrcp.pop %v2307
    %v2309 = vmul.f32 %v2304, %v2308
    %2310 = vrot.lane.b32.xlu0 %v2046, 56
    %v2311 = vpop.permute.xlu0 %2310
    %v2314 = vsel %vm215, %v2309, 0
    %2316 = vmatprep.subr.mxu0 0.0
    %2317 = vmatpush1.msra.mxu0 0.0
    %2318 = vmatprep.subr.mxu0 0.0
    %2319 = vmatpush1.msra.mxu0 0.0
    %2320 = vmatprep.subr.mxu0 0.0
    %2321 = vmatpush1.msra.mxu0 0.0
    %2322 = vmatprep.subr.mxu0 0.0
    %2323 = vmatpush1.msra.mxu0 0.0
    %2324 = vmatprep.subr.mxu0 0.0
    %2325 = vmatpush1.msra.mxu0 0.0
    %2326 = vmatprep.subr.mxu0 0.0
    %2327 = vmatpush1.msra.mxu0 0.0
    %2328 = vmatprep.subr.mxu0 0.0
    %2329 = vmatpush1.msra.mxu0 0.0
    %2330 = vmatprep.subr.mxu0 0.0
    %2331 = vmatpush1.msra.mxu0 0.0
    %2332 = vmatprep.subr.mxu0 0.0
    %2333 = vmatpush1.msra.mxu0 0.0
    %2334 = vmatprep.subr.mxu0 0.0
    %2335 = vmatpush1.msra.mxu0 0.0
    %2336 = vmatprep.subr.mxu0 0.0
    %2337 = vmatpush1.msra.mxu0 0.0
    %2338 = vmatprep.subr.mxu0 0.0
    %2339 = vmatpush1.msra.mxu0 0.0
    %2340 = vmatprep.subr.mxu0 0.0
    %2341 = vmatpush1.msra.mxu0 0.0
    %2342 = vmatprep.subr.mxu0 0.0
    %2343 = vmatpush1.msra.mxu0 0.0
    %2344 = vmatprep.subr.mxu0 0.0
    %2345 = vmatpush1.msra.mxu0 0.0
    %2346 = vmatprep.subr.mxu0 0.0
    %2347 = vmatpush1.msra.mxu0 %v2311
    %2348 = vmatprep.subr.mxu0 0.0
    %2349 = vmatpush2.msra.mxu0 0.0
    %2350 = vmatprep.subr.mxu0 0.0
    %2351 = vmatpush2.msra.mxu0 0.0
    %2352 = vmatprep.subr.mxu0 0.0
    %2353 = vmatpush2.msra.mxu0 0.0
    %2354 = vmatprep.subr.mxu0 0.0
    %2355 = vmatpush2.msra.mxu0 0.0
    %2356 = vmatprep.subr.mxu0 0.0
    %2357 = vmatpush2.msra.mxu0 0.0
    %2358 = vmatprep.subr.mxu0 0.0
    %2359 = vmatpush2.msra.mxu0 0.0
    %2360 = vmatprep.subr.mxu0 0.0
    %2361 = vmatpush2.msra.mxu0 0.0
    %2362 = vmatprep.subr.mxu0 0.0
    %2363 = vmatpush2.msra.mxu0 0.0
    %2364 = vmatprep.subr.mxu0 0.0
    %2365 = vmatpush2.msra.mxu0 0.0
    %2366 = vmatprep.subr.mxu0 0.0
    %2367 = vmatpush2.msra.mxu0 0.0
    %2368 = vmatprep.subr.mxu0 0.0
    %2369 = vmatpush2.msra.mxu0 0.0
    %2370 = vmatprep.subr.mxu0 0.0
    %2371 = vmatpush2.msra.mxu0 0.0
    %2372 = vmatprep.subr.mxu0 0.0
    %2373 = vmatpush2.msra.mxu0 0.0
    %2374 = vmatprep.subr.mxu0 0.0
    %2375 = vmatpush2.msra.mxu0 0.0
    %2376 = vmatprep.subr.mxu0 0.0
    %2377 = vmatpush2.msra.mxu0 0.0
    %2378 = vmatprep.subr.mxu0 0.0
    %2379 = vmatpush2.msra.mxu0 0.0
    %2380 = vmatprep.mubr.f32.mxu0 0.0
    %2381 = vmatmul.mubr.f32.gmra.mxu0 %v2314
    %v2382 = vpop.f32.mrf.mxu0
    %v2383 = vadd.f32 0.0, %v2382
    %v2384 = vpop.f32.mrf.mxu0
    %2385 = vdwg.mxu0
    %2386 = vrot.lane.b32.xlu0 %v2054, 112
    %v2387 = vpop.permute.xlu0 %2386
    %2388 = vrot.lane.b32.xlu0 %v2046, 80
    %v2389 = vpop.permute.xlu0 %2388
    %v2390 = vsel %vm215, %v2387, 0
    %v2392 = vsel %vm215, %v2389, 0
    %2394 = vmatprep.subr.mxu0 0.0
    %2395 = vmatpush1.xpose.msra.mxu0 0.0
    %2396 = vmatprep.subr.mxu0 0.0
    %2397 = vmatpush1.xpose.msra.mxu0 0.0
    %2398 = vmatprep.subr.mxu0 0.0
    %2399 = vmatpush1.xpose.msra.mxu0 0.0
    %2400 = vmatprep.subr.mxu0 0.0
    %2401 = vmatpush1.xpose.msra.mxu0 0.0
    %2402 = vmatprep.subr.mxu0 0.0
    %2403 = vmatpush1.xpose.msra.mxu0 0.0
    %2404 = vmatprep.subr.mxu0 0.0
    %2405 = vmatpush1.xpose.msra.mxu0 0.0
    %2406 = vmatprep.subr.mxu0 0.0
    %2407 = vmatpush1.xpose.msra.mxu0 0.0
    %2408 = vmatprep.subr.mxu0 0.0
    %2409 = vmatpush1.xpose.msra.mxu0 0.0
    %2410 = vmatprep.subr.mxu0 0.0
    %2411 = vmatpush1.xpose.msra.mxu0 0.0
    %2412 = vmatprep.subr.mxu0 0.0
    %2413 = vmatpush1.xpose.msra.mxu0 0.0
    %2414 = vmatprep.subr.mxu0 0.0
    %2415 = vmatpush1.xpose.msra.mxu0 0.0
    %2416 = vmatprep.subr.mxu0 0.0
    %2417 = vmatpush1.xpose.msra.mxu0 0.0
    %2418 = vmatprep.subr.mxu0 0.0
    %2419 = vmatpush1.xpose.msra.mxu0 0.0
    %2420 = vmatprep.subr.mxu0 0.0
    %2421 = vmatpush1.xpose.msra.mxu0 0.0
    %2422 = vmatprep.subr.mxu0 0.0
    %2423 = vmatpush1.xpose.msra.mxu0 0.0
    %2424 = vmatprep.subr.mxu0 0.0
    %2425 = vmatpush1.xpose.msra.mxu0 %v2392
    %2426 = vmatprep.subr.mxu0 0.0
    %2427 = vmatpush2.xpose.msra.mxu0 0.0
    %2428 = vmatprep.subr.mxu0 0.0
    %2429 = vmatpush2.xpose.msra.mxu0 0.0
    %2430 = vmatprep.subr.mxu0 0.0
    %2431 = vmatpush2.xpose.msra.mxu0 0.0
    %2432 = vmatprep.subr.mxu0 0.0
    %2433 = vmatpush2.xpose.msra.mxu0 0.0
    %2434 = vmatprep.subr.mxu0 0.0
    %2435 = vmatpush2.xpose.msra.mxu0 0.0
    %2436 = vmatprep.subr.mxu0 0.0
    %2437 = vmatpush2.xpose.msra.mxu0 0.0
    %2438 = vmatprep.subr.mxu0 0.0
    %2439 = vmatpush2.xpose.msra.mxu0 0.0
    %2440 = vmatprep.subr.mxu0 0.0
    %2441 = vmatpush2.xpose.msra.mxu0 0.0
    %2442 = vmatprep.subr.mxu0 0.0
    %2443 = vmatpush2.xpose.msra.mxu0 0.0
    %2444 = vmatprep.subr.mxu0 0.0
    %2445 = vmatpush2.xpose.msra.mxu0 0.0
    %2446 = vmatprep.subr.mxu0 0.0
    %2447 = vmatpush2.xpose.msra.mxu0 0.0
    %2448 = vmatprep.subr.mxu0 0.0
    %2449 = vmatpush2.xpose.msra.mxu0 0.0
    %2450 = vmatprep.subr.mxu0 0.0
    %2451 = vmatpush2.xpose.msra.mxu0 0.0
    %2452 = vmatprep.subr.mxu0 0.0
    %2453 = vmatpush2.xpose.msra.mxu0 0.0
    %2454 = vmatprep.subr.mxu0 0.0
    %2455 = vmatpush2.xpose.msra.mxu0 0.0
    %2456 = vmatprep.subr.mxu0 0.0
    %2457 = vmatpush2.xpose.msra.mxu0 0.0
    %2458 = vmatprep.mubr.f32.mxu0 0.0
    %2459 = vmatmul.mubr.f32.gmra.mxu0 %v2390
    %v2460 = vpop.f32.mrf.mxu0
    %v2461 = vadd.f32 %v211, %v2460
    %v2462 = vpop.f32.mrf.mxu0
    %2463 = vdwg.mxu0
    %v2464 = vsel %vm215, %v2461, -inf
    %2465 = vmax.xlane.f32.xlu0 %v2464
    %v2466 = vpop.xlane.xlu0 %2465
    %v2467 = vsub.f32 %v2461, %v2466
    %v2468 = vmul.f32 %v2467, 1.442695
    %v2469 = vpow.pop %v2468
    %v2470 = vsel %vm215, %v2469, 0.0
    %2471 = vadd.xlane.f32.xlu0 %v2470
    %v2472 = vpop.xlane.xlu0 %2471
    %v2473 = vrcp.pop %v2472
    %v2474 = vmul.f32 %v2469, %v2473
    %2475 = vrot.lane.b32.xlu0 %v2046, 48
    %v2476 = vpop.permute.xlu0 %2475
    %v2479 = vsel %vm215, %v2474, 0
    %2481 = vmatprep.subr.mxu0 0.0
    %2482 = vmatpush1.msra.mxu0 0.0
    %2483 = vmatprep.subr.mxu0 0.0
    %2484 = vmatpush1.msra.mxu0 0.0
    %2485 = vmatprep.subr.mxu0 0.0
    %2486 = vmatpush1.msra.mxu0 0.0
    %2487 = vmatprep.subr.mxu0 0.0
    %2488 = vmatpush1.msra.mxu0 0.0
    %2489 = vmatprep.subr.mxu0 0.0
    %2490 = vmatpush1.msra.mxu0 0.0
    %2491 = vmatprep.subr.mxu0 0.0
    %2492 = vmatpush1.msra.mxu0 0.0
    %2493 = vmatprep.subr.mxu0 0.0
    %2494 = vmatpush1.msra.mxu0 0.0
    %2495 = vmatprep.subr.mxu0 0.0
    %2496 = vmatpush1.msra.mxu0 0.0
    %2497 = vmatprep.subr.mxu0 0.0
    %2498 = vmatpush1.msra.mxu0 0.0
    %2499 = vmatprep.subr.mxu0 0.0
    %2500 = vmatpush1.msra.mxu0 0.0
    %2501 = vmatprep.subr.mxu0 0.0
    %2502 = vmatpush1.msra.mxu0 0.0
    %2503 = vmatprep.subr.mxu0 0.0
    %2504 = vmatpush1.msra.mxu0 0.0
    %2505 = vmatprep.subr.mxu0 0.0
    %2506 = vmatpush1.msra.mxu0 0.0
    %2507 = vmatprep.subr.mxu0 0.0
    %2508 = vmatpush1.msra.mxu0 0.0
    %2509 = vmatprep.subr.mxu0 0.0
    %2510 = vmatpush1.msra.mxu0 0.0
    %2511 = vmatprep.subr.mxu0 0.0
    %2512 = vmatpush1.msra.mxu0 %v2476
    %2513 = vmatprep.subr.mxu0 0.0
    %2514 = vmatpush2.msra.mxu0 0.0
    %2515 = vmatprep.subr.mxu0 0.0
    %2516 = vmatpush2.msra.mxu0 0.0
    %2517 = vmatprep.subr.mxu0 0.0
    %2518 = vmatpush2.msra.mxu0 0.0
    %2519 = vmatprep.subr.mxu0 0.0
    %2520 = vmatpush2.msra.mxu0 0.0
    %2521 = vmatprep.subr.mxu0 0.0
    %2522 = vmatpush2.msra.mxu0 0.0
    %2523 = vmatprep.subr.mxu0 0.0
    %2524 = vmatpush2.msra.mxu0 0.0
    %2525 = vmatprep.subr.mxu0 0.0
    %2526 = vmatpush2.msra.mxu0 0.0
    %2527 = vmatprep.subr.mxu0 0.0
    %2528 = vmatpush2.msra.mxu0 0.0
    %2529 = vmatprep.subr.mxu0 0.0
    %2530 = vmatpush2.msra.mxu0 0.0
    %2531 = vmatprep.subr.mxu0 0.0
    %2532 = vmatpush2.msra.mxu0 0.0
    %2533 = vmatprep.subr.mxu0 0.0
    %2534 = vmatpush2.msra.mxu0 0.0
    %2535 = vmatprep.subr.mxu0 0.0
    %2536 = vmatpush2.msra.mxu0 0.0
    %2537 = vmatprep.subr.mxu0 0.0
    %2538 = vmatpush2.msra.mxu0 0.0
    %2539 = vmatprep.subr.mxu0 0.0
    %2540 = vmatpush2.msra.mxu0 0.0
    %2541 = vmatprep.subr.mxu0 0.0
    %2542 = vmatpush2.msra.mxu0 0.0
    %2543 = vmatprep.subr.mxu0 0.0
    %2544 = vmatpush2.msra.mxu0 0.0
    %2545 = vmatprep.mubr.f32.mxu0 0.0
    %2546 = vmatmul.mubr.f32.gmra.mxu0 %v2479
    %v2547 = vpop.f32.mrf.mxu0
    %v2548 = vadd.f32 0.0, %v2547
    %v2549 = vpop.f32.mrf.mxu0
    %2550 = vdwg.mxu0
    %2551 = vrot.lane.b32.xlu0 %v2054, 104
    %v2552 = vpop.permute.xlu0 %2551
    %2553 = vrot.lane.b32.xlu0 %v2046, 72
    %v2554 = vpop.permute.xlu0 %2553
    %v2555 = vsel %vm215, %v2552, 0
    %v2557 = vsel %vm215, %v2554, 0
    %2559 = vmatprep.subr.mxu0 0.0
    %2560 = vmatpush1.xpose.msra.mxu0 0.0
    %2561 = vmatprep.subr.mxu0 0.0
    %2562 = vmatpush1.xpose.msra.mxu0 0.0
    %2563 = vmatprep.subr.mxu0 0.0
    %2564 = vmatpush1.xpose.msra.mxu0 0.0
    %2565 = vmatprep.subr.mxu0 0.0
    %2566 = vmatpush1.xpose.msra.mxu0 0.0
    %2567 = vmatprep.subr.mxu0 0.0
    %2568 = vmatpush1.xpose.msra.mxu0 0.0
    %2569 = vmatprep.subr.mxu0 0.0
    %2570 = vmatpush1.xpose.msra.mxu0 0.0
    %2571 = vmatprep.subr.mxu0 0.0
    %2572 = vmatpush1.xpose.msra.mxu0 0.0
    %2573 = vmatprep.subr.mxu0 0.0
    %2574 = vmatpush1.xpose.msra.mxu0 0.0
    %2575 = vmatprep.subr.mxu0 0.0
    %2576 = vmatpush1.xpose.msra.mxu0 0.0
    %2577 = vmatprep.subr.mxu0 0.0
    %2578 = vmatpush1.xpose.msra.mxu0 0.0
    %2579 = vmatprep.subr.mxu0 0.0
    %2580 = vmatpush1.xpose.msra.mxu0 0.0
    %2581 = vmatprep.subr.mxu0 0.0
    %2582 = vmatpush1.xpose.msra.mxu0 0.0
    %2583 = vmatprep.subr.mxu0 0.0
    %2584 = vmatpush1.xpose.msra.mxu0 0.0
    %2585 = vmatprep.subr.mxu0 0.0
    %2586 = vmatpush1.xpose.msra.mxu0 0.0
    %2587 = vmatprep.subr.mxu0 0.0
    %2588 = vmatpush1.xpose.msra.mxu0 0.0
    %2589 = vmatprep.subr.mxu0 0.0
    %2590 = vmatpush1.xpose.msra.mxu0 %v2557
    %2591 = vmatprep.subr.mxu0 0.0
    %2592 = vmatpush2.xpose.msra.mxu0 0.0
    %2593 = vmatprep.subr.mxu0 0.0
    %2594 = vmatpush2.xpose.msra.mxu0 0.0
    %2595 = vmatprep.subr.mxu0 0.0
    %2596 = vmatpush2.xpose.msra.mxu0 0.0
    %2597 = vmatprep.subr.mxu0 0.0
    %2598 = vmatpush2.xpose.msra.mxu0 0.0
    %2599 = vmatprep.subr.mxu0 0.0
    %2600 = vmatpush2.xpose.msra.mxu0 0.0
    %2601 = vmatprep.subr.mxu0 0.0
    %2602 = vmatpush2.xpose.msra.mxu0 0.0
    %2603 = vmatprep.subr.mxu0 0.0
    %2604 = vmatpush2.xpose.msra.mxu0 0.0
    %2605 = vmatprep.subr.mxu0 0.0
    %2606 = vmatpush2.xpose.msra.mxu0 0.0
    %2607 = vmatprep.subr.mxu0 0.0
    %2608 = vmatpush2.xpose.msra.mxu0 0.0
    %2609 = vmatprep.subr.mxu0 0.0
    %2610 = vmatpush2.xpose.msra.mxu0 0.0
    %2611 = vmatprep.subr.mxu0 0.0
    %2612 = vmatpush2.xpose.msra.mxu0 0.0
    %2613 = vmatprep.subr.mxu0 0.0
    %2614 = vmatpush2.xpose.msra.mxu0 0.0
    %2615 = vmatprep.subr.mxu0 0.0
    %2616 = vmatpush2.xpose.msra.mxu0 0.0
    %2617 = vmatprep.subr.mxu0 0.0
    %2618 = vmatpush2.xpose.msra.mxu0 0.0
    %2619 = vmatprep.subr.mxu0 0.0
    %2620 = vmatpush2.xpose.msra.mxu0 0.0
    %2621 = vmatprep.subr.mxu0 0.0
    %2622 = vmatpush2.xpose.msra.mxu0 0.0
    %2623 = vmatprep.mubr.f32.mxu0 0.0
    %2624 = vmatmul.mubr.f32.gmra.mxu0 %v2555
    %v2625 = vpop.f32.mrf.mxu0
    %v2626 = vadd.f32 %v211, %v2625
    %v2627 = vpop.f32.mrf.mxu0
    %2628 = vdwg.mxu0
    %v2629 = vsel %vm215, %v2626, -inf
    %2630 = vmax.xlane.f32.xlu0 %v2629
    %v2631 = vpop.xlane.xlu0 %2630
    %v2632 = vsub.f32 %v2626, %v2631
    %v2633 = vmul.f32 %v2632, 1.442695
    %v2634 = vpow.pop %v2633
    %v2635 = vsel %vm215, %v2634, 0.0
    %2636 = vadd.xlane.f32.xlu0 %v2635
    %v2637 = vpop.xlane.xlu0 %2636
    %v2638 = vrcp.pop %v2637
    %v2639 = vmul.f32 %v2634, %v2638
    %2640 = vrot.lane.b32.xlu0 %v2046, 40
    %v2641 = vpop.permute.xlu0 %2640
    %v2644 = vsel %vm215, %v2639, 0
    %2646 = vmatprep.subr.mxu0 0.0
    %2647 = vmatpush1.msra.mxu0 0.0
    %2648 = vmatprep.subr.mxu0 0.0
    %2649 = vmatpush1.msra.mxu0 0.0
    %2650 = vmatprep.subr.mxu0 0.0
    %2651 = vmatpush1.msra.mxu0 0.0
    %2652 = vmatprep.subr.mxu0 0.0
    %2653 = vmatpush1.msra.mxu0 0.0
    %2654 = vmatprep.subr.mxu0 0.0
    %2655 = vmatpush1.msra.mxu0 0.0
    %2656 = vmatprep.subr.mxu0 0.0
    %2657 = vmatpush1.msra.mxu0 0.0
    %2658 = vmatprep.subr.mxu0 0.0
    %2659 = vmatpush1.msra.mxu0 0.0
    %2660 = vmatprep.subr.mxu0 0.0
    %2661 = vmatpush1.msra.mxu0 0.0
    %2662 = vmatprep.subr.mxu0 0.0
    %2663 = vmatpush1.msra.mxu0 0.0
    %2664 = vmatprep.subr.mxu0 0.0
    %2665 = vmatpush1.msra.mxu0 0.0
    %2666 = vmatprep.subr.mxu0 0.0
    %2667 = vmatpush1.msra.mxu0 0.0
    %2668 = vmatprep.subr.mxu0 0.0
    %2669 = vmatpush1.msra.mxu0 0.0
    %2670 = vmatprep.subr.mxu0 0.0
    %2671 = vmatpush1.msra.mxu0 0.0
    %2672 = vmatprep.subr.mxu0 0.0
    %2673 = vmatpush1.msra.mxu0 0.0
    %2674 = vmatprep.subr.mxu0 0.0
    %2675 = vmatpush1.msra.mxu0 0.0
    %2676 = vmatprep.subr.mxu0 0.0
    %2677 = vmatpush1.msra.mxu0 %v2641
    %2678 = vmatprep.subr.mxu0 0.0
    %2679 = vmatpush2.msra.mxu0 0.0
    %2680 = vmatprep.subr.mxu0 0.0
    %2681 = vmatpush2.msra.mxu0 0.0
    %2682 = vmatprep.subr.mxu0 0.0
    %2683 = vmatpush2.msra.mxu0 0.0
    %2684 = vmatprep.subr.mxu0 0.0
    %2685 = vmatpush2.msra.mxu0 0.0
    %2686 = vmatprep.subr.mxu0 0.0
    %2687 = vmatpush2.msra.mxu0 0.0
    %2688 = vmatprep.subr.mxu0 0.0
    %2689 = vmatpush2.msra.mxu0 0.0
    %2690 = vmatprep.subr.mxu0 0.0
    %2691 = vmatpush2.msra.mxu0 0.0
    %2692 = vmatprep.subr.mxu0 0.0
    %2693 = vmatpush2.msra.mxu0 0.0
    %2694 = vmatprep.subr.mxu0 0.0
    %2695 = vmatpush2.msra.mxu0 0.0
    %2696 = vmatprep.subr.mxu0 0.0
    %2697 = vmatpush2.msra.mxu0 0.0
    %2698 = vmatprep.subr.mxu0 0.0
    %2699 = vmatpush2.msra.mxu0 0.0
    %2700 = vmatprep.subr.mxu0 0.0
    %2701 = vmatpush2.msra.mxu0 0.0
    %2702 = vmatprep.subr.mxu0 0.0
    %2703 = vmatpush2.msra.mxu0 0.0
    %2704 = vmatprep.subr.mxu0 0.0
    %2705 = vmatpush2.msra.mxu0 0.0
    %2706 = vmatprep.subr.mxu0 0.0
    %2707 = vmatpush2.msra.mxu0 0.0
    %2708 = vmatprep.subr.mxu0 0.0
    %2709 = vmatpush2.msra.mxu0 0.0
    %2710 = vmatprep.mubr.f32.mxu0 0.0
    %2711 = vmatmul.mubr.f32.gmra.mxu0 %v2644
    %v2712 = vpop.f32.mrf.mxu0
    %v2713 = vadd.f32 0.0, %v2712
    %v2714 = vpop.f32.mrf.mxu0
    %2715 = vdwg.mxu0
    %2717 = vrot.lane.b32.xlu0 %v2383, 8
    %v2718 = vpop.permute.xlu0 %2717
    %2721 = vrot.lane.b32.xlu0 %v2548, 16
    %v2722 = vpop.permute.xlu0 %2721
    %2725 = vrot.lane.b32.xlu0 %v2713, 24
    %v2726 = vpop.permute.xlu0 %2725
    %v2728 = vsel %vm215, %v2218, %v2718
    %v2729 = vsel %vm886, %v2728, %v2722
    %v2730 = vsel %vm888, %v2729, %v2726
    %2732 = vrot.lane.b32.xlu0 %v2051, 96
    %v2733 = vpop.permute.xlu0 %2732
    %v2735 = vsel %vm215, %v2055, 0
    %v2737 = vsel %vm215, %v2733, 0
    %2739 = vmatprep.subr.mxu0 0.0
    %2740 = vmatpush1.xpose.msra.mxu0 0.0
    %2741 = vmatprep.subr.mxu0 0.0
    %2742 = vmatpush1.xpose.msra.mxu0 0.0
    %2743 = vmatprep.subr.mxu0 0.0
    %2744 = vmatpush1.xpose.msra.mxu0 0.0
    %2745 = vmatprep.subr.mxu0 0.0
    %2746 = vmatpush1.xpose.msra.mxu0 0.0
    %2747 = vmatprep.subr.mxu0 0.0
    %2748 = vmatpush1.xpose.msra.mxu0 0.0
    %2749 = vmatprep.subr.mxu0 0.0
    %2750 = vmatpush1.xpose.msra.mxu0 0.0
    %2751 = vmatprep.subr.mxu0 0.0
    %2752 = vmatpush1.xpose.msra.mxu0 0.0
    %2753 = vmatprep.subr.mxu0 0.0
    %2754 = vmatpush1.xpose.msra.mxu0 0.0
    %2755 = vmatprep.subr.mxu0 0.0
    %2756 = vmatpush1.xpose.msra.mxu0 0.0
    %2757 = vmatprep.subr.mxu0 0.0
    %2758 = vmatpush1.xpose.msra.mxu0 0.0
    %2759 = vmatprep.subr.mxu0 0.0
    %2760 = vmatpush1.xpose.msra.mxu0 0.0
    %2761 = vmatprep.subr.mxu0 0.0
    %2762 = vmatpush1.xpose.msra.mxu0 0.0
    %2763 = vmatprep.subr.mxu0 0.0
    %2764 = vmatpush1.xpose.msra.mxu0 0.0
    %2765 = vmatprep.subr.mxu0 0.0
    %2766 = vmatpush1.xpose.msra.mxu0 0.0
    %2767 = vmatprep.subr.mxu0 0.0
    %2768 = vmatpush1.xpose.msra.mxu0 0.0
    %2769 = vmatprep.subr.mxu0 0.0
    %2770 = vmatpush1.xpose.msra.mxu0 %v2737
    %2771 = vmatprep.subr.mxu0 0.0
    %2772 = vmatpush2.xpose.msra.mxu0 0.0
    %2773 = vmatprep.subr.mxu0 0.0
    %2774 = vmatpush2.xpose.msra.mxu0 0.0
    %2775 = vmatprep.subr.mxu0 0.0
    %2776 = vmatpush2.xpose.msra.mxu0 0.0
    %2777 = vmatprep.subr.mxu0 0.0
    %2778 = vmatpush2.xpose.msra.mxu0 0.0
    %2779 = vmatprep.subr.mxu0 0.0
    %2780 = vmatpush2.xpose.msra.mxu0 0.0
    %2781 = vmatprep.subr.mxu0 0.0
    %2782 = vmatpush2.xpose.msra.mxu0 0.0
    %2783 = vmatprep.subr.mxu0 0.0
    %2784 = vmatpush2.xpose.msra.mxu0 0.0
    %2785 = vmatprep.subr.mxu0 0.0
    %2786 = vmatpush2.xpose.msra.mxu0 0.0
    %2787 = vmatprep.subr.mxu0 0.0
    %2788 = vmatpush2.xpose.msra.mxu0 0.0
    %2789 = vmatprep.subr.mxu0 0.0
    %2790 = vmatpush2.xpose.msra.mxu0 0.0
    %2791 = vmatprep.subr.mxu0 0.0
    %2792 = vmatpush2.xpose.msra.mxu0 0.0
    %2793 = vmatprep.subr.mxu0 0.0
    %2794 = vmatpush2.xpose.msra.mxu0 0.0
    %2795 = vmatprep.subr.mxu0 0.0
    %2796 = vmatpush2.xpose.msra.mxu0 0.0
    %2797 = vmatprep.subr.mxu0 0.0
    %2798 = vmatpush2.xpose.msra.mxu0 0.0
    %2799 = vmatprep.subr.mxu0 0.0
    %2800 = vmatpush2.xpose.msra.mxu0 0.0
    %2801 = vmatprep.subr.mxu0 0.0
    %2802 = vmatpush2.xpose.msra.mxu0 0.0
    %2803 = vmatprep.mubr.f32.mxu0 0.0
    %2804 = vmatmul.mubr.f32.gmra.mxu0 %v2735
    %v2805 = vpop.f32.mrf.mxu0
    %v2806 = vadd.f32 %v893, %v2805
    %v2807 = vpop.f32.mrf.mxu0
    %2808 = vdwg.mxu0
    %v2809 = vsel %vm215, %v2806, -inf
    %2810 = vmax.xlane.f32.xlu0 %v2809
    %v2811 = vpop.xlane.xlu0 %2810
    %v2812 = vsub.f32 %v2806, %v2811
    %v2813 = vmul.f32 %v2812, 1.442695
    %v2814 = vpow.pop %v2813
    %v2815 = vsel %vm215, %v2814, 0.0
    %2816 = vadd.xlane.f32.xlu0 %v2815
    %v2817 = vpop.xlane.xlu0 %2816
    %v2818 = vrcp.pop %v2817
    %v2819 = vmul.f32 %v2814, %v2818
    %2820 = vrot.lane.b32.xlu0 %v2051, 64
    %v2821 = vpop.permute.xlu0 %2820
    %v2824 = vsel %vm215, %v2819, 0
    %2826 = vmatprep.subr.mxu0 0.0
    %2827 = vmatpush1.msra.mxu0 0.0
    %2828 = vmatprep.subr.mxu0 0.0
    %2829 = vmatpush1.msra.mxu0 0.0
    %2830 = vmatprep.subr.mxu0 0.0
    %2831 = vmatpush1.msra.mxu0 0.0
    %2832 = vmatprep.subr.mxu0 0.0
    %2833 = vmatpush1.msra.mxu0 0.0
    %2834 = vmatprep.subr.mxu0 0.0
    %2835 = vmatpush1.msra.mxu0 0.0
    %2836 = vmatprep.subr.mxu0 0.0
    %2837 = vmatpush1.msra.mxu0 0.0
    %2838 = vmatprep.subr.mxu0 0.0
    %2839 = vmatpush1.msra.mxu0 0.0
    %2840 = vmatprep.subr.mxu0 0.0
    %2841 = vmatpush1.msra.mxu0 0.0
    %2842 = vmatprep.subr.mxu0 0.0
    %2843 = vmatpush1.msra.mxu0 0.0
    %2844 = vmatprep.subr.mxu0 0.0
    %2845 = vmatpush1.msra.mxu0 0.0
    %2846 = vmatprep.subr.mxu0 0.0
    %2847 = vmatpush1.msra.mxu0 0.0
    %2848 = vmatprep.subr.mxu0 0.0
    %2849 = vmatpush1.msra.mxu0 0.0
    %2850 = vmatprep.subr.mxu0 0.0
    %2851 = vmatpush1.msra.mxu0 0.0
    %2852 = vmatprep.subr.mxu0 0.0
    %2853 = vmatpush1.msra.mxu0 0.0
    %2854 = vmatprep.subr.mxu0 0.0
    %2855 = vmatpush1.msra.mxu0 0.0
    %2856 = vmatprep.subr.mxu0 0.0
    %2857 = vmatpush1.msra.mxu0 %v2821
    %2858 = vmatprep.subr.mxu0 0.0
    %2859 = vmatpush2.msra.mxu0 0.0
    %2860 = vmatprep.subr.mxu0 0.0
    %2861 = vmatpush2.msra.mxu0 0.0
    %2862 = vmatprep.subr.mxu0 0.0
    %2863 = vmatpush2.msra.mxu0 0.0
    %2864 = vmatprep.subr.mxu0 0.0
    %2865 = vmatpush2.msra.mxu0 0.0
    %2866 = vmatprep.subr.mxu0 0.0
    %2867 = vmatpush2.msra.mxu0 0.0
    %2868 = vmatprep.subr.mxu0 0.0
    %2869 = vmatpush2.msra.mxu0 0.0
    %2870 = vmatprep.subr.mxu0 0.0
    %2871 = vmatpush2.msra.mxu0 0.0
    %2872 = vmatprep.subr.mxu0 0.0
    %2873 = vmatpush2.msra.mxu0 0.0
    %2874 = vmatprep.subr.mxu0 0.0
    %2875 = vmatpush2.msra.mxu0 0.0
    %2876 = vmatprep.subr.mxu0 0.0
    %2877 = vmatpush2.msra.mxu0 0.0
    %2878 = vmatprep.subr.mxu0 0.0
    %2879 = vmatpush2.msra.mxu0 0.0
    %2880 = vmatprep.subr.mxu0 0.0
    %2881 = vmatpush2.msra.mxu0 0.0
    %2882 = vmatprep.subr.mxu0 0.0
    %2883 = vmatpush2.msra.mxu0 0.0
    %2884 = vmatprep.subr.mxu0 0.0
    %2885 = vmatpush2.msra.mxu0 0.0
    %2886 = vmatprep.subr.mxu0 0.0
    %2887 = vmatpush2.msra.mxu0 0.0
    %2888 = vmatprep.subr.mxu0 0.0
    %2889 = vmatpush2.msra.mxu0 0.0
    %2890 = vmatprep.mubr.f32.mxu0 0.0
    %2891 = vmatmul.mubr.f32.gmra.mxu0 %v2824
    %v2892 = vpop.f32.mrf.mxu0
    %v2893 = vadd.f32 0.0, %v2892
    %v2894 = vpop.f32.mrf.mxu0
    %2895 = vdwg.mxu0
    %2896 = vrot.lane.b32.xlu0 %v2055, 120
    %v2897 = vpop.permute.xlu0 %2896
    %2898 = vrot.lane.b32.xlu0 %v2051, 88
    %v2899 = vpop.permute.xlu0 %2898
    %v2900 = vsel %vm215, %v2897, 0
    %v2902 = vsel %vm215, %v2899, 0
    %2904 = vmatprep.subr.mxu0 0.0
    %2905 = vmatpush1.xpose.msra.mxu0 0.0
    %2906 = vmatprep.subr.mxu0 0.0
    %2907 = vmatpush1.xpose.msra.mxu0 0.0
    %2908 = vmatprep.subr.mxu0 0.0
    %2909 = vmatpush1.xpose.msra.mxu0 0.0
    %2910 = vmatprep.subr.mxu0 0.0
    %2911 = vmatpush1.xpose.msra.mxu0 0.0
    %2912 = vmatprep.subr.mxu0 0.0
    %2913 = vmatpush1.xpose.msra.mxu0 0.0
    %2914 = vmatprep.subr.mxu0 0.0
    %2915 = vmatpush1.xpose.msra.mxu0 0.0
    %2916 = vmatprep.subr.mxu0 0.0
    %2917 = vmatpush1.xpose.msra.mxu0 0.0
    %2918 = vmatprep.subr.mxu0 0.0
    %2919 = vmatpush1.xpose.msra.mxu0 0.0
    %2920 = vmatprep.subr.mxu0 0.0
    %2921 = vmatpush1.xpose.msra.mxu0 0.0
    %2922 = vmatprep.subr.mxu0 0.0
    %2923 = vmatpush1.xpose.msra.mxu0 0.0
    %2924 = vmatprep.subr.mxu0 0.0
    %2925 = vmatpush1.xpose.msra.mxu0 0.0
    %2926 = vmatprep.subr.mxu0 0.0
    %2927 = vmatpush1.xpose.msra.mxu0 0.0
    %2928 = vmatprep.subr.mxu0 0.0
    %2929 = vmatpush1.xpose.msra.mxu0 0.0
    %2930 = vmatprep.subr.mxu0 0.0
    %2931 = vmatpush1.xpose.msra.mxu0 0.0
    %2932 = vmatprep.subr.mxu0 0.0
    %2933 = vmatpush1.xpose.msra.mxu0 0.0
    %2934 = vmatprep.subr.mxu0 0.0
    %2935 = vmatpush1.xpose.msra.mxu0 %v2902
    %2936 = vmatprep.subr.mxu0 0.0
    %2937 = vmatpush2.xpose.msra.mxu0 0.0
    %2938 = vmatprep.subr.mxu0 0.0
    %2939 = vmatpush2.xpose.msra.mxu0 0.0
    %2940 = vmatprep.subr.mxu0 0.0
    %2941 = vmatpush2.xpose.msra.mxu0 0.0
    %2942 = vmatprep.subr.mxu0 0.0
    %2943 = vmatpush2.xpose.msra.mxu0 0.0
    %2944 = vmatprep.subr.mxu0 0.0
    %2945 = vmatpush2.xpose.msra.mxu0 0.0
    %2946 = vmatprep.subr.mxu0 0.0
    %2947 = vmatpush2.xpose.msra.mxu0 0.0
    %2948 = vmatprep.subr.mxu0 0.0
    %2949 = vmatpush2.xpose.msra.mxu0 0.0
    %2950 = vmatprep.subr.mxu0 0.0
    %2951 = vmatpush2.xpose.msra.mxu0 0.0
    %2952 = vmatprep.subr.mxu0 0.0
    %2953 = vmatpush2.xpose.msra.mxu0 0.0
    %2954 = vmatprep.subr.mxu0 0.0
    %2955 = vmatpush2.xpose.msra.mxu0 0.0
    %2956 = vmatprep.subr.mxu0 0.0
    %2957 = vmatpush2.xpose.msra.mxu0 0.0
    %2958 = vmatprep.subr.mxu0 0.0
    %2959 = vmatpush2.xpose.msra.mxu0 0.0
    %2960 = vmatprep.subr.mxu0 0.0
    %2961 = vmatpush2.xpose.msra.mxu0 0.0
    %2962 = vmatprep.subr.mxu0 0.0
    %2963 = vmatpush2.xpose.msra.mxu0 0.0
    %2964 = vmatprep.subr.mxu0 0.0
    %2965 = vmatpush2.xpose.msra.mxu0 0.0
    %2966 = vmatprep.subr.mxu0 0.0
    %2967 = vmatpush2.xpose.msra.mxu0 0.0
    %2968 = vmatprep.mubr.f32.mxu0 0.0
    %2969 = vmatmul.mubr.f32.gmra.mxu0 %v2900
    %v2970 = vpop.f32.mrf.mxu0
    %v2971 = vadd.f32 %v893, %v2970
    %v2972 = vpop.f32.mrf.mxu0
    %2973 = vdwg.mxu0
    %v2974 = vsel %vm215, %v2971, -inf
    %2975 = vmax.xlane.f32.xlu0 %v2974
    %v2976 = vpop.xlane.xlu0 %2975
    %v2977 = vsub.f32 %v2971, %v2976
    %v2978 = vmul.f32 %v2977, 1.442695
    %v2979 = vpow.pop %v2978
    %v2980 = vsel %vm215, %v2979, 0.0
    %2981 = vadd.xlane.f32.xlu0 %v2980
    %v2982 = vpop.xlane.xlu0 %2981
    %v2983 = vrcp.pop %v2982
    %v2984 = vmul.f32 %v2979, %v2983
    %2985 = vrot.lane.b32.xlu0 %v2051, 56
    %v2986 = vpop.permute.xlu0 %2985
    %v2989 = vsel %vm215, %v2984, 0
    %2991 = vmatprep.subr.mxu0 0.0
    %2992 = vmatpush1.msra.mxu0 0.0
    %2993 = vmatprep.subr.mxu0 0.0
    %2994 = vmatpush1.msra.mxu0 0.0
    %2995 = vmatprep.subr.mxu0 0.0
    %2996 = vmatpush1.msra.mxu0 0.0
    %2997 = vmatprep.subr.mxu0 0.0
    %2998 = vmatpush1.msra.mxu0 0.0
    %2999 = vmatprep.subr.mxu0 0.0
    %3000 = vmatpush1.msra.mxu0 0.0
    %3001 = vmatprep.subr.mxu0 0.0
    %3002 = vmatpush1.msra.mxu0 0.0
    %3003 = vmatprep.subr.mxu0 0.0
    %3004 = vmatpush1.msra.mxu0 0.0
    %3005 = vmatprep.subr.mxu0 0.0
    %3006 = vmatpush1.msra.mxu0 0.0
    %3007 = vmatprep.subr.mxu0 0.0
    %3008 = vmatpush1.msra.mxu0 0.0
    %3009 = vmatprep.subr.mxu0 0.0
    %3010 = vmatpush1.msra.mxu0 0.0
    %3011 = vmatprep.subr.mxu0 0.0
    %3012 = vmatpush1.msra.mxu0 0.0
    %3013 = vmatprep.subr.mxu0 0.0
    %3014 = vmatpush1.msra.mxu0 0.0
    %3015 = vmatprep.subr.mxu0 0.0
    %3016 = vmatpush1.msra.mxu0 0.0
    %3017 = vmatprep.subr.mxu0 0.0
    %3018 = vmatpush1.msra.mxu0 0.0
    %3019 = vmatprep.subr.mxu0 0.0
    %3020 = vmatpush1.msra.mxu0 0.0
    %3021 = vmatprep.subr.mxu0 0.0
    %3022 = vmatpush1.msra.mxu0 %v2986
    %3023 = vmatprep.subr.mxu0 0.0
    %3024 = vmatpush2.msra.mxu0 0.0
    %3025 = vmatprep.subr.mxu0 0.0
    %3026 = vmatpush2.msra.mxu0 0.0
    %3027 = vmatprep.subr.mxu0 0.0
    %3028 = vmatpush2.msra.mxu0 0.0
    %3029 = vmatprep.subr.mxu0 0.0
    %3030 = vmatpush2.msra.mxu0 0.0
    %3031 = vmatprep.subr.mxu0 0.0
    %3032 = vmatpush2.msra.mxu0 0.0
    %3033 = vmatprep.subr.mxu0 0.0
    %3034 = vmatpush2.msra.mxu0 0.0
    %3035 = vmatprep.subr.mxu0 0.0
    %3036 = vmatpush2.msra.mxu0 0.0
    %3037 = vmatprep.subr.mxu0 0.0
    %3038 = vmatpush2.msra.mxu0 0.0
    %3039 = vmatprep.subr.mxu0 0.0
    %3040 = vmatpush2.msra.mxu0 0.0
    %3041 = vmatprep.subr.mxu0 0.0
    %3042 = vmatpush2.msra.mxu0 0.0
    %3043 = vmatprep.subr.mxu0 0.0
    %3044 = vmatpush2.msra.mxu0 0.0
    %3045 = vmatprep.subr.mxu0 0.0
    %3046 = vmatpush2.msra.mxu0 0.0
    %3047 = vmatprep.subr.mxu0 0.0
    %3048 = vmatpush2.msra.mxu0 0.0
    %3049 = vmatprep.subr.mxu0 0.0
    %3050 = vmatpush2.msra.mxu0 0.0
    %3051 = vmatprep.subr.mxu0 0.0
    %3052 = vmatpush2.msra.mxu0 0.0
    %3053 = vmatprep.subr.mxu0 0.0
    %3054 = vmatpush2.msra.mxu0 0.0
    %3055 = vmatprep.mubr.f32.mxu0 0.0
    %3056 = vmatmul.mubr.f32.gmra.mxu0 %v2989
    %v3057 = vpop.f32.mrf.mxu0
    %v3058 = vadd.f32 0.0, %v3057
    %v3059 = vpop.f32.mrf.mxu0
    %3060 = vdwg.mxu0
    %3061 = vrot.lane.b32.xlu0 %v2055, 112
    %v3062 = vpop.permute.xlu0 %3061
    %3063 = vrot.lane.b32.xlu0 %v2051, 80
    %v3064 = vpop.permute.xlu0 %3063
    %v3065 = vsel %vm215, %v3062, 0
    %v3067 = vsel %vm215, %v3064, 0
    %3069 = vmatprep.subr.mxu0 0.0
    %3070 = vmatpush1.xpose.msra.mxu0 0.0
    %3071 = vmatprep.subr.mxu0 0.0
    %3072 = vmatpush1.xpose.msra.mxu0 0.0
    %3073 = vmatprep.subr.mxu0 0.0
    %3074 = vmatpush1.xpose.msra.mxu0 0.0
    %3075 = vmatprep.subr.mxu0 0.0
    %3076 = vmatpush1.xpose.msra.mxu0 0.0
    %3077 = vmatprep.subr.mxu0 0.0
    %3078 = vmatpush1.xpose.msra.mxu0 0.0
    %3079 = vmatprep.subr.mxu0 0.0
    %3080 = vmatpush1.xpose.msra.mxu0 0.0
    %3081 = vmatprep.subr.mxu0 0.0
    %3082 = vmatpush1.xpose.msra.mxu0 0.0
    %3083 = vmatprep.subr.mxu0 0.0
    %3084 = vmatpush1.xpose.msra.mxu0 0.0
    %3085 = vmatprep.subr.mxu0 0.0
    %3086 = vmatpush1.xpose.msra.mxu0 0.0
    %3087 = vmatprep.subr.mxu0 0.0
    %3088 = vmatpush1.xpose.msra.mxu0 0.0
    %3089 = vmatprep.subr.mxu0 0.0
    %3090 = vmatpush1.xpose.msra.mxu0 0.0
    %3091 = vmatprep.subr.mxu0 0.0
    %3092 = vmatpush1.xpose.msra.mxu0 0.0
    %3093 = vmatprep.subr.mxu0 0.0
    %3094 = vmatpush1.xpose.msra.mxu0 0.0
    %3095 = vmatprep.subr.mxu0 0.0
    %3096 = vmatpush1.xpose.msra.mxu0 0.0
    %3097 = vmatprep.subr.mxu0 0.0
    %3098 = vmatpush1.xpose.msra.mxu0 0.0
    %3099 = vmatprep.subr.mxu0 0.0
    %3100 = vmatpush1.xpose.msra.mxu0 %v3067
    %3101 = vmatprep.subr.mxu0 0.0
    %3102 = vmatpush2.xpose.msra.mxu0 0.0
    %3103 = vmatprep.subr.mxu0 0.0
    %3104 = vmatpush2.xpose.msra.mxu0 0.0
    %3105 = vmatprep.subr.mxu0 0.0
    %3106 = vmatpush2.xpose.msra.mxu0 0.0
    %3107 = vmatprep.subr.mxu0 0.0
    %3108 = vmatpush2.xpose.msra.mxu0 0.0
    %3109 = vmatprep.subr.mxu0 0.0
    %3110 = vmatpush2.xpose.msra.mxu0 0.0
    %3111 = vmatprep.subr.mxu0 0.0
    %3112 = vmatpush2.xpose.msra.mxu0 0.0
    %3113 = vmatprep.subr.mxu0 0.0
    %3114 = vmatpush2.xpose.msra.mxu0 0.0
    %3115 = vmatprep.subr.mxu0 0.0
    %3116 = vmatpush2.xpose.msra.mxu0 0.0
    %3117 = vmatprep.subr.mxu0 0.0
    %3118 = vmatpush2.xpose.msra.mxu0 0.0
    %3119 = vmatprep.subr.mxu0 0.0
    %3120 = vmatpush2.xpose.msra.mxu0 0.0
    %3121 = vmatprep.subr.mxu0 0.0
    %3122 = vmatpush2.xpose.msra.mxu0 0.0
    %3123 = vmatprep.subr.mxu0 0.0
    %3124 = vmatpush2.xpose.msra.mxu0 0.0
    %3125 = vmatprep.subr.mxu0 0.0
    %3126 = vmatpush2.xpose.msra.mxu0 0.0
    %3127 = vmatprep.subr.mxu0 0.0
    %3128 = vmatpush2.xpose.msra.mxu0 0.0
    %3129 = vmatprep.subr.mxu0 0.0
    %3130 = vmatpush2.xpose.msra.mxu0 0.0
    %3131 = vmatprep.subr.mxu0 0.0
    %3132 = vmatpush2.xpose.msra.mxu0 0.0
    %3133 = vmatprep.mubr.f32.mxu0 0.0
    %3134 = vmatmul.mubr.f32.gmra.mxu0 %v3065
    %v3135 = vpop.f32.mrf.mxu0
    %v3136 = vadd.f32 %v893, %v3135
    %v3137 = vpop.f32.mrf.mxu0
    %3138 = vdwg.mxu0
    %v3139 = vsel %vm215, %v3136, -inf
    %3140 = vmax.xlane.f32.xlu0 %v3139
    %v3141 = vpop.xlane.xlu0 %3140
    %v3142 = vsub.f32 %v3136, %v3141
    %v3143 = vmul.f32 %v3142, 1.442695
    %v3144 = vpow.pop %v3143
    %v3145 = vsel %vm215, %v3144, 0.0
    %3146 = vadd.xlane.f32.xlu0 %v3145
    %v3147 = vpop.xlane.xlu0 %3146
    %v3148 = vrcp.pop %v3147
    %v3149 = vmul.f32 %v3144, %v3148
    %3150 = vrot.lane.b32.xlu0 %v2051, 48
    %v3151 = vpop.permute.xlu0 %3150
    %v3154 = vsel %vm215, %v3149, 0
    %3156 = vmatprep.subr.mxu0 0.0
    %3157 = vmatpush1.msra.mxu0 0.0
    %3158 = vmatprep.subr.mxu0 0.0
    %3159 = vmatpush1.msra.mxu0 0.0
    %3160 = vmatprep.subr.mxu0 0.0
    %3161 = vmatpush1.msra.mxu0 0.0
    %3162 = vmatprep.subr.mxu0 0.0
    %3163 = vmatpush1.msra.mxu0 0.0
    %3164 = vmatprep.subr.mxu0 0.0
    %3165 = vmatpush1.msra.mxu0 0.0
    %3166 = vmatprep.subr.mxu0 0.0
    %3167 = vmatpush1.msra.mxu0 0.0
    %3168 = vmatprep.subr.mxu0 0.0
    %3169 = vmatpush1.msra.mxu0 0.0
    %3170 = vmatprep.subr.mxu0 0.0
    %3171 = vmatpush1.msra.mxu0 0.0
    %3172 = vmatprep.subr.mxu0 0.0
    %3173 = vmatpush1.msra.mxu0 0.0
    %3174 = vmatprep.subr.mxu0 0.0
    %3175 = vmatpush1.msra.mxu0 0.0
    %3176 = vmatprep.subr.mxu0 0.0
    %3177 = vmatpush1.msra.mxu0 0.0
    %3178 = vmatprep.subr.mxu0 0.0
    %3179 = vmatpush1.msra.mxu0 0.0
    %3180 = vmatprep.subr.mxu0 0.0
    %3181 = vmatpush1.msra.mxu0 0.0
    %3182 = vmatprep.subr.mxu0 0.0
    %3183 = vmatpush1.msra.mxu0 0.0
    %3184 = vmatprep.subr.mxu0 0.0
    %3185 = vmatpush1.msra.mxu0 0.0
    %3186 = vmatprep.subr.mxu0 0.0
    %3187 = vmatpush1.msra.mxu0 %v3151
    %3188 = vmatprep.subr.mxu0 0.0
    %3189 = vmatpush2.msra.mxu0 0.0
    %3190 = vmatprep.subr.mxu0 0.0
    %3191 = vmatpush2.msra.mxu0 0.0
    %3192 = vmatprep.subr.mxu0 0.0
    %3193 = vmatpush2.msra.mxu0 0.0
    %3194 = vmatprep.subr.mxu0 0.0
    %3195 = vmatpush2.msra.mxu0 0.0
    %3196 = vmatprep.subr.mxu0 0.0
    %3197 = vmatpush2.msra.mxu0 0.0
    %3198 = vmatprep.subr.mxu0 0.0
    %3199 = vmatpush2.msra.mxu0 0.0
    %3200 = vmatprep.subr.mxu0 0.0
    %3201 = vmatpush2.msra.mxu0 0.0
    %3202 = vmatprep.subr.mxu0 0.0
    %3203 = vmatpush2.msra.mxu0 0.0
    %3204 = vmatprep.subr.mxu0 0.0
    %3205 = vmatpush2.msra.mxu0 0.0
    %3206 = vmatprep.subr.mxu0 0.0
    %3207 = vmatpush2.msra.mxu0 0.0
    %3208 = vmatprep.subr.mxu0 0.0
    %3209 = vmatpush2.msra.mxu0 0.0
    %3210 = vmatprep.subr.mxu0 0.0
    %3211 = vmatpush2.msra.mxu0 0.0
    %3212 = vmatprep.subr.mxu0 0.0
    %3213 = vmatpush2.msra.mxu0 0.0
    %3214 = vmatprep.subr.mxu0 0.0
    %3215 = vmatpush2.msra.mxu0 0.0
    %3216 = vmatprep.subr.mxu0 0.0
    %3217 = vmatpush2.msra.mxu0 0.0
    %3218 = vmatprep.subr.mxu0 0.0
    %3219 = vmatpush2.msra.mxu0 0.0
    %3220 = vmatprep.mubr.f32.mxu0 0.0
    %3221 = vmatmul.mubr.f32.gmra.mxu0 %v3154
    %v3222 = vpop.f32.mrf.mxu0
    %v3223 = vadd.f32 0.0, %v3222
    %v3224 = vpop.f32.mrf.mxu0
    %3225 = vdwg.mxu0
    %3226 = vrot.lane.b32.xlu0 %v2055, 104
    %v3227 = vpop.permute.xlu0 %3226
    %3228 = vrot.lane.b32.xlu0 %v2051, 72
    %v3229 = vpop.permute.xlu0 %3228
    %v3230 = vsel %vm215, %v3227, 0
    %v3232 = vsel %vm215, %v3229, 0
    %3234 = vmatprep.subr.mxu0 0.0
    %3235 = vmatpush1.xpose.msra.mxu0 0.0
    %3236 = vmatprep.subr.mxu0 0.0
    %3237 = vmatpush1.xpose.msra.mxu0 0.0
    %3238 = vmatprep.subr.mxu0 0.0
    %3239 = vmatpush1.xpose.msra.mxu0 0.0
    %3240 = vmatprep.subr.mxu0 0.0
    %3241 = vmatpush1.xpose.msra.mxu0 0.0
    %3242 = vmatprep.subr.mxu0 0.0
    %3243 = vmatpush1.xpose.msra.mxu0 0.0
    %3244 = vmatprep.subr.mxu0 0.0
    %3245 = vmatpush1.xpose.msra.mxu0 0.0
    %3246 = vmatprep.subr.mxu0 0.0
    %3247 = vmatpush1.xpose.msra.mxu0 0.0
    %3248 = vmatprep.subr.mxu0 0.0
    %3249 = vmatpush1.xpose.msra.mxu0 0.0
    %3250 = vmatprep.subr.mxu0 0.0
    %3251 = vmatpush1.xpose.msra.mxu0 0.0
    %3252 = vmatprep.subr.mxu0 0.0
    %3253 = vmatpush1.xpose.msra.mxu0 0.0
    %3254 = vmatprep.subr.mxu0 0.0
    %3255 = vmatpush1.xpose.msra.mxu0 0.0
    %3256 = vmatprep.subr.mxu0 0.0
    %3257 = vmatpush1.xpose.msra.mxu0 0.0
    %3258 = vmatprep.subr.mxu0 0.0
    %3259 = vmatpush1.xpose.msra.mxu0 0.0
    %3260 = vmatprep.subr.mxu0 0.0
    %3261 = vmatpush1.xpose.msra.mxu0 0.0
    %3262 = vmatprep.subr.mxu0 0.0
    %3263 = vmatpush1.xpose.msra.mxu0 0.0
    %3264 = vmatprep.subr.mxu0 0.0
    %3265 = vmatpush1.xpose.msra.mxu0 %v3232
    %3266 = vmatprep.subr.mxu0 0.0
    %3267 = vmatpush2.xpose.msra.mxu0 0.0
    %3268 = vmatprep.subr.mxu0 0.0
    %3269 = vmatpush2.xpose.msra.mxu0 0.0
    %3270 = vmatprep.subr.mxu0 0.0
    %3271 = vmatpush2.xpose.msra.mxu0 0.0
    %3272 = vmatprep.subr.mxu0 0.0
    %3273 = vmatpush2.xpose.msra.mxu0 0.0
    %3274 = vmatprep.subr.mxu0 0.0
    %3275 = vmatpush2.xpose.msra.mxu0 0.0
    %3276 = vmatprep.subr.mxu0 0.0
    %3277 = vmatpush2.xpose.msra.mxu0 0.0
    %3278 = vmatprep.subr.mxu0 0.0
    %3279 = vmatpush2.xpose.msra.mxu0 0.0
    %3280 = vmatprep.subr.mxu0 0.0
    %3281 = vmatpush2.xpose.msra.mxu0 0.0
    %3282 = vmatprep.subr.mxu0 0.0
    %3283 = vmatpush2.xpose.msra.mxu0 0.0
    %3284 = vmatprep.subr.mxu0 0.0
    %3285 = vmatpush2.xpose.msra.mxu0 0.0
    %3286 = vmatprep.subr.mxu0 0.0
    %3287 = vmatpush2.xpose.msra.mxu0 0.0
    %3288 = vmatprep.subr.mxu0 0.0
    %3289 = vmatpush2.xpose.msra.mxu0 0.0
    %3290 = vmatprep.subr.mxu0 0.0
    %3291 = vmatpush2.xpose.msra.mxu0 0.0
    %3292 = vmatprep.subr.mxu0 0.0
    %3293 = vmatpush2.xpose.msra.mxu0 0.0
    %3294 = vmatprep.subr.mxu0 0.0
    %3295 = vmatpush2.xpose.msra.mxu0 0.0
    %3296 = vmatprep.subr.mxu0 0.0
    %3297 = vmatpush2.xpose.msra.mxu0 0.0
    %3298 = vmatprep.mubr.f32.mxu0 0.0
    %3299 = vmatmul.mubr.f32.gmra.mxu0 %v3230
    %v3300 = vpop.f32.mrf.mxu0
    %v3301 = vadd.f32 %v893, %v3300
    %v3302 = vpop.f32.mrf.mxu0
    %3303 = vdwg.mxu0
    %v3304 = vsel %vm215, %v3301, -inf
    %3305 = vmax.xlane.f32.xlu0 %v3304
    %v3306 = vpop.xlane.xlu0 %3305
    %v3307 = vsub.f32 %v3301, %v3306
    %v3308 = vmul.f32 %v3307, 1.442695
    %v3309 = vpow.pop %v3308
    %v3310 = vsel %vm215, %v3309, 0.0
    %3311 = vadd.xlane.f32.xlu0 %v3310
    %v3312 = vpop.xlane.xlu0 %3311
    %v3313 = vrcp.pop %v3312
    %v3314 = vmul.f32 %v3309, %v3313
    %3315 = vrot.lane.b32.xlu0 %v2051, 40
    %v3316 = vpop.permute.xlu0 %3315
    %v3319 = vsel %vm215, %v3314, 0
    %3321 = vmatprep.subr.mxu0 0.0
    %3322 = vmatpush1.msra.mxu0 0.0
    %3323 = vmatprep.subr.mxu0 0.0
    %3324 = vmatpush1.msra.mxu0 0.0
    %3325 = vmatprep.subr.mxu0 0.0
    %3326 = vmatpush1.msra.mxu0 0.0
    %3327 = vmatprep.subr.mxu0 0.0
    %3328 = vmatpush1.msra.mxu0 0.0
    %3329 = vmatprep.subr.mxu0 0.0
    %3330 = vmatpush1.msra.mxu0 0.0
    %3331 = vmatprep.subr.mxu0 0.0
    %3332 = vmatpush1.msra.mxu0 0.0
    %3333 = vmatprep.subr.mxu0 0.0
    %3334 = vmatpush1.msra.mxu0 0.0
    %3335 = vmatprep.subr.mxu0 0.0
    %3336 = vmatpush1.msra.mxu0 0.0
    %3337 = vmatprep.subr.mxu0 0.0
    %3338 = vmatpush1.msra.mxu0 0.0
    %3339 = vmatprep.subr.mxu0 0.0
    %3340 = vmatpush1.msra.mxu0 0.0
    %3341 = vmatprep.subr.mxu0 0.0
    %3342 = vmatpush1.msra.mxu0 0.0
    %3343 = vmatprep.subr.mxu0 0.0
    %3344 = vmatpush1.msra.mxu0 0.0
    %3345 = vmatprep.subr.mxu0 0.0
    %3346 = vmatpush1.msra.mxu0 0.0
    %3347 = vmatprep.subr.mxu0 0.0
    %3348 = vmatpush1.msra.mxu0 0.0
    %3349 = vmatprep.subr.mxu0 0.0
    %3350 = vmatpush1.msra.mxu0 0.0
    %3351 = vmatprep.subr.mxu0 0.0
    %3352 = vmatpush1.msra.mxu0 %v3316
    %3353 = vmatprep.subr.mxu0 0.0
    %3354 = vmatpush2.msra.mxu0 0.0
    %3355 = vmatprep.subr.mxu0 0.0
    %3356 = vmatpush2.msra.mxu0 0.0
    %3357 = vmatprep.subr.mxu0 0.0
    %3358 = vmatpush2.msra.mxu0 0.0
    %3359 = vmatprep.subr.mxu0 0.0
    %3360 = vmatpush2.msra.mxu0 0.0
    %3361 = vmatprep.subr.mxu0 0.0
    %3362 = vmatpush2.msra.mxu0 0.0
    %3363 = vmatprep.subr.mxu0 0.0
    %3364 = vmatpush2.msra.mxu0 0.0
    %3365 = vmatprep.subr.mxu0 0.0
    %3366 = vmatpush2.msra.mxu0 0.0
    %3367 = vmatprep.subr.mxu0 0.0
    %3368 = vmatpush2.msra.mxu0 0.0
    %3369 = vmatprep.subr.mxu0 0.0
    %3370 = vmatpush2.msra.mxu0 0.0
    %3371 = vmatprep.subr.mxu0 0.0
    %3372 = vmatpush2.msra.mxu0 0.0
    %3373 = vmatprep.subr.mxu0 0.0
    %3374 = vmatpush2.msra.mxu0 0.0
    %3375 = vmatprep.subr.mxu0 0.0
    %3376 = vmatpush2.msra.mxu0 0.0
    %3377 = vmatprep.subr.mxu0 0.0
    %3378 = vmatpush2.msra.mxu0 0.0
    %3379 = vmatprep.subr.mxu0 0.0
    %3380 = vmatpush2.msra.mxu0 0.0
    %3381 = vmatprep.subr.mxu0 0.0
    %3382 = vmatpush2.msra.mxu0 0.0
    %3383 = vmatprep.subr.mxu0 0.0
    %3384 = vmatpush2.msra.mxu0 0.0
    %3385 = vmatprep.mubr.f32.mxu0 0.0
    %3386 = vmatmul.mubr.f32.gmra.mxu0 %v3319
    %v3387 = vpop.f32.mrf.mxu0
    %v3388 = vadd.f32 0.0, %v3387
    %v3389 = vpop.f32.mrf.mxu0
    %3390 = vdwg.mxu0
    %3392 = vrot.lane.b32.xlu0 %v3058, 8
    %v3393 = vpop.permute.xlu0 %3392
    %3396 = vrot.lane.b32.xlu0 %v3223, 16
    %v3397 = vpop.permute.xlu0 %3396
    %3400 = vrot.lane.b32.xlu0 %v3388, 24
    %v3401 = vpop.permute.xlu0 %3400
    %v3403 = vsel %vm215, %v2893, %v3393
    %v3404 = vsel %vm886, %v3403, %v3397
    %v3405 = vsel %vm888, %v3404, %v3401
    %s3406 = scalar_lea.vmem %s6, 32
    %v3407 = vld [vmem:[%s3406] sm:$0xff]
    %v3408 = vld [vmem:[%s3406 + $0x8] sm:$0xff]
    %v3409 = vld [vmem:[%s3406 + $0x10] sm:$0xff]
    %v3410 = vld [vmem:[%s3406 + $0x18] sm:$0xff]
    %s3411 = scalar_lea.vmem %s7, 1
    %v3412 = vld [vmem:[%s3411] sm:$0x1]
    %v3414 = vlaneseq
    %v3415 = vshrl.u32 %v3414, 7
    %v3416 = vsub.s32 0, %v3415
    %v3417 = vrot.slane %v3412, %v3416
    %v3420 = vsel %vm67, %v2730, 0
    %v3423 = vsel %vm67, %v3405, 0
    %3425 = vmatprep.subr.mxu0 0.0
    %3426 = vmatpush1.msra.mxu0 0.0
    %3427 = vmatprep.subr.mxu0 0.0
    %3428 = vmatpush1.msra.mxu0 0.0
    %3429 = vmatprep.subr.mxu0 0.0
    %3430 = vmatpush1.msra.mxu0 0.0
    %3431 = vmatprep.subr.mxu0 0.0
    %3432 = vmatpush1.msra.mxu0 0.0
    %3433 = vmatprep.subr.mxu0 0.0
    %3434 = vmatpush1.msra.mxu0 0.0
    %3435 = vmatprep.subr.mxu0 0.0
    %3436 = vmatpush1.msra.mxu0 0.0
    %3437 = vmatprep.subr.mxu0 0.0
    %3438 = vmatpush1.msra.mxu0 0.0
    %3439 = vmatprep.subr.mxu0 0.0
    %3440 = vmatpush1.msra.mxu0 0.0
    %3441 = vmatprep.subr.mxu0 0.0
    %3442 = vmatpush1.msra.mxu0 0.0
    %3443 = vmatprep.subr.mxu0 0.0
    %3444 = vmatpush1.msra.mxu0 0.0
    %3445 = vmatprep.subr.mxu0 0.0
    %3446 = vmatpush1.msra.mxu0 0.0
    %3447 = vmatprep.subr.mxu0 0.0
    %3448 = vmatpush1.msra.mxu0 0.0
    %3449 = vmatprep.subr.mxu0 0.0
    %3450 = vmatpush1.msra.mxu0 %v3410
    %3451 = vmatprep.subr.mxu0 0.0
    %3452 = vmatpush1.msra.mxu0 %v3409
    %3453 = vmatprep.subr.mxu0 0.0
    %3454 = vmatpush1.msra.mxu0 %v3408
    %3455 = vmatprep.subr.mxu0 0.0
    %3456 = vmatpush1.msra.mxu0 %v3407
    %3457 = vmatprep.subr.mxu0 0.0
    %3458 = vmatpush2.msra.mxu0 0.0
    %3459 = vmatprep.subr.mxu0 0.0
    %3460 = vmatpush2.msra.mxu0 0.0
    %3461 = vmatprep.subr.mxu0 0.0
    %3462 = vmatpush2.msra.mxu0 0.0
    %3463 = vmatprep.subr.mxu0 0.0
    %3464 = vmatpush2.msra.mxu0 0.0
    %3465 = vmatprep.subr.mxu0 0.0
    %3466 = vmatpush2.msra.mxu0 0.0
    %3467 = vmatprep.subr.mxu0 0.0
    %3468 = vmatpush2.msra.mxu0 0.0
    %3469 = vmatprep.subr.mxu0 0.0
    %3470 = vmatpush2.msra.mxu0 0.0
    %3471 = vmatprep.subr.mxu0 0.0
    %3472 = vmatpush2.msra.mxu0 0.0
    %3473 = vmatprep.subr.mxu0 0.0
    %3474 = vmatpush2.msra.mxu0 0.0
    %3475 = vmatprep.subr.mxu0 0.0
    %3476 = vmatpush2.msra.mxu0 0.0
    %3477 = vmatprep.subr.mxu0 0.0
    %3478 = vmatpush2.msra.mxu0 0.0
    %3479 = vmatprep.subr.mxu0 0.0
    %3480 = vmatpush2.msra.mxu0 0.0
    %3481 = vmatprep.subr.mxu0 0.0
    %3482 = vmatpush2.msra.mxu0 0.0
    %3483 = vmatprep.subr.mxu0 0.0
    %3484 = vmatpush2.msra.mxu0 0.0
    %3485 = vmatprep.subr.mxu0 0.0
    %3486 = vmatpush2.msra.mxu0 0.0
    %3487 = vmatprep.subr.mxu0 0.0
    %3488 = vmatpush2.msra.mxu0 0.0
    %3489 = vmatprep.mubr.f32.mxu0 0.0
    %3490 = vmatmul.mubr.f32.gmra.mxu0 %v3420
    %v3491 = vpop.f32.mrf.mxu0
    %v3492 = vadd.f32 %v3417, %v3491
    %v3493 = vpop.f32.mrf.mxu0
    %3494 = vmatprep.mubr.f32.mxu0 0.0
    %3495 = vmatmul.mubr.f32.gmra.mxu0 %v3423
    %v3496 = vpop.f32.mrf.mxu0
    %v3497 = vadd.f32 %v3417, %v3496
    %v3498 = vpop.f32.mrf.mxu0
    %3499 = vdwg.mxu0
    %v3500 = vadd.f32 %v3492, %v1958
    %v3501 = vadd.f32 %v3497, %v1959
    %s3502 = scalar_lea.vmem %s8, 1
    %v3503 = vld [vmem:[%s3502] sm:$0x1]
    %s3504 = scalar_lea.vmem %s9, 1
    %v3505 = vld [vmem:[%s3504] sm:$0x1]
    %v3506 = vsel %vm67, %v3500, 0.0
    %3507 = vadd.xlane.f32.xlu0 %v3506
    %v3508 = vpop.xlane.xlu0 %3507
    %v3509 = vsel %vm67, %v3501, 0.0
    %3510 = vadd.xlane.f32.xlu0 %v3509
    %v3511 = vpop.xlane.xlu0 %3510
    %v3512 = vmul.f32 %v3508, %v74
    %v3513 = vmul.f32 %v3511, %v74
    %v3514 = vsub.f32 %v3500, %v3512
    %v3515 = vsub.f32 %v3501, %v3513
    %v3516 = vmul.f32 %v3514, %v3514
    %v3517 = vmul.f32 %v3515, %v3515
    %v3518 = vsel %vm67, %v3516, 0.0
    %3519 = vadd.xlane.f32.xlu0 %v3518
    %v3520 = vpop.xlane.xlu0 %3519
    %v3521 = vsel %vm67, %v3517, 0.0
    %3522 = vadd.xlane.f32.xlu0 %v3521
    %v3523 = vpop.xlane.xlu0 %3522
    %v3524 = vmul.f32 %v3520, %v74
    %v3525 = vmul.f32 %v3523, %v74
    %v3526 = vadd.f32 %v3524, 1e-12
    %v3527 = vadd.f32 %v3525, 1e-12
    %v3528 = vrsqrt.pop %v3526
    %v3529 = vrsqrt.pop %v3527
    %v3530 = vmul.f32 %v3514, %v3528
    %v3531 = vmul.f32 %v3515, %v3529
    %v3533 = vlaneseq
    %v3534 = vshrl.u32 %v3533, 7
    %v3535 = vsub.s32 0, %v3534
    %v3536 = vrot.slane %v3503, %v3535
    %v3538 = vmul.f32 %v3530, %v3536
    %v3539 = vmul.f32 %v3531, %v3536
    %v3541 = vlaneseq
    %v3542 = vshrl.u32 %v3541, 7
    %v3543 = vsub.s32 0, %v3542
    %v3544 = vrot.slane %v3505, %v3543
    %v3546 = vadd.f32 %v3538, %v3544
    %v3547 = vadd.f32 %v3539, %v3544
    %s3548 = scalar_lea.vmem %s10, 32
    %v3549 = vld [vmem:[%s3548] sm:$0xff]
    %v3550 = vld [vmem:[%s3548 + $0x8] sm:$0xff]
    %v3551 = vld [vmem:[%s3548 + $0x10] sm:$0xff]
    %v3552 = vld [vmem:[%s3548 + $0x18] sm:$0xff]
    %s3553 = scalar_lea.vmem %s11, 1
    %v3554 = vld [vmem:[%s3553] sm:$0x1]
    %v3556 = vlaneseq
    %v3557 = vshrl.u32 %v3556, 7
    %v3558 = vsub.s32 0, %v3557
    %v3559 = vrot.slane %v3554, %v3558
    %v3562 = vsel %vm67, %v3546, 0
    %v3565 = vsel %vm67, %v3547, 0
    %3567 = vmatprep.subr.mxu0 0.0
    %3568 = vmatpush1.msra.mxu0 0.0
    %3569 = vmatprep.subr.mxu0 0.0
    %3570 = vmatpush1.msra.mxu0 0.0
    %3571 = vmatprep.subr.mxu0 0.0
    %3572 = vmatpush1.msra.mxu0 0.0
    %3573 = vmatprep.subr.mxu0 0.0
    %3574 = vmatpush1.msra.mxu0 0.0
    %3575 = vmatprep.subr.mxu0 0.0
    %3576 = vmatpush1.msra.mxu0 0.0
    %3577 = vmatprep.subr.mxu0 0.0
    %3578 = vmatpush1.msra.mxu0 0.0
    %3579 = vmatprep.subr.mxu0 0.0
    %3580 = vmatpush1.msra.mxu0 0.0
    %3581 = vmatprep.subr.mxu0 0.0
    %3582 = vmatpush1.msra.mxu0 0.0
    %3583 = vmatprep.subr.mxu0 0.0
    %3584 = vmatpush1.msra.mxu0 0.0
    %3585 = vmatprep.subr.mxu0 0.0
    %3586 = vmatpush1.msra.mxu0 0.0
    %3587 = vmatprep.subr.mxu0 0.0
    %3588 = vmatpush1.msra.mxu0 0.0
    %3589 = vmatprep.subr.mxu0 0.0
    %3590 = vmatpush1.msra.mxu0 0.0
    %3591 = vmatprep.subr.mxu0 0.0
    %3592 = vmatpush1.msra.mxu0 %v3552
    %3593 = vmatprep.subr.mxu0 0.0
    %3594 = vmatpush1.msra.mxu0 %v3551
    %3595 = vmatprep.subr.mxu0 0.0
    %3596 = vmatpush1.msra.mxu0 %v3550
    %3597 = vmatprep.subr.mxu0 0.0
    %3598 = vmatpush1.msra.mxu0 %v3549
    %3599 = vmatprep.subr.mxu0 0.0
    %3600 = vmatpush2.msra.mxu0 0.0
    %3601 = vmatprep.subr.mxu0 0.0
    %3602 = vmatpush2.msra.mxu0 0.0
    %3603 = vmatprep.subr.mxu0 0.0
    %3604 = vmatpush2.msra.mxu0 0.0
    %3605 = vmatprep.subr.mxu0 0.0
    %3606 = vmatpush2.msra.mxu0 0.0
    %3607 = vmatprep.subr.mxu0 0.0
    %3608 = vmatpush2.msra.mxu0 0.0
    %3609 = vmatprep.subr.mxu0 0.0
    %3610 = vmatpush2.msra.mxu0 0.0
    %3611 = vmatprep.subr.mxu0 0.0
    %3612 = vmatpush2.msra.mxu0 0.0
    %3613 = vmatprep.subr.mxu0 0.0
    %3614 = vmatpush2.msra.mxu0 0.0
    %3615 = vmatprep.subr.mxu0 0.0
    %3616 = vmatpush2.msra.mxu0 0.0
    %3617 = vmatprep.subr.mxu0 0.0
    %3618 = vmatpush2.msra.mxu0 0.0
    %3619 = vmatprep.subr.mxu0 0.0
    %3620 = vmatpush2.msra.mxu0 0.0
    %3621 = vmatprep.subr.mxu0 0.0
    %3622 = vmatpush2.msra.mxu0 0.0
    %3623 = vmatprep.subr.mxu0 0.0
    %3624 = vmatpush2.msra.mxu0 0.0
    %3625 = vmatprep.subr.mxu0 0.0
    %3626 = vmatpush2.msra.mxu0 0.0
    %3627 = vmatprep.subr.mxu0 0.0
    %3628 = vmatpush2.msra.mxu0 0.0
    %3629 = vmatprep.subr.mxu0 0.0
    %3630 = vmatpush2.msra.mxu0 0.0
    %3631 = vmatprep.mubr.f32.mxu0 0.0
    %3632 = vmatmul.mubr.f32.gmra.mxu0 %v3562
    %v3633 = vpop.f32.mrf.mxu0
    %v3634 = vadd.f32 %v3559, %v3633
    %v3635 = vpop.f32.mrf.mxu0
    %3636 = vmatprep.mubr.f32.mxu0 0.0
    %3637 = vmatmul.mubr.f32.gmra.mxu0 %v3565
    %v3638 = vpop.f32.mrf.mxu0
    %v3639 = vadd.f32 %v3559, %v3638
    %v3640 = vpop.f32.mrf.mxu0
    %3641 = vdwg.mxu0
    %v3642 = vmul.f32 %v3634, 0.5
    %v3643 = vmul.f32 %v3639, 0.5
    %v3644 = vmul.f32 %v3634, 0.044715
    %v3645 = vmul.f32 %v3639, 0.044715
    %v3646 = vmul.f32 %v3644, %v3634
    %v3647 = vmul.f32 %v3645, %v3639
    %v3648 = vmul.f32 %v3646, %v3634
    %v3649 = vmul.f32 %v3647, %v3639
    %v3650 = vadd.f32 %v3634, %v3648
    %v3651 = vadd.f32 %v3639, %v3649
    %v3652 = vmul.f32 %v3650, 0.7978846
    %v3653 = vmul.f32 %v3651, 0.7978846
    %v3654 = vtanh.pop %v3652
    %v3655 = vtanh.pop %v3653
    %v3656 = vadd.f32 %v3654, 1.0
    %v3657 = vadd.f32 %v3655, 1.0
    %v3658 = vmul.f32 %v3642, %v3656
    %v3659 = vmul.f32 %v3643, %v3657
    %s3660 = scalar_lea.vmem %s12, 64
    %v3661 = vld [vmem:[%s3660] sm:$0xff]
    %v3662 = vld [vmem:[%s3660 + $0x8] sm:$0xff]
    %v3663 = vld [vmem:[%s3660 + $0x10] sm:$0xff]
    %v3664 = vld [vmem:[%s3660 + $0x18] sm:$0xff]
    %v3665 = vld [vmem:[%s3660 + $0x20] sm:$0xff]
    %v3666 = vld [vmem:[%s3660 + $0x28] sm:$0xff]
    %v3667 = vld [vmem:[%s3660 + $0x30] sm:$0xff]
    %v3668 = vld [vmem:[%s3660 + $0x38] sm:$0xff]
    %s3669 = scalar_lea.vmem %s13, 1
    %v3670 = vld [vmem:[%s3669] sm:$0x1]
    %v3672 = vlaneseq
    %v3673 = vshrl.u32 %v3672, 7
    %v3674 = vsub.s32 0, %v3673
    %v3675 = vrot.slane %v3670, %v3674
    %v3678 = vsel %vm1832, %v3658, 0
    %v3681 = vsel %vm1832, %v3659, 0
    %3683 = vmatprep.subr.mxu0 0.0
    %3684 = vmatpush1.msra.mxu0 0.0
    %3685 = vmatprep.subr.mxu0 0.0
    %3686 = vmatpush1.msra.mxu0 0.0
    %3687 = vmatprep.subr.mxu0 0.0
    %3688 = vmatpush1.msra.mxu0 0.0
    %3689 = vmatprep.subr.mxu0 0.0
    %3690 = vmatpush1.msra.mxu0 0.0
    %3691 = vmatprep.subr.mxu0 0.0
    %3692 = vmatpush1.msra.mxu0 0.0
    %3693 = vmatprep.subr.mxu0 0.0
    %3694 = vmatpush1.msra.mxu0 0.0
    %3695 = vmatprep.subr.mxu0 0.0
    %3696 = vmatpush1.msra.mxu0 0.0
    %3697 = vmatprep.subr.mxu0 0.0
    %3698 = vmatpush1.msra.mxu0 0.0
    %3699 = vmatprep.subr.mxu0 0.0
    %3700 = vmatpush1.msra.mxu0 %v3668
    %3701 = vmatprep.subr.mxu0 0.0
    %3702 = vmatpush1.msra.mxu0 %v3667
    %3703 = vmatprep.subr.mxu0 0.0
    %3704 = vmatpush1.msra.mxu0 %v3666
    %3705 = vmatprep.subr.mxu0 0.0
    %3706 = vmatpush1.msra.mxu0 %v3665
    %3707 = vmatprep.subr.mxu0 0.0
    %3708 = vmatpush1.msra.mxu0 %v3664
    %3709 = vmatprep.subr.mxu0 0.0
    %3710 = vmatpush1.msra.mxu0 %v3663
    %3711 = vmatprep.subr.mxu0 0.0
    %3712 = vmatpush1.msra.mxu0 %v3662
    %3713 = vmatprep.subr.mxu0 0.0
    %3714 = vmatpush1.msra.mxu0 %v3661
    %3715 = vmatprep.subr.mxu0 0.0
    %3716 = vmatpush2.msra.mxu0 0.0
    %3717 = vmatprep.subr.mxu0 0.0
    %3718 = vmatpush2.msra.mxu0 0.0
    %3719 = vmatprep.subr.mxu0 0.0
    %3720 = vmatpush2.msra.mxu0 0.0
    %3721 = vmatprep.subr.mxu0 0.0
    %3722 = vmatpush2.msra.mxu0 0.0
    %3723 = vmatprep.subr.mxu0 0.0
    %3724 = vmatpush2.msra.mxu0 0.0
    %3725 = vmatprep.subr.mxu0 0.0
    %3726 = vmatpush2.msra.mxu0 0.0
    %3727 = vmatprep.subr.mxu0 0.0
    %3728 = vmatpush2.msra.mxu0 0.0
    %3729 = vmatprep.subr.mxu0 0.0
    %3730 = vmatpush2.msra.mxu0 0.0
    %3731 = vmatprep.subr.mxu0 0.0
    %3732 = vmatpush2.msra.mxu0 0.0
    %3733 = vmatprep.subr.mxu0 0.0
    %3734 = vmatpush2.msra.mxu0 0.0
    %3735 = vmatprep.subr.mxu0 0.0
    %3736 = vmatpush2.msra.mxu0 0.0
    %3737 = vmatprep.subr.mxu0 0.0
    %3738 = vmatpush2.msra.mxu0 0.0
    %3739 = vmatprep.subr.mxu0 0.0
    %3740 = vmatpush2.msra.mxu0 0.0
    %3741 = vmatprep.subr.mxu0 0.0
    %3742 = vmatpush2.msra.mxu0 0.0
    %3743 = vmatprep.subr.mxu0 0.0
    %3744 = vmatpush2.msra.mxu0 0.0
    %3745 = vmatprep.subr.mxu0 0.0
    %3746 = vmatpush2.msra.mxu0 0.0
    %3747 = vmatprep.mubr.f32.mxu0 0.0
    %3748 = vmatmul.mubr.f32.gmra.mxu0 %v3678
    %v3749 = vpop.f32.mrf.mxu0
    %v3750 = vadd.f32 %v3675, %v3749
    %v3751 = vpop.f32.mrf.mxu0
    %3752 = vmatprep.mubr.f32.mxu0 0.0
    %3753 = vmatmul.mubr.f32.gmra.mxu0 %v3681
    %v3754 = vpop.f32.mrf.mxu0
    %v3755 = vadd.f32 %v3675, %v3754
    %v3756 = vpop.f32.mrf.mxu0
    %3757 = vdwg.mxu0
    %v3758 = vadd.f32 %v3750, %v3546
    %v3759 = vadd.f32 %v3755, %v3547
    %s3760 = scalar_lea.vmem %s14, 1
    %v3761 = vld [vmem:[%s3760] sm:$0x1]
    %s3762 = scalar_lea.vmem %s15, 1
    %v3763 = vld [vmem:[%s3762] sm:$0x1]
    %v3764 = vsel %vm67, %v3758, 0.0
    %3765 = vadd.xlane.f32.xlu0 %v3764
    %v3766 = vpop.xlane.xlu0 %3765
    %v3767 = vsel %vm67, %v3759, 0.0
    %3768 = vadd.xlane.f32.xlu0 %v3767
    %v3769 = vpop.xlane.xlu0 %3768
    %v3770 = vmul.f32 %v3766, %v74
    %v3771 = vmul.f32 %v3769, %v74
    %v3772 = vsub.f32 %v3758, %v3770
    %v3773 = vsub.f32 %v3759, %v3771
    %v3774 = vmul.f32 %v3772, %v3772
    %v3775 = vmul.f32 %v3773, %v3773
    %v3776 = vsel %vm67, %v3774, 0.0
    %3777 = vadd.xlane.f32.xlu0 %v3776
    %v3778 = vpop.xlane.xlu0 %3777
    %v3779 = vsel %vm67, %v3775, 0.0
    %3780 = vadd.xlane.f32.xlu0 %v3779
    %v3781 = vpop.xlane.xlu0 %3780
    %v3782 = vmul.f32 %v3778, %v74
    %v3783 = vmul.f32 %v3781, %v74
    %v3784 = vadd.f32 %v3782, 1e-12
    %v3785 = vadd.f32 %v3783, 1e-12
    %v3786 = vrsqrt.pop %v3784
    %v3787 = vrsqrt.pop %v3785
    %v3788 = vmul.f32 %v3772, %v3786
    %v3789 = vmul.f32 %v3773, %v3787
    %v3791 = vlaneseq
    %v3792 = vshrl.u32 %v3791, 7
    %v3793 = vsub.s32 0, %v3792
    %v3794 = vrot.slane %v3761, %v3793
    %v3796 = vmul.f32 %v3788, %v3794
    %v3797 = vmul.f32 %v3789, %v3794
    %v3799 = vlaneseq
    %v3800 = vshrl.u32 %v3799, 7
    %v3801 = vsub.s32 0, %v3800
    %v3802 = vrot.slane %v3763, %v3801
    %v3804 = vadd.f32 %v3796, %v3802
    %v3805 = vadd.f32 %v3797, %v3802
    %v3806 = vld [vmem:[%s16] sm:$0xff]
    %v3807 = vld [vmem:[%s16 + $0x8] sm:$0xff]
    %v3808 = vld [vmem:[%s16 + $0x10] sm:$0xff]
    %v3809 = vld [vmem:[%s16 + $0x18] sm:$0xff]
    %v3810 = vld [vmem:[%s17] sm:$0x1]
    %v3812 = vlaneseq
    %v3813 = vshrl.u32 %v3812, 7
    %v3814 = vsub.s32 0, %v3813
    %v3815 = vrot.slane %v3810, %v3814
    %v3818 = vsel %vm67, %v3804, 0
    %v3821 = vsel %vm67, %v3805, 0
    %3823 = vmatprep.subr.mxu0 0.0
    %3824 = vmatpush1.msra.mxu0 0.0
    %3825 = vmatprep.subr.mxu0 0.0
    %3826 = vmatpush1.msra.mxu0 0.0
    %3827 = vmatprep.subr.mxu0 0.0
    %3828 = vmatpush1.msra.mxu0 0.0
    %3829 = vmatprep.subr.mxu0 0.0
    %3830 = vmatpush1.msra.mxu0 0.0
    %3831 = vmatprep.subr.mxu0 0.0
    %3832 = vmatpush1.msra.mxu0 0.0
    %3833 = vmatprep.subr.mxu0 0.0
    %3834 = vmatpush1.msra.mxu0 0.0
    %3835 = vmatprep.subr.mxu0 0.0
    %3836 = vmatpush1.msra.mxu0 0.0
    %3837 = vmatprep.subr.mxu0 0.0
    %3838 = vmatpush1.msra.mxu0 0.0
    %3839 = vmatprep.subr.mxu0 0.0
    %3840 = vmatpush1.msra.mxu0 0.0
    %3841 = vmatprep.subr.mxu0 0.0
    %3842 = vmatpush1.msra.mxu0 0.0
    %3843 = vmatprep.subr.mxu0 0.0
    %3844 = vmatpush1.msra.mxu0 0.0
    %3845 = vmatprep.subr.mxu0 0.0
    %3846 = vmatpush1.msra.mxu0 0.0
    %3847 = vmatprep.subr.mxu0 0.0
    %3848 = vmatpush1.msra.mxu0 %v3809
    %3849 = vmatprep.subr.mxu0 0.0
    %3850 = vmatpush1.msra.mxu0 %v3808
    %3851 = vmatprep.subr.mxu0 0.0
    %3852 = vmatpush1.msra.mxu0 %v3807
    %3853 = vmatprep.subr.mxu0 0.0
    %3854 = vmatpush1.msra.mxu0 %v3806
    %3855 = vmatprep.subr.mxu0 0.0
    %3856 = vmatpush2.msra.mxu0 0.0
    %3857 = vmatprep.subr.mxu0 0.0
    %3858 = vmatpush2.msra.mxu0 0.0
    %3859 = vmatprep.subr.mxu0 0.0
    %3860 = vmatpush2.msra.mxu0 0.0
    %3861 = vmatprep.subr.mxu0 0.0
    %3862 = vmatpush2.msra.mxu0 0.0
    %3863 = vmatprep.subr.mxu0 0.0
    %3864 = vmatpush2.msra.mxu0 0.0
    %3865 = vmatprep.subr.mxu0 0.0
    %3866 = vmatpush2.msra.mxu0 0.0
    %3867 = vmatprep.subr.mxu0 0.0
    %3868 = vmatpush2.msra.mxu0 0.0
    %3869 = vmatprep.subr.mxu0 0.0
    %3870 = vmatpush2.msra.mxu0 0.0
    %3871 = vmatprep.subr.mxu0 0.0
    %3872 = vmatpush2.msra.mxu0 0.0
    %3873 = vmatprep.subr.mxu0 0.0
    %3874 = vmatpush2.msra.mxu0 0.0
    %3875 = vmatprep.subr.mxu0 0.0
    %3876 = vmatpush2.msra.mxu0 0.0
    %3877 = vmatprep.subr.mxu0 0.0
    %3878 = vmatpush2.msra.mxu0 0.0
    %3879 = vmatprep.subr.mxu0 0.0
    %3880 = vmatpush2.msra.mxu0 0.0
    %3881 = vmatprep.subr.mxu0 0.0
    %3882 = vmatpush2.msra.mxu0 0.0
    %3883 = vmatprep.subr.mxu0 0.0
    %3884 = vmatpush2.msra.mxu0 0.0
    %3885 = vmatprep.subr.mxu0 0.0
    %3886 = vmatpush2.msra.mxu0 0.0
    %3887 = vmatprep.mubr.f32.mxu0 0.0
    %3888 = vmatmul.mubr.f32.gmra.mxu0 %v3818
    %v3889 = vpop.f32.mrf.mxu0
    %v3890 = vadd.f32 %v3815, %v3889
    %v3891 = vpop.f32.mrf.mxu0
    %3892 = vmatprep.mubr.f32.mxu0 0.0
    %3893 = vmatmul.mubr.f32.gmra.mxu0 %v3821
    %v3894 = vpop.f32.mrf.mxu0
    %v3895 = vadd.f32 %v3815, %v3894
    %v3896 = vpop.f32.mrf.mxu0
    %3897 = vdwg.mxu0
    %v3898 = vld [vmem:[%s18] sm:$0xff]
    %v3899 = vld [vmem:[%s18 + $0x8] sm:$0xff]
    %3900 = vmax.xlane.f32.xlu0 %v3890
    %v3901 = vpop.xlane.xlu0 %3900
    %3902 = vmax.xlane.f32.xlu0 %v3895
    %v3903 = vpop.xlane.xlu0 %3902
    %v3904 = vsub.f32 %v3890, %v3901
    %v3905 = vsub.f32 %v3895, %v3903
    %v3906 = vmul.f32 %v3904, 1.442695
    %v3907 = vpow.pop %v3906
    %v3908 = vmul.f32 %v3905, 1.442695
    %v3909 = vpow.pop %v3908
    %3910 = vadd.xlane.f32.xlu0 %v3907
    %v3911 = vpop.xlane.xlu0 %3910
    %3912 = vadd.xlane.f32.xlu0 %v3909
    %v3913 = vpop.xlane.xlu0 %3912
    %v3914 = vlog2.pop %v3911
    %v3915 = vmul.f32 %v3914, 0.6931472
    %v3916 = vlog2.pop %v3913
    %v3917 = vmul.f32 %v3916, 0.6931472
    %v3918 = vlaneseq
    %v3919 = vand.u32 %v3918, 127
    %3920 = vset.pattern.permute.xlu0 0
    %3921 = vperm.xlu0 %3920, %v3898
    %v3922 = vpop.permute.xlu0 %3921
    %3923 = vset.pattern.permute.xlu0 0
    %3924 = vperm.xlu0 %3923, %v3899
    %v3925 = vpop.permute.xlu0 %3924
    %vm3926 = vcmp.eq.s32.totalorder %v3919, %v3922
    %vm3927 = vcmp.eq.s32.totalorder %v3919, %v3925
    %v3928 = vsel %vm3926, %v3904, 0.0
    %v3929 = vsel %vm3927, %v3905, 0.0
    %3930 = vadd.xlane.f32.xlu0 %v3928
    %v3931 = vpop.xlane.xlu0 %3930
    %3932 = vadd.xlane.f32.xlu0 %v3929
    %v3933 = vpop.xlane.xlu0 %3932
    %vm3934 = vcmp.ne.s32.totalorder %v3898, 4294967295
    %vm3935 = vcmp.ne.s32.totalorder %v3899, 4294967295
    %v3936 = vsel %vm3934, 1, 0
    %v3937 = vsel %vm3935, 1, 0
    %v3938 = vcvt.s32.f32 %v3936
    %v3939 = vcvt.s32.f32 %v3937
    %v3940 = vsub.f32 %v3915, %v3931
    %v3941 = vsub.f32 %v3917, %v3933
    %v3942 = vmul.f32 %v3940, %v3938
    %v3943 = vmul.f32 %v3941, %v3939
    %vm3944 = vcmask 7168
    %v3945 = vsel %vm3944, %v3938, 0.0
    %v3946 = vsel %vm3944, %v3939, 0.0
    %v3947 = vadd.f32 %v3945, %v3946
    %3948 = vadd.xlane.f32.xlu0 %v3947
    %v3949 = vpop.xlane.xlu0 %3948
    %v3950 = vrot.slane %v3949, 4
    %v3951 = vadd.f32 %v3949, %v3950
    %v3952 = vrot.slane %v3951, 2
    %v3953 = vadd.f32 %v3951, %v3952
    %v3954 = vrot.slane %v3953, 1
    %v3955 = vadd.f32 %v3953, %v3954
    %s3956 = vtos %v3955
    %s3957 = smax.f32 %s3956, 1.0
    %v3958 = vsel %vm3944, %v3942, 0.0
    %v3959 = vsel %vm3944, %v3943, 0.0
    %v3960 = vadd.f32 %v3958, %v3959
    %3961 = vadd.xlane.f32.xlu0 %v3960
    %v3962 = vpop.xlane.xlu0 %3961
    %v3963 = vrot.slane %v3962, 4
    %v3964 = vadd.f32 %v3962, %v3963
    %v3965 = vrot.slane %v3964, 2
    %v3966 = vadd.f32 %v3964, %v3965
    %v3967 = vrot.slane %v3966, 1
    %v3968 = vadd.f32 %v3966, %v3967
    %s3969 = vtos %v3968
    %v3970 = vstv %s3957
    %v3971 = vrcp.pop %v3970
    %s3972 = vtos %v3971
    %s3973 = smul.f32 %s3969, %s3972
    %s3974 = scalar_lea.smem [#allocation2], 0
    %3975 = sst [smem:[%s3974]] %s3973
    // Predicated region
    $region78: #{bert_sft_forward.1} parent=1 // pred_check
      _
    $region79: #{bert_sft_forward.1} parent=1 // pred_check_branch
      %3977 = sbr.rel (0) target = $region81
    $region80: #{bert_sft_forward.1} parent=1 // pred_region
      %s3979 = ssub.s32 16, 16
      %3980 = vsyncadd [#allocation3], %s3979
      %3983 = dma.smem_to_hbm [#allocation2], 16, %s19, [#allocation3]
    $region81: #{bert_sft_forward.1} parent=1 // pred_fallthru
      _
    // Predicated region
    $region82: #{bert_sft_forward.1} parent=1 // pred_check
      _
    $region83: #{bert_sft_forward.1} parent=1 // pred_check_branch
      %3985 = sbr.rel (0) target = $region85
    $region84: #{bert_sft_forward.1} parent=1 // pred_region
      %3986 = dma.done [#allocation3], 16
    $region85: #{bert_sft_forward.1} parent=1 // pred_fallthru
      _
    %3987 = sfence
    %3988 = vsyncpa [#allocation3], 1

</llo_original>
